<compile_context>
chip_gen: v7x
topology: tpu7x:2x2x1
jax: 0.10.0
libtpu: 0.0.40
codegen_flags: <defaults>
</compile_context>

<pallas_src>
import functools
import math

import jax
import jax.numpy as jnp
from jax import lax
from jax.experimental import pallas as pl
from jax.experimental.pallas import tpu as pltpu


# Flip to jnp.bfloat16 on v6e/v7x for MXU peak (accumulation stays f32);
# f32 default keeps the forward pass numerically faithful to the PyTorch ref.
MATMUL_DTYPE = jnp.float32


# -------------------- in-kernel math helpers --------------------

def _mm(a, b):
    return jnp.dot(a.astype(MATMUL_DTYPE), b.astype(MATMUL_DTYPE),
                   preferred_element_type=jnp.float32)


def _layernorm(x, alpha, beta, eps):
    # torch.std -> unbiased estimator (N-1 denominator); alpha/beta scalars.
    n = x.shape[-1]
    mean = jnp.mean(x, axis=-1, keepdims=True)
    diff = x - mean
    var = jnp.sum(diff * diff, axis=-1, keepdims=True) / (n - 1)
    return alpha * (diff / (jnp.sqrt(var) + eps)) + beta


# -------------------- fused decoder-block kernel --------------------

def _decoder_block_kernel(ln_ref,                 # SMEM (6,) LN scalars
                          x_ref, enc_ref,         # (S,E) per-batch blocks
                          sw_ref, sb_ref,         # self-attn  (4,E,E)/(4,E)
                          cw_ref, cb_ref,         # cross-attn (4,E,E)/(4,E)
                          w1_ref, b1_ref, w2_ref, b2_ref,   # FFN
                          out_ref,
                          o_scratch,              # (S,E) VMEM head-output slab
                          *, num_heads, eps):
    def mha(k_in, qv_in, w_ref, b_ref):
        # Reference arg order (k, q, v): key<-W_k(k), query/value<-W_q/W_v(qv).
        # Projections are single K=E matmuls (full MXU depth).
        key = _mm(k_in, w_ref[0]) + b_ref[0:1, :]
        query = _mm(qv_in, w_ref[1]) + b_ref[1:2, :]
        value = _mm(qv_in, w_ref[2]) + b_ref[2:3, :]
        e_dim = key.shape[-1]
        dk = e_dim // num_heads
        # NOTE: masks are intentionally unused -- the reference applies
        # masked_fill non-in-place and discards the result, so they are no-ops.
        # TODO(synk): at small dk (<128) batch the head contractions with a
        # lax.dot_general batch dim; at production dk>=128 this unrolled loop
        # is already MXU-bound and head slices are aligned lane slices.
        for h in range(num_heads):                 # static unroll
            lo = h * dk
            qh = query[:, lo:lo + dk]
            kh = key[:, lo:lo + dk]
            vh = value[:, lo:lo + dk]
            # Contract last dims directly -> no materialized kh.T.
            s = lax.dot_general(
                qh.astype(MATMUL_DTYPE), kh.astype(MATMUL_DTYPE),
                (((1,), (1,)), ((), ())),
                preferred_element_type=jnp.float32) / math.sqrt(dk)
            s = s - jnp.max(s, axis=-1, keepdims=True)
            p = jnp.exp(s)
            p = p / jnp.sum(p, axis=-1, keepdims=True)   # exact divide (f32 ref)
            # Head outputs written side-by-side; one big W_o matmul below.
            o_scratch[:, lo:lo + dk] = _mm(p, vh)
        # Single (S,E)@(E,E) output projection (full MXU depth) + bias.
        return _mm(o_scratch[...], w_ref[3]) + b_ref[3:4, :]

    x = x_ref[...]                                       # (S, E), stays in VMEM
    enc = enc_ref[...]

    # residual 0: self-attention (k = q = v = norm(x))
    xn = _layernorm(x, ln_ref[0], ln_ref[1], eps)
    x = x + mha(xn, xn, sw_ref, sb_ref)

    # residual 1: cross-attention (k = norm(x), q = v = encoder_output)
    xn = _layernorm(x, ln_ref[2], ln_ref[3], eps)
    x = x + mha(xn, enc, cw_ref, cb_ref)

    # residual 2: feed-forward (bias + ReLU + residual fused in the epilogues)
    xn = _layernorm(x, ln_ref[4], ln_ref[5], eps)
    h = jnp.maximum(_mm(xn, w1_ref[...]) + b1_ref[...], 0.0)
    x = x + _mm(h, w2_ref[...]) + b2_ref[...]

    out_ref[...] = x


# -------------------- pallas_call wrapper --------------------

def decoder_block(x, encoder_output, src_mask, target_mask, params, num_heads,
                  eps=1e-6):
    # Masks accepted for signature fidelity; no-ops per the reference.
    del src_mask, target_mask
    B, S, E = x.shape
    sa, ca, ff = params["self_attn"], params["cross_attn"], params["ffn"]
    d_ff = ff["w1"].shape[1]

    # Stack per-projection weights/biases so each attention block is one
    # (4,E,E) + (4,E) DMA instead of 8 tiny ones. Order: [k, q, v, o].
    sw = jnp.stack([sa["wk"], sa["wq"], sa["wv"], sa["wo"]])
    sb = jnp.stack([sa["bk"], sa["bq"], sa["bv"], sa["bo"]])
    cw = jnp.stack([ca["wk"], ca["wq"], ca["wv"], ca["wo"]])
    cb = jnp.stack([ca["bk"], ca["bq"], ca["bv"], ca["bo"]])
    # All six LayerNorm scalars in one SMEM array: [a0,b0,a1,b1,a2,b2].
    ln = jnp.stack([params["ln0_a"][0], params["ln0_b"][0],
                    params["ln1_a"][0], params["ln1_b"][0],
                    params["ln2_a"][0], params["ln2_b"][0]])

    seq_spec = pl.BlockSpec((None, S, E), lambda b: (b, 0, 0))

    def rep(shape):
        # Full-array block, invariant across the batch grid (DMA'd once).
        # TODO(synk): at production sizes mark these pipeline_mode=
        # pl.Buffered(1) / stream FFN weights to fit v7x's 64 MiB VMEM.
        return pl.BlockSpec(shape, lambda b: (0,) * len(shape))

    kernel = functools.partial(_decoder_block_kernel,
                               num_heads=num_heads, eps=eps)
    return pl.pallas_call(
        kernel,
        grid=(B,),
        out_shape=jax.ShapeDtypeStruct((B, S, E), jnp.float32),
        in_specs=[pl.BlockSpec(memory_space=pltpu.MemorySpace.SMEM),  # ln
                  seq_spec, seq_spec,
                  rep((4, E, E)), rep((4, E)),
                  rep((4, E, E)), rep((4, E)),
                  rep((E, d_ff)), rep((1, d_ff)),
                  rep((d_ff, E)), rep((1, E))],
        out_specs=seq_spec,
        scratch_shapes=[pltpu.VMEM((S, E), jnp.float32)],
        compiler_params=pltpu.CompilerParams(
            dimension_semantics=("parallel",)),
    )(ln, x, encoder_output, sw, sb, cw, cb,
      ff["w1"], ff["b1"].reshape(1, d_ff), ff["w2"], ff["b2"].reshape(1, E))


# -------------------- deterministic parameter init --------------------

def _init_linear(key, fan_in, fan_out):
    k1, k2 = jax.random.split(key)
    bound = 1.0 / math.sqrt(fan_in)
    w = jax.random.uniform(k1, (fan_in, fan_out), jnp.float32, -bound, bound)
    b = jax.random.uniform(k2, (fan_out,), jnp.float32, -bound, bound)
    return w, b


def _init_mha(key, E):
    ks = jax.random.split(key, 4)
    wq, bq = _init_linear(ks[0], E, E)
    wk, bk = _init_linear(ks[1], E, E)
    wv, bv = _init_linear(ks[2], E, E)
    wo, bo = _init_linear(ks[3], E, E)
    return dict(wq=wq, bq=bq, wk=wk, bk=bk, wv=wv, bv=bv, wo=wo, bo=bo)


def init_params(key, E, d_ff):
    ks = jax.random.split(key, 3)
    w1, b1 = _init_linear(ks[2], E, d_ff)
    w2, b2 = _init_linear(jax.random.fold_in(ks[2], 1), d_ff, E)
    one = jnp.ones((1,), jnp.float32)
    zero = jnp.zeros((1,), jnp.float32)
    return dict(
        self_attn=_init_mha(ks[0], E),
        cross_attn=_init_mha(ks[1], E),
        ffn=dict(w1=w1, b1=b1, w2=w2, b2=b2),
        ln0_a=one, ln0_b=zero,
        ln1_a=one, ln1_b=zero,
        ln2_a=one, ln2_b=zero,
    )


# -------------------- main --------------------

if __name__ == "__main__":
    B, S, E, H, D_FF = 2, 8, 32, 4, 64

    root = jax.random.PRNGKey(0)
    k_x, k_enc, k_p = jax.random.split(root, 3)

    x = jax.random.normal(k_x, (B, S, E), jnp.float32)
    encoder_output = jax.random.normal(k_enc, (B, S, E), jnp.float32)
    src_mask = jnp.ones((B, 1, S, S), jnp.float32)     # unused (reference bug)
    target_mask = jnp.ones((B, 1, S, S), jnp.float32)  # unused (reference bug)

    params = init_params(k_p, E, D_FF)

    fwd = jax.jit(functools.partial(decoder_block, num_heads=H))
    out = jax.block_until_ready(fwd(x, encoder_output, src_mask, target_mask,
                                    params))

    assert out.shape == (B, S, E) and out.dtype == jnp.float32
    print("KERNEL_OK")
</pallas_src>

<mosaic_0001>
module attributes {stable_mosaic.version = 11 : i64} {
  func.func @_decoder_block_kernel(%arg0: i32, %arg1: memref<6xf32, #tpu.memory_space<smem>>, %arg2: memref<1x8x32xf32, #tpu.memory_space<vmem>>, %arg3: memref<1x8x32xf32, #tpu.memory_space<vmem>>, %arg4: memref<4x32x32xf32, #tpu.memory_space<vmem>>, %arg5: memref<4x32xf32, #tpu.memory_space<vmem>>, %arg6: memref<4x32x32xf32, #tpu.memory_space<vmem>>, %arg7: memref<4x32xf32, #tpu.memory_space<vmem>>, %arg8: memref<32x64xf32, #tpu.memory_space<vmem>>, %arg9: memref<1x64xf32, #tpu.memory_space<vmem>>, %arg10: memref<64x32xf32, #tpu.memory_space<vmem>>, %arg11: memref<1x32xf32, #tpu.memory_space<vmem>>, %arg12: memref<1x8x32xf32, #tpu.memory_space<vmem>>, %arg13: memref<8x32xf32, #tpu.memory_space<vmem>>) attributes {dimension_semantics = [#tpu.dimension_semantics<parallel>], iteration_bounds = array<i64: 2>, scalar_prefetch = 0 : i64, scratch_operands = 1 : i64, tpu.core_type = #tpu.core_type<tc>, window_params = [{transform_indices = @transform_0, window_bounds = array<i64: 6>}, {transform_indices = @transform_1, window_bounds = array<i64: 1, 8, 32>}, {transform_indices = @transform_2, window_bounds = array<i64: 1, 8, 32>}, {pipeline_mode = #tpu.pipeline_mode<synchronous>, transform_indices = @transform_3, window_bounds = array<i64: 4, 32, 32>}, {pipeline_mode = #tpu.pipeline_mode<synchronous>, transform_indices = @transform_4, window_bounds = array<i64: 4, 32>}, {pipeline_mode = #tpu.pipeline_mode<synchronous>, transform_indices = @transform_5, window_bounds = array<i64: 4, 32, 32>}, {pipeline_mode = #tpu.pipeline_mode<synchronous>, transform_indices = @transform_6, window_bounds = array<i64: 4, 32>}, {pipeline_mode = #tpu.pipeline_mode<synchronous>, transform_indices = @transform_7, window_bounds = array<i64: 32, 64>}, {pipeline_mode = #tpu.pipeline_mode<synchronous>, transform_indices = @transform_8, window_bounds = array<i64: 1, 64>}, {pipeline_mode = #tpu.pipeline_mode<synchronous>, transform_indices = @transform_9, window_bounds = array<i64: 64, 32>}, {pipeline_mode = #tpu.pipeline_mode<synchronous>, transform_indices = @transform_10, window_bounds = array<i64: 1, 32>}, {transform_indices = @transform_11, window_bounds = array<i64: 1, 8, 32>}]} {
    %c0 = arith.constant 0 : index
    %c0_0 = arith.constant 0 : index
    %c0_1 = arith.constant 0 : index
    %0 = vector.load %arg2[%c0, %c0_0, %c0_1] : memref<1x8x32xf32, #tpu.memory_space<vmem>>, vector<1x8x32xf32>
    %1 = vector.shape_cast %0 : vector<1x8x32xf32> to vector<8x32xf32>
    %c0_2 = arith.constant 0 : index
    %c0_3 = arith.constant 0 : index
    %c0_4 = arith.constant 0 : index
    %2 = vector.load %arg3[%c0_2, %c0_3, %c0_4] : memref<1x8x32xf32, #tpu.memory_space<vmem>>, vector<1x8x32xf32>
    %3 = vector.shape_cast %2 : vector<1x8x32xf32> to vector<8x32xf32>
    %c0_5 = arith.constant 0 : index
    %4 = memref.load %arg1[%c0_5] : memref<6xf32, #tpu.memory_space<smem>>
    %c1 = arith.constant 1 : index
    %5 = memref.load %arg1[%c1] : memref<6xf32, #tpu.memory_space<smem>>
    %cst = arith.constant dense<0.000000e+00> : vector<8xf32>
    %6 = vector.multi_reduction <add>, %1, %cst [1] : vector<8x32xf32> to vector<8xf32>
    %7 = vector.shape_cast %6 : vector<8xf32> to vector<8x1xf32>
    %cst_6 = arith.constant 3.200000e+01 : f32
    %8 = vector.broadcast %cst_6 : f32 to vector<8x1xf32>
    %9 = arith.divf %7, %8 : vector<8x1xf32>
    %10 = vector.broadcast %9 : vector<8x1xf32> to vector<8x32xf32>
    %11 = arith.subf %1, %10 : vector<8x32xf32>
    %12 = arith.mulf %11, %11 : vector<8x32xf32>
    %cst_7 = arith.constant dense<0.000000e+00> : vector<8xf32>
    %13 = vector.multi_reduction <add>, %12, %cst_7 [1] : vector<8x32xf32> to vector<8xf32>
    %14 = vector.shape_cast %13 : vector<8xf32> to vector<8x1xf32>
    %cst_8 = arith.constant 3.100000e+01 : f32
    %15 = vector.broadcast %cst_8 : f32 to vector<8x1xf32>
    %16 = arith.divf %14, %15 : vector<8x1xf32>
    %17 = math.sqrt %16 : vector<8x1xf32>
    %cst_9 = arith.constant 9.99999997E-7 : f32
    %18 = vector.broadcast %cst_9 : f32 to vector<8x1xf32>
    %19 = arith.addf %17, %18 : vector<8x1xf32>
    %20 = vector.broadcast %19 : vector<8x1xf32> to vector<8x32xf32>
    %21 = arith.divf %11, %20 : vector<8x32xf32>
    %22 = vector.broadcast %4 : f32 to vector<8x32xf32>
    %23 = arith.mulf %22, %21 : vector<8x32xf32>
    %24 = vector.broadcast %5 : f32 to vector<8x32xf32>
    %25 = arith.addf %23, %24 : vector<8x32xf32>
    %c0_10 = arith.constant 0 : index
    %c0_11 = arith.constant 0 : index
    %c0_12 = arith.constant 0 : index
    %26 = vector.load %arg4[%c0_10, %c0_11, %c0_12] : memref<4x32x32xf32, #tpu.memory_space<vmem>>, vector<1x32x32xf32>
    %27 = vector.shape_cast %26 : vector<1x32x32xf32> to vector<32x32xf32>
    %cst_13 = arith.constant dense<0.000000e+00> : vector<8x32xf32>
    %28 = tpu.matmul %25, %27, %cst_13 {dimension_numbers = #tpu.dot_dimension_numbers<[1], [0], [0], [1], [0, 0, 1, 1], [], []>} : vector<8x32xf32>, vector<32x32xf32>, vector<8x32xf32> -> vector<8x32xf32>
    %c0_14 = arith.constant 0 : index
    %c0_15 = arith.constant 0 : index
    %29 = vector.load %arg5[%c0_14, %c0_15] : memref<4x32xf32, #tpu.memory_space<vmem>>, vector<1x32xf32>
    %30 = vector.broadcast %29 : vector<1x32xf32> to vector<8x32xf32>
    %31 = arith.addf %28, %30 : vector<8x32xf32>
    %c1_16 = arith.constant 1 : index
    %c0_17 = arith.constant 0 : index
    %c0_18 = arith.constant 0 : index
    %32 = vector.load %arg4[%c1_16, %c0_17, %c0_18] : memref<4x32x32xf32, #tpu.memory_space<vmem>>, vector<1x32x32xf32>
    %33 = vector.shape_cast %32 : vector<1x32x32xf32> to vector<32x32xf32>
    %cst_19 = arith.constant dense<0.000000e+00> : vector<8x32xf32>
    %34 = tpu.matmul %25, %33, %cst_19 {dimension_numbers = #tpu.dot_dimension_numbers<[1], [0], [0], [1], [0, 0, 1, 1], [], []>} : vector<8x32xf32>, vector<32x32xf32>, vector<8x32xf32> -> vector<8x32xf32>
    %c1_20 = arith.constant 1 : index
    %c0_21 = arith.constant 0 : index
    %35 = vector.load %arg5[%c1_20, %c0_21] : memref<4x32xf32, #tpu.memory_space<vmem>>, vector<1x32xf32>
    %36 = vector.broadcast %35 : vector<1x32xf32> to vector<8x32xf32>
    %37 = arith.addf %34, %36 : vector<8x32xf32>
    %c2 = arith.constant 2 : index
    %c0_22 = arith.constant 0 : index
    %c0_23 = arith.constant 0 : index
    %38 = vector.load %arg4[%c2, %c0_22, %c0_23] : memref<4x32x32xf32, #tpu.memory_space<vmem>>, vector<1x32x32xf32>
    %39 = vector.shape_cast %38 : vector<1x32x32xf32> to vector<32x32xf32>
    %cst_24 = arith.constant dense<0.000000e+00> : vector<8x32xf32>
    %40 = tpu.matmul %25, %39, %cst_24 {dimension_numbers = #tpu.dot_dimension_numbers<[1], [0], [0], [1], [0, 0, 1, 1], [], []>} : vector<8x32xf32>, vector<32x32xf32>, vector<8x32xf32> -> vector<8x32xf32>
    %c2_25 = arith.constant 2 : index
    %c0_26 = arith.constant 0 : index
    %41 = vector.load %arg5[%c2_25, %c0_26] : memref<4x32xf32, #tpu.memory_space<vmem>>, vector<1x32xf32>
    %42 = vector.broadcast %41 : vector<1x32xf32> to vector<8x32xf32>
    %43 = arith.addf %40, %42 : vector<8x32xf32>
    %44 = vector.extract_strided_slice %37 {offsets = [0, 0], sizes = [8, 8], strides = [1, 1]} : vector<8x32xf32> to vector<8x8xf32>
    %45 = vector.extract_strided_slice %31 {offsets = [0, 0], sizes = [8, 8], strides = [1, 1]} : vector<8x32xf32> to vector<8x8xf32>
    %46 = vector.extract_strided_slice %43 {offsets = [0, 0], sizes = [8, 8], strides = [1, 1]} : vector<8x32xf32> to vector<8x8xf32>
    %cst_27 = arith.constant dense<0.000000e+00> : vector<8x8xf32>
    %47 = tpu.matmul %44, %45, %cst_27 {dimension_numbers = #tpu.dot_dimension_numbers<[1], [1], [0], [0], [0, 0, 1, 0], [], []>} : vector<8x8xf32>, vector<8x8xf32>, vector<8x8xf32> -> vector<8x8xf32>
    %cst_28 = arith.constant 2.82842708 : f32
    %48 = vector.broadcast %cst_28 : f32 to vector<8x8xf32>
    %49 = arith.divf %47, %48 : vector<8x8xf32>
    %cst_29 = arith.constant dense<0xFF800000> : vector<8xf32>
    %50 = vector.multi_reduction <maximumf>, %49, %cst_29 [1] : vector<8x8xf32> to vector<8xf32>
    %51 = vector.shape_cast %50 : vector<8xf32> to vector<8x1xf32>
    %52 = vector.broadcast %51 : vector<8x1xf32> to vector<8x8xf32>
    %53 = arith.subf %49, %52 : vector<8x8xf32>
    %54 = math.exp %53 : vector<8x8xf32>
    %cst_30 = arith.constant dense<0.000000e+00> : vector<8xf32>
    %55 = vector.multi_reduction <add>, %54, %cst_30 [1] : vector<8x8xf32> to vector<8xf32>
    %56 = vector.shape_cast %55 : vector<8xf32> to vector<8x1xf32>
    %57 = vector.broadcast %56 : vector<8x1xf32> to vector<8x8xf32>
    %58 = arith.divf %54, %57 : vector<8x8xf32>
    %cst_31 = arith.constant dense<0.000000e+00> : vector<8x8xf32>
    %59 = tpu.matmul %58, %46, %cst_31 {dimension_numbers = #tpu.dot_dimension_numbers<[1], [0], [0], [1], [0, 0, 1, 1], [], []>} : vector<8x8xf32>, vector<8x8xf32>, vector<8x8xf32> -> vector<8x8xf32>
    %c0_32 = arith.constant 0 : index
    %c0_33 = arith.constant 0 : index
    %60 = vector.load %arg13[%c0_32, %c0_33] : memref<8x32xf32, #tpu.memory_space<vmem>>, vector<8x8xf32>
    tpu.vector_store %arg13[%c0_32, %c0_33], %59 {strides = array<i32>} : memref<8x32xf32, #tpu.memory_space<vmem>>, vector<8x8xf32>,
    %61 = vector.extract_strided_slice %37 {offsets = [0, 8], sizes = [8, 8], strides = [1, 1]} : vector<8x32xf32> to vector<8x8xf32>
    %62 = vector.extract_strided_slice %31 {offsets = [0, 8], sizes = [8, 8], strides = [1, 1]} : vector<8x32xf32> to vector<8x8xf32>
    %63 = vector.extract_strided_slice %43 {offsets = [0, 8], sizes = [8, 8], strides = [1, 1]} : vector<8x32xf32> to vector<8x8xf32>
    %cst_34 = arith.constant dense<0.000000e+00> : vector<8x8xf32>
    %64 = tpu.matmul %61, %62, %cst_34 {dimension_numbers = #tpu.dot_dimension_numbers<[1], [1], [0], [0], [0, 0, 1, 0], [], []>} : vector<8x8xf32>, vector<8x8xf32>, vector<8x8xf32> -> vector<8x8xf32>
    %cst_35 = arith.constant 2.82842708 : f32
    %65 = vector.broadcast %cst_35 : f32 to vector<8x8xf32>
    %66 = arith.divf %64, %65 : vector<8x8xf32>
    %cst_36 = arith.constant dense<0xFF800000> : vector<8xf32>
    %67 = vector.multi_reduction <maximumf>, %66, %cst_36 [1] : vector<8x8xf32> to vector<8xf32>
    %68 = vector.shape_cast %67 : vector<8xf32> to vector<8x1xf32>
    %69 = vector.broadcast %68 : vector<8x1xf32> to vector<8x8xf32>
    %70 = arith.subf %66, %69 : vector<8x8xf32>
    %71 = math.exp %70 : vector<8x8xf32>
    %cst_37 = arith.constant dense<0.000000e+00> : vector<8xf32>
    %72 = vector.multi_reduction <add>, %71, %cst_37 [1] : vector<8x8xf32> to vector<8xf32>
    %73 = vector.shape_cast %72 : vector<8xf32> to vector<8x1xf32>
    %74 = vector.broadcast %73 : vector<8x1xf32> to vector<8x8xf32>
    %75 = arith.divf %71, %74 : vector<8x8xf32>
    %cst_38 = arith.constant dense<0.000000e+00> : vector<8x8xf32>
    %76 = tpu.matmul %75, %63, %cst_38 {dimension_numbers = #tpu.dot_dimension_numbers<[1], [0], [0], [1], [0, 0, 1, 1], [], []>} : vector<8x8xf32>, vector<8x8xf32>, vector<8x8xf32> -> vector<8x8xf32>
    %c0_39 = arith.constant 0 : index
    %c8 = arith.constant 8 : index
    %77 = vector.load %arg13[%c0_39, %c8] : memref<8x32xf32, #tpu.memory_space<vmem>>, vector<8x8xf32>
    tpu.vector_store %arg13[%c0_39, %c8], %76 {strides = array<i32>} : memref<8x32xf32, #tpu.memory_space<vmem>>, vector<8x8xf32>,
    %78 = vector.extract_strided_slice %37 {offsets = [0, 16], sizes = [8, 8], strides = [1, 1]} : vector<8x32xf32> to vector<8x8xf32>
    %79 = vector.extract_strided_slice %31 {offsets = [0, 16], sizes = [8, 8], strides = [1, 1]} : vector<8x32xf32> to vector<8x8xf32>
    %80 = vector.extract_strided_slice %43 {offsets = [0, 16], sizes = [8, 8], strides = [1, 1]} : vector<8x32xf32> to vector<8x8xf32>
    %cst_40 = arith.constant dense<0.000000e+00> : vector<8x8xf32>
    %81 = tpu.matmul %78, %79, %cst_40 {dimension_numbers = #tpu.dot_dimension_numbers<[1], [1], [0], [0], [0, 0, 1, 0], [], []>} : vector<8x8xf32>, vector<8x8xf32>, vector<8x8xf32> -> vector<8x8xf32>
    %cst_41 = arith.constant 2.82842708 : f32
    %82 = vector.broadcast %cst_41 : f32 to vector<8x8xf32>
    %83 = arith.divf %81, %82 : vector<8x8xf32>
    %cst_42 = arith.constant dense<0xFF800000> : vector<8xf32>
    %84 = vector.multi_reduction <maximumf>, %83, %cst_42 [1] : vector<8x8xf32> to vector<8xf32>
    %85 = vector.shape_cast %84 : vector<8xf32> to vector<8x1xf32>
    %86 = vector.broadcast %85 : vector<8x1xf32> to vector<8x8xf32>
    %87 = arith.subf %83, %86 : vector<8x8xf32>
    %88 = math.exp %87 : vector<8x8xf32>
    %cst_43 = arith.constant dense<0.000000e+00> : vector<8xf32>
    %89 = vector.multi_reduction <add>, %88, %cst_43 [1] : vector<8x8xf32> to vector<8xf32>
    %90 = vector.shape_cast %89 : vector<8xf32> to vector<8x1xf32>
    %91 = vector.broadcast %90 : vector<8x1xf32> to vector<8x8xf32>
    %92 = arith.divf %88, %91 : vector<8x8xf32>
    %cst_44 = arith.constant dense<0.000000e+00> : vector<8x8xf32>
    %93 = tpu.matmul %92, %80, %cst_44 {dimension_numbers = #tpu.dot_dimension_numbers<[1], [0], [0], [1], [0, 0, 1, 1], [], []>} : vector<8x8xf32>, vector<8x8xf32>, vector<8x8xf32> -> vector<8x8xf32>
    %c0_45 = arith.constant 0 : index
    %c16 = arith.constant 16 : index
    %94 = vector.load %arg13[%c0_45, %c16] : memref<8x32xf32, #tpu.memory_space<vmem>>, vector<8x8xf32>
    tpu.vector_store %arg13[%c0_45, %c16], %93 {strides = array<i32>} : memref<8x32xf32, #tpu.memory_space<vmem>>, vector<8x8xf32>,
    %95 = vector.extract_strided_slice %37 {offsets = [0, 24], sizes = [8, 8], strides = [1, 1]} : vector<8x32xf32> to vector<8x8xf32>
    %96 = vector.extract_strided_slice %31 {offsets = [0, 24], sizes = [8, 8], strides = [1, 1]} : vector<8x32xf32> to vector<8x8xf32>
    %97 = vector.extract_strided_slice %43 {offsets = [0, 24], sizes = [8, 8], strides = [1, 1]} : vector<8x32xf32> to vector<8x8xf32>
    %cst_46 = arith.constant dense<0.000000e+00> : vector<8x8xf32>
    %98 = tpu.matmul %95, %96, %cst_46 {dimension_numbers = #tpu.dot_dimension_numbers<[1], [1], [0], [0], [0, 0, 1, 0], [], []>} : vector<8x8xf32>, vector<8x8xf32>, vector<8x8xf32> -> vector<8x8xf32>
    %cst_47 = arith.constant 2.82842708 : f32
    %99 = vector.broadcast %cst_47 : f32 to vector<8x8xf32>
    %100 = arith.divf %98, %99 : vector<8x8xf32>
    %cst_48 = arith.constant dense<0xFF800000> : vector<8xf32>
    %101 = vector.multi_reduction <maximumf>, %100, %cst_48 [1] : vector<8x8xf32> to vector<8xf32>
    %102 = vector.shape_cast %101 : vector<8xf32> to vector<8x1xf32>
    %103 = vector.broadcast %102 : vector<8x1xf32> to vector<8x8xf32>
    %104 = arith.subf %100, %103 : vector<8x8xf32>
    %105 = math.exp %104 : vector<8x8xf32>
    %cst_49 = arith.constant dense<0.000000e+00> : vector<8xf32>
    %106 = vector.multi_reduction <add>, %105, %cst_49 [1] : vector<8x8xf32> to vector<8xf32>
    %107 = vector.shape_cast %106 : vector<8xf32> to vector<8x1xf32>
    %108 = vector.broadcast %107 : vector<8x1xf32> to vector<8x8xf32>
    %109 = arith.divf %105, %108 : vector<8x8xf32>
    %cst_50 = arith.constant dense<0.000000e+00> : vector<8x8xf32>
    %110 = tpu.matmul %109, %97, %cst_50 {dimension_numbers = #tpu.dot_dimension_numbers<[1], [0], [0], [1], [0, 0, 1, 1], [], []>} : vector<8x8xf32>, vector<8x8xf32>, vector<8x8xf32> -> vector<8x8xf32>
    %c0_51 = arith.constant 0 : index
    %c24 = arith.constant 24 : index
    %111 = vector.load %arg13[%c0_51, %c24] : memref<8x32xf32, #tpu.memory_space<vmem>>, vector<8x8xf32>
    tpu.vector_store %arg13[%c0_51, %c24], %110 {strides = array<i32>} : memref<8x32xf32, #tpu.memory_space<vmem>>, vector<8x8xf32>,
    %c0_52 = arith.constant 0 : index
    %c0_53 = arith.constant 0 : index
    %112 = vector.load %arg13[%c0_52, %c0_53] : memref<8x32xf32, #tpu.memory_space<vmem>>, vector<8x32xf32>
    %c3 = arith.constant 3 : index
    %c0_54 = arith.constant 0 : index
    %c0_55 = arith.constant 0 : index
    %113 = vector.load %arg4[%c3, %c0_54, %c0_55] : memref<4x32x32xf32, #tpu.memory_space<vmem>>, vector<1x32x32xf32>
    %114 = vector.shape_cast %113 : vector<1x32x32xf32> to vector<32x32xf32>
    %cst_56 = arith.constant dense<0.000000e+00> : vector<8x32xf32>
    %115 = tpu.matmul %112, %114, %cst_56 {dimension_numbers = #tpu.dot_dimension_numbers<[1], [0], [0], [1], [0, 0, 1, 1], [], []>} : vector<8x32xf32>, vector<32x32xf32>, vector<8x32xf32> -> vector<8x32xf32>
    %c3_57 = arith.constant 3 : index
    %c0_58 = arith.constant 0 : index
    %116 = vector.load %arg5[%c3_57, %c0_58] : memref<4x32xf32, #tpu.memory_space<vmem>>, vector<1x32xf32>
    %117 = vector.broadcast %116 : vector<1x32xf32> to vector<8x32xf32>
    %118 = arith.addf %115, %117 : vector<8x32xf32>
    %119 = arith.addf %1, %118 : vector<8x32xf32>
    %c2_59 = arith.constant 2 : index
    %120 = memref.load %arg1[%c2_59] : memref<6xf32, #tpu.memory_space<smem>>
    %c3_60 = arith.constant 3 : index
    %121 = memref.load %arg1[%c3_60] : memref<6xf32, #tpu.memory_space<smem>>
    %cst_61 = arith.constant dense<0.000000e+00> : vector<8xf32>
    %122 = vector.multi_reduction <add>, %119, %cst_61 [1] : vector<8x32xf32> to vector<8xf32>
    %123 = vector.shape_cast %122 : vector<8xf32> to vector<8x1xf32>
    %cst_62 = arith.constant 3.200000e+01 : f32
    %124 = vector.broadcast %cst_62 : f32 to vector<8x1xf32>
    %125 = arith.divf %123, %124 : vector<8x1xf32>
    %126 = vector.broadcast %125 : vector<8x1xf32> to vector<8x32xf32>
    %127 = arith.subf %119, %126 : vector<8x32xf32>
    %128 = arith.mulf %127, %127 : vector<8x32xf32>
    %cst_63 = arith.constant dense<0.000000e+00> : vector<8xf32>
    %129 = vector.multi_reduction <add>, %128, %cst_63 [1] : vector<8x32xf32> to vector<8xf32>
    %130 = vector.shape_cast %129 : vector<8xf32> to vector<8x1xf32>
    %cst_64 = arith.constant 3.100000e+01 : f32
    %131 = vector.broadcast %cst_64 : f32 to vector<8x1xf32>
    %132 = arith.divf %130, %131 : vector<8x1xf32>
    %133 = math.sqrt %132 : vector<8x1xf32>
    %cst_65 = arith.constant 9.99999997E-7 : f32
    %134 = vector.broadcast %cst_65 : f32 to vector<8x1xf32>
    %135 = arith.addf %133, %134 : vector<8x1xf32>
    %136 = vector.broadcast %135 : vector<8x1xf32> to vector<8x32xf32>
    %137 = arith.divf %127, %136 : vector<8x32xf32>
    %138 = vector.broadcast %120 : f32 to vector<8x32xf32>
    %139 = arith.mulf %138, %137 : vector<8x32xf32>
    %140 = vector.broadcast %121 : f32 to vector<8x32xf32>
    %141 = arith.addf %139, %140 : vector<8x32xf32>
    %c0_66 = arith.constant 0 : index
    %c0_67 = arith.constant 0 : index
    %c0_68 = arith.constant 0 : index
    %142 = vector.load %arg6[%c0_66, %c0_67, %c0_68] : memref<4x32x32xf32, #tpu.memory_space<vmem>>, vector<1x32x32xf32>
    %143 = vector.shape_cast %142 : vector<1x32x32xf32> to vector<32x32xf32>
    %cst_69 = arith.constant dense<0.000000e+00> : vector<8x32xf32>
    %144 = tpu.matmul %141, %143, %cst_69 {dimension_numbers = #tpu.dot_dimension_numbers<[1], [0], [0], [1], [0, 0, 1, 1], [], []>} : vector<8x32xf32>, vector<32x32xf32>, vector<8x32xf32> -> vector<8x32xf32>
    %c0_70 = arith.constant 0 : index
    %c0_71 = arith.constant 0 : index
    %145 = vector.load %arg7[%c0_70, %c0_71] : memref<4x32xf32, #tpu.memory_space<vmem>>, vector<1x32xf32>
    %146 = vector.broadcast %145 : vector<1x32xf32> to vector<8x32xf32>
    %147 = arith.addf %144, %146 : vector<8x32xf32>
    %c1_72 = arith.constant 1 : index
    %c0_73 = arith.constant 0 : index
    %c0_74 = arith.constant 0 : index
    %148 = vector.load %arg6[%c1_72, %c0_73, %c0_74] : memref<4x32x32xf32, #tpu.memory_space<vmem>>, vector<1x32x32xf32>
    %149 = vector.shape_cast %148 : vector<1x32x32xf32> to vector<32x32xf32>
    %cst_75 = arith.constant dense<0.000000e+00> : vector<8x32xf32>
    %150 = tpu.matmul %3, %149, %cst_75 {dimension_numbers = #tpu.dot_dimension_numbers<[1], [0], [0], [1], [0, 0, 1, 1], [], []>} : vector<8x32xf32>, vector<32x32xf32>, vector<8x32xf32> -> vector<8x32xf32>
    %c1_76 = arith.constant 1 : index
    %c0_77 = arith.constant 0 : index
    %151 = vector.load %arg7[%c1_76, %c0_77] : memref<4x32xf32, #tpu.memory_space<vmem>>, vector<1x32xf32>
    %152 = vector.broadcast %151 : vector<1x32xf32> to vector<8x32xf32>
    %153 = arith.addf %150, %152 : vector<8x32xf32>
    %c2_78 = arith.constant 2 : index
    %c0_79 = arith.constant 0 : index
    %c0_80 = arith.constant 0 : index
    %154 = vector.load %arg6[%c2_78, %c0_79, %c0_80] : memref<4x32x32xf32, #tpu.memory_space<vmem>>, vector<1x32x32xf32>
    %155 = vector.shape_cast %154 : vector<1x32x32xf32> to vector<32x32xf32>
    %cst_81 = arith.constant dense<0.000000e+00> : vector<8x32xf32>
    %156 = tpu.matmul %3, %155, %cst_81 {dimension_numbers = #tpu.dot_dimension_numbers<[1], [0], [0], [1], [0, 0, 1, 1], [], []>} : vector<8x32xf32>, vector<32x32xf32>, vector<8x32xf32> -> vector<8x32xf32>
    %c2_82 = arith.constant 2 : index
    %c0_83 = arith.constant 0 : index
    %157 = vector.load %arg7[%c2_82, %c0_83] : memref<4x32xf32, #tpu.memory_space<vmem>>, vector<1x32xf32>
    %158 = vector.broadcast %157 : vector<1x32xf32> to vector<8x32xf32>
    %159 = arith.addf %156, %158 : vector<8x32xf32>
    %160 = vector.extract_strided_slice %153 {offsets = [0, 0], sizes = [8, 8], strides = [1, 1]} : vector<8x32xf32> to vector<8x8xf32>
    %161 = vector.extract_strided_slice %147 {offsets = [0, 0], sizes = [8, 8], strides = [1, 1]} : vector<8x32xf32> to vector<8x8xf32>
    %162 = vector.extract_strided_slice %159 {offsets = [0, 0], sizes = [8, 8], strides = [1, 1]} : vector<8x32xf32> to vector<8x8xf32>
    %cst_84 = arith.constant dense<0.000000e+00> : vector<8x8xf32>
    %163 = tpu.matmul %160, %161, %cst_84 {dimension_numbers = #tpu.dot_dimension_numbers<[1], [1], [0], [0], [0, 0, 1, 0], [], []>} : vector<8x8xf32>, vector<8x8xf32>, vector<8x8xf32> -> vector<8x8xf32>
    %cst_85 = arith.constant 2.82842708 : f32
    %164 = vector.broadcast %cst_85 : f32 to vector<8x8xf32>
    %165 = arith.divf %163, %164 : vector<8x8xf32>
    %cst_86 = arith.constant dense<0xFF800000> : vector<8xf32>
    %166 = vector.multi_reduction <maximumf>, %165, %cst_86 [1] : vector<8x8xf32> to vector<8xf32>
    %167 = vector.shape_cast %166 : vector<8xf32> to vector<8x1xf32>
    %168 = vector.broadcast %167 : vector<8x1xf32> to vector<8x8xf32>
    %169 = arith.subf %165, %168 : vector<8x8xf32>
    %170 = math.exp %169 : vector<8x8xf32>
    %cst_87 = arith.constant dense<0.000000e+00> : vector<8xf32>
    %171 = vector.multi_reduction <add>, %170, %cst_87 [1] : vector<8x8xf32> to vector<8xf32>
    %172 = vector.shape_cast %171 : vector<8xf32> to vector<8x1xf32>
    %173 = vector.broadcast %172 : vector<8x1xf32> to vector<8x8xf32>
    %174 = arith.divf %170, %173 : vector<8x8xf32>
    %cst_88 = arith.constant dense<0.000000e+00> : vector<8x8xf32>
    %175 = tpu.matmul %174, %162, %cst_88 {dimension_numbers = #tpu.dot_dimension_numbers<[1], [0], [0], [1], [0, 0, 1, 1], [], []>} : vector<8x8xf32>, vector<8x8xf32>, vector<8x8xf32> -> vector<8x8xf32>
    %c0_89 = arith.constant 0 : index
    %c0_90 = arith.constant 0 : index
    %176 = vector.load %arg13[%c0_89, %c0_90] : memref<8x32xf32, #tpu.memory_space<vmem>>, vector<8x8xf32>
    tpu.vector_store %arg13[%c0_89, %c0_90], %175 {strides = array<i32>} : memref<8x32xf32, #tpu.memory_space<vmem>>, vector<8x8xf32>,
    %177 = vector.extract_strided_slice %153 {offsets = [0, 8], sizes = [8, 8], strides = [1, 1]} : vector<8x32xf32> to vector<8x8xf32>
    %178 = vector.extract_strided_slice %147 {offsets = [0, 8], sizes = [8, 8], strides = [1, 1]} : vector<8x32xf32> to vector<8x8xf32>
    %179 = vector.extract_strided_slice %159 {offsets = [0, 8], sizes = [8, 8], strides = [1, 1]} : vector<8x32xf32> to vector<8x8xf32>
    %cst_91 = arith.constant dense<0.000000e+00> : vector<8x8xf32>
    %180 = tpu.matmul %177, %178, %cst_91 {dimension_numbers = #tpu.dot_dimension_numbers<[1], [1], [0], [0], [0, 0, 1, 0], [], []>} : vector<8x8xf32>, vector<8x8xf32>, vector<8x8xf32> -> vector<8x8xf32>
    %cst_92 = arith.constant 2.82842708 : f32
    %181 = vector.broadcast %cst_92 : f32 to vector<8x8xf32>
    %182 = arith.divf %180, %181 : vector<8x8xf32>
    %cst_93 = arith.constant dense<0xFF800000> : vector<8xf32>
    %183 = vector.multi_reduction <maximumf>, %182, %cst_93 [1] : vector<8x8xf32> to vector<8xf32>
    %184 = vector.shape_cast %183 : vector<8xf32> to vector<8x1xf32>
    %185 = vector.broadcast %184 : vector<8x1xf32> to vector<8x8xf32>
    %186 = arith.subf %182, %185 : vector<8x8xf32>
    %187 = math.exp %186 : vector<8x8xf32>
    %cst_94 = arith.constant dense<0.000000e+00> : vector<8xf32>
    %188 = vector.multi_reduction <add>, %187, %cst_94 [1] : vector<8x8xf32> to vector<8xf32>
    %189 = vector.shape_cast %188 : vector<8xf32> to vector<8x1xf32>
    %190 = vector.broadcast %189 : vector<8x1xf32> to vector<8x8xf32>
    %191 = arith.divf %187, %190 : vector<8x8xf32>
    %cst_95 = arith.constant dense<0.000000e+00> : vector<8x8xf32>
    %192 = tpu.matmul %191, %179, %cst_95 {dimension_numbers = #tpu.dot_dimension_numbers<[1], [0], [0], [1], [0, 0, 1, 1], [], []>} : vector<8x8xf32>, vector<8x8xf32>, vector<8x8xf32> -> vector<8x8xf32>
    %c0_96 = arith.constant 0 : index
    %c8_97 = arith.constant 8 : index
    %193 = vector.load %arg13[%c0_96, %c8_97] : memref<8x32xf32, #tpu.memory_space<vmem>>, vector<8x8xf32>
    tpu.vector_store %arg13[%c0_96, %c8_97], %192 {strides = array<i32>} : memref<8x32xf32, #tpu.memory_space<vmem>>, vector<8x8xf32>,
    %194 = vector.extract_strided_slice %153 {offsets = [0, 16], sizes = [8, 8], strides = [1, 1]} : vector<8x32xf32> to vector<8x8xf32>
    %195 = vector.extract_strided_slice %147 {offsets = [0, 16], sizes = [8, 8], strides = [1, 1]} : vector<8x32xf32> to vector<8x8xf32>
    %196 = vector.extract_strided_slice %159 {offsets = [0, 16], sizes = [8, 8], strides = [1, 1]} : vector<8x32xf32> to vector<8x8xf32>
    %cst_98 = arith.constant dense<0.000000e+00> : vector<8x8xf32>
    %197 = tpu.matmul %194, %195, %cst_98 {dimension_numbers = #tpu.dot_dimension_numbers<[1], [1], [0], [0], [0, 0, 1, 0], [], []>} : vector<8x8xf32>, vector<8x8xf32>, vector<8x8xf32> -> vector<8x8xf32>
    %cst_99 = arith.constant 2.82842708 : f32
    %198 = vector.broadcast %cst_99 : f32 to vector<8x8xf32>
    %199 = arith.divf %197, %198 : vector<8x8xf32>
    %cst_100 = arith.constant dense<0xFF800000> : vector<8xf32>
    %200 = vector.multi_reduction <maximumf>, %199, %cst_100 [1] : vector<8x8xf32> to vector<8xf32>
    %201 = vector.shape_cast %200 : vector<8xf32> to vector<8x1xf32>
    %202 = vector.broadcast %201 : vector<8x1xf32> to vector<8x8xf32>
    %203 = arith.subf %199, %202 : vector<8x8xf32>
    %204 = math.exp %203 : vector<8x8xf32>
    %cst_101 = arith.constant dense<0.000000e+00> : vector<8xf32>
    %205 = vector.multi_reduction <add>, %204, %cst_101 [1] : vector<8x8xf32> to vector<8xf32>
    %206 = vector.shape_cast %205 : vector<8xf32> to vector<8x1xf32>
    %207 = vector.broadcast %206 : vector<8x1xf32> to vector<8x8xf32>
    %208 = arith.divf %204, %207 : vector<8x8xf32>
    %cst_102 = arith.constant dense<0.000000e+00> : vector<8x8xf32>
    %209 = tpu.matmul %208, %196, %cst_102 {dimension_numbers = #tpu.dot_dimension_numbers<[1], [0], [0], [1], [0, 0, 1, 1], [], []>} : vector<8x8xf32>, vector<8x8xf32>, vector<8x8xf32> -> vector<8x8xf32>
    %c0_103 = arith.constant 0 : index
    %c16_104 = arith.constant 16 : index
    %210 = vector.load %arg13[%c0_103, %c16_104] : memref<8x32xf32, #tpu.memory_space<vmem>>, vector<8x8xf32>
    tpu.vector_store %arg13[%c0_103, %c16_104], %209 {strides = array<i32>} : memref<8x32xf32, #tpu.memory_space<vmem>>, vector<8x8xf32>,
    %211 = vector.extract_strided_slice %153 {offsets = [0, 24], sizes = [8, 8], strides = [1, 1]} : vector<8x32xf32> to vector<8x8xf32>
    %212 = vector.extract_strided_slice %147 {offsets = [0, 24], sizes = [8, 8], strides = [1, 1]} : vector<8x32xf32> to vector<8x8xf32>
    %213 = vector.extract_strided_slice %159 {offsets = [0, 24], sizes = [8, 8], strides = [1, 1]} : vector<8x32xf32> to vector<8x8xf32>
    %cst_105 = arith.constant dense<0.000000e+00> : vector<8x8xf32>
    %214 = tpu.matmul %211, %212, %cst_105 {dimension_numbers = #tpu.dot_dimension_numbers<[1], [1], [0], [0], [0, 0, 1, 0], [], []>} : vector<8x8xf32>, vector<8x8xf32>, vector<8x8xf32> -> vector<8x8xf32>
    %cst_106 = arith.constant 2.82842708 : f32
    %215 = vector.broadcast %cst_106 : f32 to vector<8x8xf32>
    %216 = arith.divf %214, %215 : vector<8x8xf32>
    %cst_107 = arith.constant dense<0xFF800000> : vector<8xf32>
    %217 = vector.multi_reduction <maximumf>, %216, %cst_107 [1] : vector<8x8xf32> to vector<8xf32>
    %218 = vector.shape_cast %217 : vector<8xf32> to vector<8x1xf32>
    %219 = vector.broadcast %218 : vector<8x1xf32> to vector<8x8xf32>
    %220 = arith.subf %216, %219 : vector<8x8xf32>
    %221 = math.exp %220 : vector<8x8xf32>
    %cst_108 = arith.constant dense<0.000000e+00> : vector<8xf32>
    %222 = vector.multi_reduction <add>, %221, %cst_108 [1] : vector<8x8xf32> to vector<8xf32>
    %223 = vector.shape_cast %222 : vector<8xf32> to vector<8x1xf32>
    %224 = vector.broadcast %223 : vector<8x1xf32> to vector<8x8xf32>
    %225 = arith.divf %221, %224 : vector<8x8xf32>
    %cst_109 = arith.constant dense<0.000000e+00> : vector<8x8xf32>
    %226 = tpu.matmul %225, %213, %cst_109 {dimension_numbers = #tpu.dot_dimension_numbers<[1], [0], [0], [1], [0, 0, 1, 1], [], []>} : vector<8x8xf32>, vector<8x8xf32>, vector<8x8xf32> -> vector<8x8xf32>
    %c0_110 = arith.constant 0 : index
    %c24_111 = arith.constant 24 : index
    %227 = vector.load %arg13[%c0_110, %c24_111] : memref<8x32xf32, #tpu.memory_space<vmem>>, vector<8x8xf32>
    tpu.vector_store %arg13[%c0_110, %c24_111], %226 {strides = array<i32>} : memref<8x32xf32, #tpu.memory_space<vmem>>, vector<8x8xf32>,
    %c0_112 = arith.constant 0 : index
    %c0_113 = arith.constant 0 : index
    %228 = vector.load %arg13[%c0_112, %c0_113] : memref<8x32xf32, #tpu.memory_space<vmem>>, vector<8x32xf32>
    %c3_114 = arith.constant 3 : index
    %c0_115 = arith.constant 0 : index
    %c0_116 = arith.constant 0 : index
    %229 = vector.load %arg6[%c3_114, %c0_115, %c0_116] : memref<4x32x32xf32, #tpu.memory_space<vmem>>, vector<1x32x32xf32>
    %230 = vector.shape_cast %229 : vector<1x32x32xf32> to vector<32x32xf32>
    %cst_117 = arith.constant dense<0.000000e+00> : vector<8x32xf32>
    %231 = tpu.matmul %228, %230, %cst_117 {dimension_numbers = #tpu.dot_dimension_numbers<[1], [0], [0], [1], [0, 0, 1, 1], [], []>} : vector<8x32xf32>, vector<32x32xf32>, vector<8x32xf32> -> vector<8x32xf32>
    %c3_118 = arith.constant 3 : index
    %c0_119 = arith.constant 0 : index
    %232 = vector.load %arg7[%c3_118, %c0_119] : memref<4x32xf32, #tpu.memory_space<vmem>>, vector<1x32xf32>
    %233 = vector.broadcast %232 : vector<1x32xf32> to vector<8x32xf32>
    %234 = arith.addf %231, %233 : vector<8x32xf32>
    %235 = arith.addf %119, %234 : vector<8x32xf32>
    %c4 = arith.constant 4 : index
    %236 = memref.load %arg1[%c4] : memref<6xf32, #tpu.memory_space<smem>>
    %c5 = arith.constant 5 : index
    %237 = memref.load %arg1[%c5] : memref<6xf32, #tpu.memory_space<smem>>
    %cst_120 = arith.constant dense<0.000000e+00> : vector<8xf32>
    %238 = vector.multi_reduction <add>, %235, %cst_120 [1] : vector<8x32xf32> to vector<8xf32>
    %239 = vector.shape_cast %238 : vector<8xf32> to vector<8x1xf32>
    %cst_121 = arith.constant 3.200000e+01 : f32
    %240 = vector.broadcast %cst_121 : f32 to vector<8x1xf32>
    %241 = arith.divf %239, %240 : vector<8x1xf32>
    %242 = vector.broadcast %241 : vector<8x1xf32> to vector<8x32xf32>
    %243 = arith.subf %235, %242 : vector<8x32xf32>
    %244 = arith.mulf %243, %243 : vector<8x32xf32>
    %cst_122 = arith.constant dense<0.000000e+00> : vector<8xf32>
    %245 = vector.multi_reduction <add>, %244, %cst_122 [1] : vector<8x32xf32> to vector<8xf32>
    %246 = vector.shape_cast %245 : vector<8xf32> to vector<8x1xf32>
    %cst_123 = arith.constant 3.100000e+01 : f32
    %247 = vector.broadcast %cst_123 : f32 to vector<8x1xf32>
    %248 = arith.divf %246, %247 : vector<8x1xf32>
    %249 = math.sqrt %248 : vector<8x1xf32>
    %cst_124 = arith.constant 9.99999997E-7 : f32
    %250 = vector.broadcast %cst_124 : f32 to vector<8x1xf32>
    %251 = arith.addf %249, %250 : vector<8x1xf32>
    %252 = vector.broadcast %251 : vector<8x1xf32> to vector<8x32xf32>
    %253 = arith.divf %243, %252 : vector<8x32xf32>
    %254 = vector.broadcast %236 : f32 to vector<8x32xf32>
    %255 = arith.mulf %254, %253 : vector<8x32xf32>
    %256 = vector.broadcast %237 : f32 to vector<8x32xf32>
    %257 = arith.addf %255, %256 : vector<8x32xf32>
    %c0_125 = arith.constant 0 : index
    %c0_126 = arith.constant 0 : index
    %258 = vector.load %arg8[%c0_125, %c0_126] : memref<32x64xf32, #tpu.memory_space<vmem>>, vector<32x64xf32>
    %cst_127 = arith.constant dense<0.000000e+00> : vector<8x64xf32>
    %259 = tpu.matmul %257, %258, %cst_127 {dimension_numbers = #tpu.dot_dimension_numbers<[1], [0], [0], [1], [0, 0, 1, 1], [], []>} : vector<8x32xf32>, vector<32x64xf32>, vector<8x64xf32> -> vector<8x64xf32>
    %c0_128 = arith.constant 0 : index
    %c0_129 = arith.constant 0 : index
    %260 = vector.load %arg9[%c0_128, %c0_129] : memref<1x64xf32, #tpu.memory_space<vmem>>, vector<1x64xf32>
    %261 = vector.broadcast %260 : vector<1x64xf32> to vector<8x64xf32>
    %262 = arith.addf %259, %261 : vector<8x64xf32>
    %cst_130 = arith.constant 0.000000e+00 : f32
    %263 = vector.broadcast %cst_130 : f32 to vector<8x64xf32>
    %264 = arith.maximumf %262, %263 : vector<8x64xf32>
    %c0_131 = arith.constant 0 : index
    %c0_132 = arith.constant 0 : index
    %265 = vector.load %arg10[%c0_131, %c0_132] : memref<64x32xf32, #tpu.memory_space<vmem>>, vector<64x32xf32>
    %cst_133 = arith.constant dense<0.000000e+00> : vector<8x32xf32>
    %266 = tpu.matmul %264, %265, %cst_133 {dimension_numbers = #tpu.dot_dimension_numbers<[1], [0], [0], [1], [0, 0, 1, 1], [], []>} : vector<8x64xf32>, vector<64x32xf32>, vector<8x32xf32> -> vector<8x32xf32>
    %267 = arith.addf %235, %266 : vector<8x32xf32>
    %c0_134 = arith.constant 0 : index
    %c0_135 = arith.constant 0 : index
    %268 = vector.load %arg11[%c0_134, %c0_135] : memref<1x32xf32, #tpu.memory_space<vmem>>, vector<1x32xf32>
    %269 = vector.broadcast %268 : vector<1x32xf32> to vector<8x32xf32>
    %270 = arith.addf %267, %269 : vector<8x32xf32>
    %c0_136 = arith.constant 0 : index
    %c0_137 = arith.constant 0 : index
    %c0_138 = arith.constant 0 : index
    %271 = vector.load %arg12[%c0_136, %c0_137, %c0_138] : memref<1x8x32xf32, #tpu.memory_space<vmem>>, vector<1x8x32xf32>
    %272 = vector.shape_cast %271 : vector<1x8x32xf32> to vector<8x32xf32>
    %273 = vector.shape_cast %270 : vector<8x32xf32> to vector<1x8x32xf32>
    tpu.vector_store %arg12[%c0_136, %c0_137, %c0_138], %273 {strides = array<i32>} : memref<1x8x32xf32, #tpu.memory_space<vmem>>, vector<1x8x32xf32>,
    return
  }
  func.func @transform_0(%arg0: i32) -> i32 {
    %c0_i32 = arith.constant 0 : i32
    %c0_i32_0 = arith.constant 0 : i32
    return %c0_i32 : i32
  }
  func.func @transform_1(%arg0: i32) -> (i32, i32, i32) {
    %c0_i32 = arith.constant 0 : i32
    %c0_i32_0 = arith.constant 0 : i32
    %c0_i32_1 = arith.constant 0 : i32
    return %arg0, %c0_i32, %c0_i32_0 : i32, i32, i32
  }
  func.func @transform_2(%arg0: i32) -> (i32, i32, i32) {
    %c0_i32 = arith.constant 0 : i32
    %c0_i32_0 = arith.constant 0 : i32
    %c0_i32_1 = arith.constant 0 : i32
    return %arg0, %c0_i32, %c0_i32_0 : i32, i32, i32
  }
  func.func @transform_3(%arg0: i32) -> (i32, i32, i32) {
    %c0_i32 = arith.constant 0 : i32
    %c0_i32_0 = arith.constant 0 : i32
    %c0_i32_1 = arith.constant 0 : i32
    %c0_i32_2 = arith.constant 0 : i32
    return %c0_i32, %c0_i32_0, %c0_i32_1 : i32, i32, i32
  }
  func.func @transform_4(%arg0: i32) -> (i32, i32) {
    %c0_i32 = arith.constant 0 : i32
    %c0_i32_0 = arith.constant 0 : i32
    %c0_i32_1 = arith.constant 0 : i32
    return %c0_i32, %c0_i32_0 : i32, i32
  }
  func.func @transform_5(%arg0: i32) -> (i32, i32, i32) {
    %c0_i32 = arith.constant 0 : i32
    %c0_i32_0 = arith.constant 0 : i32
    %c0_i32_1 = arith.constant 0 : i32
    %c0_i32_2 = arith.constant 0 : i32
    return %c0_i32, %c0_i32_0, %c0_i32_1 : i32, i32, i32
  }
  func.func @transform_6(%arg0: i32) -> (i32, i32) {
    %c0_i32 = arith.constant 0 : i32
    %c0_i32_0 = arith.constant 0 : i32
    %c0_i32_1 = arith.constant 0 : i32
    return %c0_i32, %c0_i32_0 : i32, i32
  }
  func.func @transform_7(%arg0: i32) -> (i32, i32) {
    %c0_i32 = arith.constant 0 : i32
    %c0_i32_0 = arith.constant 0 : i32
    %c0_i32_1 = arith.constant 0 : i32
    return %c0_i32, %c0_i32_0 : i32, i32
  }
  func.func @transform_8(%arg0: i32) -> (i32, i32) {
    %c0_i32 = arith.constant 0 : i32
    %c0_i32_0 = arith.constant 0 : i32
    %c0_i32_1 = arith.constant 0 : i32
    return %c0_i32, %c0_i32_0 : i32, i32
  }
  func.func @transform_9(%arg0: i32) -> (i32, i32) {
    %c0_i32 = arith.constant 0 : i32
    %c0_i32_0 = arith.constant 0 : i32
    %c0_i32_1 = arith.constant 0 : i32
    return %c0_i32, %c0_i32_0 : i32, i32
  }
  func.func @transform_10(%arg0: i32) -> (i32, i32) {
    %c0_i32 = arith.constant 0 : i32
    %c0_i32_0 = arith.constant 0 : i32
    %c0_i32_1 = arith.constant 0 : i32
    return %c0_i32, %c0_i32_0 : i32, i32
  }
  func.func @transform_11(%arg0: i32) -> (i32, i32, i32) {
    %c0_i32 = arith.constant 0 : i32
    %c0_i32_0 = arith.constant 0 : i32
    %c0_i32_1 = arith.constant 0 : i32
    return %arg0, %c0_i32, %c0_i32_0 : i32, i32, i32
  }
}

</mosaic_0001>

<llo_original>
// kernel: decoder_block.1
$region0: #{decoder_block.1}
  #allocation0 [shape = 'u32[]', space=smem, size = 0x4, offset = 0x4, fixed_abs, tag = 'smem constant byte address 0x4 - core index']
  #allocation1 [shape = 'u32[144,128]{1,0:T(1,128)}', space=vmem, size = 0x12000, scoped, tag = 'internal scratch']
  #allocation2 [shape = 'f32[8,32]{1,0:T(8,128)}', space=vmem, size = 0x1000, scoped, tag = 'scratch operand']
  %s0 = inlined_call_operand.vmem [shape: f32[6], index: 0, kind: input, shape index: {}]
  %s1 = inlined_call_operand.vmem [shape: f32[2,8,32], index: 1, kind: input, shape index: {}]
  %s2 = inlined_call_operand.vmem [shape: f32[2,8,32], index: 2, kind: input, shape index: {}]
  %s3 = inlined_call_operand.vmem [shape: f32[4,32,32], index: 3, kind: input, shape index: {}]
  %s4 = inlined_call_operand.vmem [shape: f32[4,32], index: 4, kind: input, shape index: {}]
  %s5 = inlined_call_operand.vmem [shape: f32[4,32,32], index: 5, kind: input, shape index: {}]
  %s6 = inlined_call_operand.vmem [shape: f32[4,32], index: 6, kind: input, shape index: {}]
  %s7 = inlined_call_operand.vmem [shape: f32[32,64], index: 7, kind: input, shape index: {}]
  %s8 = inlined_call_operand.vmem [shape: f32[1,64], index: 8, kind: input, shape index: {}]
  %s9 = inlined_call_operand.vmem [shape: f32[64,32], index: 9, kind: input, shape index: {}]
  %s10 = inlined_call_operand.vmem [shape: f32[1,32], index: 10, kind: input, shape index: {}]
  %s11 = inlined_call_operand.hbm [shape: f32[2,8,32], index: 11, kind: output, shape index: {}]
  %s12 = sld [smem:[#allocation0]]
  $region81: #{decoder_block.1} parent=0
    _
  %s14 = ssub.s32 1, %s12
  %s15 = scalar_select 0, %s14, %s12
  $region1: #{decoder_block.1} parent=0
    #allocation3 [shape = 'u8[512]{0}', space=smem, size = 0x200, scoped, tag = 'input window, operand 0, single buffered']
    #allocation4 [shape = 's32[2]{0}', space=sflag, size = 0x8, scoped, tag = 'scoped memory for decoder_block.1']
    #allocation5 [shape = 's32[2]{0}', space=sflag, size = 0x8, scoped, tag = 'scoped memory for decoder_block.1']
    #allocation6 [shape = 'u8[8192]{0}', space=vmem, size = 0x2000, scoped, tag = 'output window, operand 0']
    %16 = vsyncpa [#allocation5], 0
    %17 = vsyncpa [#allocation4], 0
    %s18 = scalar_lea.sflag [#allocation4], 1
    %19 = vsyncpa %s18, 0
    loop: start=0, step=1, limit=4
    $region2: #{decoder_block.1} parent=1 // loop_pre_header
      _
    $region3: #{decoder_block.1} parent=1 // loop_header
      %s21 = sphi 0, %s25
      %p22 = scmp.ge.s32.totalorder %s21, 4
      %s29 = sphi 0, %s29
      %s31 = sphi 0, %s29
      %s32 = sphi 0, %s31
      %s46 = sphi 0, %s32
      %s52 = sphi 0, %s54
      %s55 = sphi 0, %s52
      %s56 = sphi 0, %s55
      %s72 = sphi 0, %s56
      %s78 = sphi 0, %s80
      %s81 = sphi 0, %s78
      %s82 = sphi 0, %s81
      %s98 = sphi 0, %s82
      %s102 = sphi 0, %s102
      %s104 = sphi 0, %s102
      %s105 = sphi 0, %s104
      %s119 = sphi 0, %s105
      %s123 = sphi 0, %s123
      %s125 = sphi 0, %s123
      %s126 = sphi 0, %s125
      %s140 = sphi 0, %s126
      %s144 = sphi 0, %s144
      %s146 = sphi 0, %s144
      %s147 = sphi 0, %s146
      %s161 = sphi 0, %s147
      %s165 = sphi 0, %s165
      %s167 = sphi 0, %s165
      %s168 = sphi 0, %s167
      %s182 = sphi 0, %s168
      %s186 = sphi 0, %s186
      %s188 = sphi 0, %s186
      %s189 = sphi 0, %s188
      %s203 = sphi 0, %s189
      %s207 = sphi 0, %s207
      %s209 = sphi 0, %s207
      %s210 = sphi 0, %s209
      %s224 = sphi 0, %s210
      %s228 = sphi 0, %s228
      %s230 = sphi 0, %s228
      %s231 = sphi 0, %s230
      %s245 = sphi 0, %s231
      %s249 = sphi 0, %s249
      %s251 = sphi 0, %s249
      %s252 = sphi 0, %s251
      %s266 = sphi 0, %s252
      %s272 = sphi 0, %s274
      %s275 = sphi 0, %s272
      %s276 = sphi 0, %s275
      %s292 = sphi 0, %s276
    $region4: #{decoder_block.1} parent=1 // loop_header_branch
      %24 = sbr.rel (%p22) target = $region8
    $region5: #{decoder_block.1} parent=1 // loop_body
      %s26 = ssub.s32 %s21, 1
      %s27 = ssub.s32 %s21, 2
      %s28 = sadd.s32 %s21, 1
      %s30 = sadd.s32 %s29, 1
      %p33 = scmp.eq.s32.totalorder %s21, 1
      %p34 = scmp.ne.s32.totalorder %s29, %s31
      %p35 = scmp.eq.s32.totalorder %s21, 0
      %p36 = por %p34, %p35
      %p37 = scmp.ne.s32.totalorder %s29, %s31
      %p38 = scmp.eq.s32.totalorder %s26, 1
      %p39 = por %p37, %p38
      %p40 = scmp.ne.s32.totalorder %s31, %s32
      %p41 = scmp.eq.s32.totalorder %s26, 0
      %p42 = por %p40, %p41
      %p43 = scmp.ne.s32.totalorder %s31, %s32
      %p44 = scmp.eq.s32.totalorder %s27, 1
      %p45 = por %p43, %p44
      %p47 = scmp.ne.s32.totalorder %s32, %s46
      %p48 = scmp.eq.s32.totalorder %s27, 0
      %p49 = por %p47, %p48
      %s50 = ssub.s32 %s21, %s28
      %p51 = scmp.eq.s32.totalorder %s50, 0
      %s53 = sadd.s32 %s52, 1
      %s54 = scalar_select %p51, %s52, %s53
      %p57 = pneg %p51
      %p58 = scmp.eq.s32.totalorder %s21, 1
      %p59 = por %p57, %p58
      %p60 = scmp.ne.s32.totalorder %s52, %s55
      %p61 = scmp.eq.s32.totalorder %s21, 0
      %p62 = por %p60, %p61
      %p63 = scmp.ne.s32.totalorder %s52, %s55
      %p64 = scmp.eq.s32.totalorder %s26, 1
      %p65 = por %p63, %p64
      %p66 = scmp.ne.s32.totalorder %s55, %s56
      %p67 = scmp.eq.s32.totalorder %s26, 0
      %p68 = por %p66, %p67
      %p69 = scmp.ne.s32.totalorder %s55, %s56
      %p70 = scmp.eq.s32.totalorder %s27, 1
      %p71 = por %p69, %p70
      %p73 = scmp.ne.s32.totalorder %s56, %s72
      %p74 = scmp.eq.s32.totalorder %s27, 0
      %p75 = por %p73, %p74
      %s76 = ssub.s32 %s21, %s28
      %p77 = scmp.eq.s32.totalorder %s76, 0
      %s79 = sadd.s32 %s78, 1
      %s80 = scalar_select %p77, %s78, %s79
      %p83 = pneg %p77
      %p84 = scmp.eq.s32.totalorder %s21, 1
      %p85 = por %p83, %p84
      %p86 = scmp.ne.s32.totalorder %s78, %s81
      %p87 = scmp.eq.s32.totalorder %s21, 0
      %p88 = por %p86, %p87
      %p89 = scmp.ne.s32.totalorder %s78, %s81
      %p90 = scmp.eq.s32.totalorder %s26, 1
      %p91 = por %p89, %p90
      %p92 = scmp.ne.s32.totalorder %s81, %s82
      %p93 = scmp.eq.s32.totalorder %s26, 0
      %p94 = por %p92, %p93
      %p95 = scmp.ne.s32.totalorder %s81, %s82
      %p96 = scmp.eq.s32.totalorder %s27, 1
      %p97 = por %p95, %p96
      %p99 = scmp.ne.s32.totalorder %s82, %s98
      %p100 = scmp.eq.s32.totalorder %s27, 0
      %p101 = por %p99, %p100
      %s103 = sadd.s32 %s102, 1
      %p106 = scmp.eq.s32.totalorder %s21, 1
      %p107 = scmp.ne.s32.totalorder %s102, %s104
      %p108 = scmp.eq.s32.totalorder %s21, 0
      %p109 = por %p107, %p108
      %p110 = scmp.ne.s32.totalorder %s102, %s104
      %p111 = scmp.eq.s32.totalorder %s26, 1
      %p112 = por %p110, %p111
      %p113 = scmp.ne.s32.totalorder %s104, %s105
      %p114 = scmp.eq.s32.totalorder %s26, 0
      %p115 = por %p113, %p114
      %p116 = scmp.ne.s32.totalorder %s104, %s105
      %p117 = scmp.eq.s32.totalorder %s27, 1
      %p118 = por %p116, %p117
      %p120 = scmp.ne.s32.totalorder %s105, %s119
      %p121 = scmp.eq.s32.totalorder %s27, 0
      %p122 = por %p120, %p121
      %s124 = sadd.s32 %s123, 1
      %p127 = scmp.eq.s32.totalorder %s21, 1
      %p128 = scmp.ne.s32.totalorder %s123, %s125
      %p129 = scmp.eq.s32.totalorder %s21, 0
      %p130 = por %p128, %p129
      %p131 = scmp.ne.s32.totalorder %s123, %s125
      %p132 = scmp.eq.s32.totalorder %s26, 1
      %p133 = por %p131, %p132
      %p134 = scmp.ne.s32.totalorder %s125, %s126
      %p135 = scmp.eq.s32.totalorder %s26, 0
      %p136 = por %p134, %p135
      %p137 = scmp.ne.s32.totalorder %s125, %s126
      %p138 = scmp.eq.s32.totalorder %s27, 1
      %p139 = por %p137, %p138
      %p141 = scmp.ne.s32.totalorder %s126, %s140
      %p142 = scmp.eq.s32.totalorder %s27, 0
      %p143 = por %p141, %p142
      %s145 = sadd.s32 %s144, 1
      %p148 = scmp.eq.s32.totalorder %s21, 1
      %p149 = scmp.ne.s32.totalorder %s144, %s146
      %p150 = scmp.eq.s32.totalorder %s21, 0
      %p151 = por %p149, %p150
      %p152 = scmp.ne.s32.totalorder %s144, %s146
      %p153 = scmp.eq.s32.totalorder %s26, 1
      %p154 = por %p152, %p153
      %p155 = scmp.ne.s32.totalorder %s146, %s147
      %p156 = scmp.eq.s32.totalorder %s26, 0
      %p157 = por %p155, %p156
      %p158 = scmp.ne.s32.totalorder %s146, %s147
      %p159 = scmp.eq.s32.totalorder %s27, 1
      %p160 = por %p158, %p159
      %p162 = scmp.ne.s32.totalorder %s147, %s161
      %p163 = scmp.eq.s32.totalorder %s27, 0
      %p164 = por %p162, %p163
      %s166 = sadd.s32 %s165, 1
      %p169 = scmp.eq.s32.totalorder %s21, 1
      %p170 = scmp.ne.s32.totalorder %s165, %s167
      %p171 = scmp.eq.s32.totalorder %s21, 0
      %p172 = por %p170, %p171
      %p173 = scmp.ne.s32.totalorder %s165, %s167
      %p174 = scmp.eq.s32.totalorder %s26, 1
      %p175 = por %p173, %p174
      %p176 = scmp.ne.s32.totalorder %s167, %s168
      %p177 = scmp.eq.s32.totalorder %s26, 0
      %p178 = por %p176, %p177
      %p179 = scmp.ne.s32.totalorder %s167, %s168
      %p180 = scmp.eq.s32.totalorder %s27, 1
      %p181 = por %p179, %p180
      %p183 = scmp.ne.s32.totalorder %s168, %s182
      %p184 = scmp.eq.s32.totalorder %s27, 0
      %p185 = por %p183, %p184
      %s187 = sadd.s32 %s186, 1
      %p190 = scmp.eq.s32.totalorder %s21, 1
      %p191 = scmp.ne.s32.totalorder %s186, %s188
      %p192 = scmp.eq.s32.totalorder %s21, 0
      %p193 = por %p191, %p192
      %p194 = scmp.ne.s32.totalorder %s186, %s188
      %p195 = scmp.eq.s32.totalorder %s26, 1
      %p196 = por %p194, %p195
      %p197 = scmp.ne.s32.totalorder %s188, %s189
      %p198 = scmp.eq.s32.totalorder %s26, 0
      %p199 = por %p197, %p198
      %p200 = scmp.ne.s32.totalorder %s188, %s189
      %p201 = scmp.eq.s32.totalorder %s27, 1
      %p202 = por %p200, %p201
      %p204 = scmp.ne.s32.totalorder %s189, %s203
      %p205 = scmp.eq.s32.totalorder %s27, 0
      %p206 = por %p204, %p205
      %s208 = sadd.s32 %s207, 1
      %p211 = scmp.eq.s32.totalorder %s21, 1
      %p212 = scmp.ne.s32.totalorder %s207, %s209
      %p213 = scmp.eq.s32.totalorder %s21, 0
      %p214 = por %p212, %p213
      %p215 = scmp.ne.s32.totalorder %s207, %s209
      %p216 = scmp.eq.s32.totalorder %s26, 1
      %p217 = por %p215, %p216
      %p218 = scmp.ne.s32.totalorder %s209, %s210
      %p219 = scmp.eq.s32.totalorder %s26, 0
      %p220 = por %p218, %p219
      %p221 = scmp.ne.s32.totalorder %s209, %s210
      %p222 = scmp.eq.s32.totalorder %s27, 1
      %p223 = por %p221, %p222
      %p225 = scmp.ne.s32.totalorder %s210, %s224
      %p226 = scmp.eq.s32.totalorder %s27, 0
      %p227 = por %p225, %p226
      %s229 = sadd.s32 %s228, 1
      %p232 = scmp.eq.s32.totalorder %s21, 1
      %p233 = scmp.ne.s32.totalorder %s228, %s230
      %p234 = scmp.eq.s32.totalorder %s21, 0
      %p235 = por %p233, %p234
      %p236 = scmp.ne.s32.totalorder %s228, %s230
      %p237 = scmp.eq.s32.totalorder %s26, 1
      %p238 = por %p236, %p237
      %p239 = scmp.ne.s32.totalorder %s230, %s231
      %p240 = scmp.eq.s32.totalorder %s26, 0
      %p241 = por %p239, %p240
      %p242 = scmp.ne.s32.totalorder %s230, %s231
      %p243 = scmp.eq.s32.totalorder %s27, 1
      %p244 = por %p242, %p243
      %p246 = scmp.ne.s32.totalorder %s231, %s245
      %p247 = scmp.eq.s32.totalorder %s27, 0
      %p248 = por %p246, %p247
      %s250 = sadd.s32 %s249, 1
      %p253 = scmp.eq.s32.totalorder %s21, 1
      %p254 = scmp.ne.s32.totalorder %s249, %s251
      %p255 = scmp.eq.s32.totalorder %s21, 0
      %p256 = por %p254, %p255
      %p257 = scmp.ne.s32.totalorder %s249, %s251
      %p258 = scmp.eq.s32.totalorder %s26, 1
      %p259 = por %p257, %p258
      %p260 = scmp.ne.s32.totalorder %s251, %s252
      %p261 = scmp.eq.s32.totalorder %s26, 0
      %p262 = por %p260, %p261
      %p263 = scmp.ne.s32.totalorder %s251, %s252
      %p264 = scmp.eq.s32.totalorder %s27, 1
      %p265 = por %p263, %p264
      %p267 = scmp.ne.s32.totalorder %s252, %s266
      %p268 = scmp.eq.s32.totalorder %s27, 0
      %p269 = por %p267, %p268
      %s270 = ssub.s32 %s21, %s28
      %p271 = scmp.eq.s32.totalorder %s270, 0
      %s273 = sadd.s32 %s272, 1
      %s274 = scalar_select %p271, %s272, %s273
      %p277 = pneg %p271
      %p278 = scmp.eq.s32.totalorder %s21, 1
      %p279 = por %p277, %p278
      %p280 = scmp.ne.s32.totalorder %s272, %s275
      %p281 = scmp.eq.s32.totalorder %s21, 0
      %p282 = por %p280, %p281
      %p283 = scmp.ne.s32.totalorder %s272, %s275
      %p284 = scmp.eq.s32.totalorder %s26, 1
      %p285 = por %p283, %p284
      %p286 = scmp.ne.s32.totalorder %s275, %s276
      %p287 = scmp.eq.s32.totalorder %s26, 0
      %p288 = por %p286, %p287
      %p289 = scmp.ne.s32.totalorder %s275, %s276
      %p290 = scmp.eq.s32.totalorder %s27, 1
      %p291 = por %p289, %p290
      %p293 = scmp.ne.s32.totalorder %s276, %s292
      %p294 = scmp.eq.s32.totalorder %s27, 0
      %p295 = por %p293, %p294
      %p296 = scmp.le.s32.totalorder 1, %s21
      %p297 = scmp.lt.s32.totalorder %s21, 3
      %p298 = pnand %p296, %p297
      %p299 = pneg %p298
      // Predicated region
      $region9: #{decoder_block.1} parent=5 // pred_check
        _
      $region10: #{decoder_block.1} parent=5 // pred_check_branch
        %301 = sbr.rel (%p298) target = $region12
      $region11: #{decoder_block.1} parent=5 // pred_region
        %s302 = ssub.s32 %s21, 1
        // Predicated region
        $region13: #{decoder_block.1} parent=11 // pred_check
          %p303 = pneg %p42
        $region14: #{decoder_block.1} parent=11 // pred_check_branch
          %305 = sbr.rel (%p303) target = $region16
        $region15: #{decoder_block.1} parent=11 // pred_region
          %s307 = ssub.s32 16, 16
          %308 = vsyncadd [#allocation5], %s307
          %s310 = sshll.u32 %s0, 4
          %s311 = int_to_ptr.vmem [resolvable:$true] %s310
          %313 = dma.vmem_to_smem %s311, 16, [#allocation3], [#allocation5]
        $region16: #{decoder_block.1} parent=11 // pred_fallthru
          _
        // Predicated region
        $region17: #{decoder_block.1} parent=11 // pred_check
          %p314 = pneg %p115
        $region18: #{decoder_block.1} parent=11 // pred_check_branch
          %316 = sbr.rel (%p314) target = $region20
        $region19: #{decoder_block.1} parent=11 // pred_region
          _
        $region20: #{decoder_block.1} parent=11 // pred_fallthru
          _
        // Predicated region
        $region21: #{decoder_block.1} parent=11 // pred_check
          %p317 = pneg %p136
        $region22: #{decoder_block.1} parent=11 // pred_check_branch
          %319 = sbr.rel (%p317) target = $region24
        $region23: #{decoder_block.1} parent=11 // pred_region
          _
        $region24: #{decoder_block.1} parent=11 // pred_fallthru
          _
        // Predicated region
        $region25: #{decoder_block.1} parent=11 // pred_check
          %p320 = pneg %p157
        $region26: #{decoder_block.1} parent=11 // pred_check_branch
          %322 = sbr.rel (%p320) target = $region28
        $region27: #{decoder_block.1} parent=11 // pred_region
          _
        $region28: #{decoder_block.1} parent=11 // pred_fallthru
          _
        // Predicated region
        $region29: #{decoder_block.1} parent=11 // pred_check
          %p323 = pneg %p178
        $region30: #{decoder_block.1} parent=11 // pred_check_branch
          %325 = sbr.rel (%p323) target = $region32
        $region31: #{decoder_block.1} parent=11 // pred_region
          _
        $region32: #{decoder_block.1} parent=11 // pred_fallthru
          _
        // Predicated region
        $region33: #{decoder_block.1} parent=11 // pred_check
          %p326 = pneg %p199
        $region34: #{decoder_block.1} parent=11 // pred_check_branch
          %328 = sbr.rel (%p326) target = $region36
        $region35: #{decoder_block.1} parent=11 // pred_region
          _
        $region36: #{decoder_block.1} parent=11 // pred_fallthru
          _
        // Predicated region
        $region37: #{decoder_block.1} parent=11 // pred_check
          %p329 = pneg %p220
        $region38: #{decoder_block.1} parent=11 // pred_check_branch
          %331 = sbr.rel (%p329) target = $region40
        $region39: #{decoder_block.1} parent=11 // pred_region
          _
        $region40: #{decoder_block.1} parent=11 // pred_fallthru
          _
        // Predicated region
        $region41: #{decoder_block.1} parent=11 // pred_check
          %p332 = pneg %p241
        $region42: #{decoder_block.1} parent=11 // pred_check_branch
          %334 = sbr.rel (%p332) target = $region44
        $region43: #{decoder_block.1} parent=11 // pred_region
          _
        $region44: #{decoder_block.1} parent=11 // pred_fallthru
          _
        // Predicated region
        $region45: #{decoder_block.1} parent=11 // pred_check
          %p335 = pneg %p262
        $region46: #{decoder_block.1} parent=11 // pred_check_branch
          %337 = sbr.rel (%p335) target = $region48
        $region47: #{decoder_block.1} parent=11 // pred_region
          _
        $region48: #{decoder_block.1} parent=11 // pred_fallthru
          _
      $region12: #{decoder_block.1} parent=5 // pred_fallthru
        _
      %p338 = scmp.lt.s32.totalorder %s21, 2
      // Predicated region
      $region49: #{decoder_block.1} parent=5 // pred_check
        %p339 = pneg %p338
      $region50: #{decoder_block.1} parent=5 // pred_check_branch
        %341 = sbr.rel (%p339) target = $region52
      $region51: #{decoder_block.1} parent=5 // pred_region
        // Predicated region
        $region53: #{decoder_block.1} parent=51 // pred_check
          %p342 = pneg %p62
        $region54: #{decoder_block.1} parent=51 // pred_check_branch
          %344 = sbr.rel (%p342) target = $region56
        $region55: #{decoder_block.1} parent=51 // pred_region
          %p345 = scmp.lt.s32.totalorder %s21, 1
          %s346 = scalar_select %p345, %s21, 1
          %s347 = smul.addr %s346, 8
          %s348 = scalar_lea.vmem %s1, %s347
        $region56: #{decoder_block.1} parent=51 // pred_fallthru
          _
        // Predicated region
        $region57: #{decoder_block.1} parent=51 // pred_check
          %p349 = pneg %p88
        $region58: #{decoder_block.1} parent=51 // pred_check_branch
          %351 = sbr.rel (%p349) target = $region60
        $region59: #{decoder_block.1} parent=51 // pred_region
          %p352 = scmp.lt.s32.totalorder %s21, 1
          %s353 = scalar_select %p352, %s21, 1
          %s354 = smul.addr %s353, 8
          %s355 = scalar_lea.vmem %s2, %s354
        $region60: #{decoder_block.1} parent=51 // pred_fallthru
          _
      $region52: #{decoder_block.1} parent=5 // pred_fallthru
        _
      %p356 = scmp.le.s32.totalorder 1, %s21
      %p357 = scmp.lt.s32.totalorder %s21, 3
      %p358 = pnand %p356, %p357
      %p359 = pneg %p358
      // Predicated region
      $region61: #{decoder_block.1} parent=5 // pred_check
        _
      $region62: #{decoder_block.1} parent=5 // pred_check_branch
        %361 = sbr.rel (%p358) target = $region64
      $region63: #{decoder_block.1} parent=5 // pred_region
        %s362 = ssub.s32 %s21, 1
        // Predicated region
        $region65: #{decoder_block.1} parent=63 // pred_check
          %p363 = pneg %p42
        $region66: #{decoder_block.1} parent=63 // pred_check_branch
          %365 = sbr.rel (%p363) target = $region68
        $region67: #{decoder_block.1} parent=63 // pred_region
          %366 = dma.done [#allocation5], 16
        $region68: #{decoder_block.1} parent=63 // pred_fallthru
          _
        %367 = sfence
        %p368 = pneg %p42
        %p369 = pneg %p39
        %p370 = scmp.lt.s32.totalorder %s26, 1
        %s371 = scalar_select %p370, %s26, 1
        %s372 = smul.addr %s371, 8
        %s373 = scalar_lea.vmem %s1, %s372
        %p374 = pneg %p68
        %p375 = pneg %p65
        %p376 = scmp.lt.s32.totalorder %s26, 1
        %s377 = scalar_select %p376, %s26, 1
        %s378 = smul.addr %s377, 8
        %s379 = scalar_lea.vmem %s2, %s378
        %p380 = pneg %p94
        %p381 = pneg %p91
        %p382 = pneg %p115
        %p383 = pneg %p112
        %p384 = pneg %p136
        %p385 = pneg %p133
        %p386 = pneg %p157
        %p387 = pneg %p154
        %p388 = pneg %p178
        %p389 = pneg %p175
        %p390 = pneg %p199
        %p391 = pneg %p196
        %p392 = pneg %p220
        %p393 = pneg %p217
        %p394 = pneg %p241
        %p395 = pneg %p238
        %p396 = pneg %p262
        %p397 = pneg %p259
        %p398 = pneg %p288
        %p399 = pneg %p285
        %s400 = sand.u32 %s275, 1
        %s401 = scalar_lea.sflag [#allocation4], %s400
        %s402 = sand.u32 %s275, 1
        %s403 = smul.addr %s402, 8
        %s404 = scalar_lea.vmem [#allocation6], %s403
        %p405 = scmp.lt.s32.totalorder %s26, 1
        %s406 = scalar_select %p405, %s26, 1
        %s407 = smul.addr %s406, 8
        %s408 = scalar_lea.vmem %s1, %s407
        %p409 = scmp.lt.s32.totalorder %s26, 1
        %s410 = scalar_select %p409, %s26, 1
        %s411 = smul.addr %s410, 8
        %s412 = scalar_lea.vmem %s2, %s411
        %v413 = vld [vmem:[%s408] sm:$0xff]
        %v414 = vld [vmem:[%s412] sm:$0xff]
        %s415 = sld [smem:[#allocation3]]
        %s416 = sld [smem:[#allocation3 + $0x1]]
        %vm417 = vcmask 261120
        %v418 = vsel %vm417, %v413, 0.0
        %419 = vadd.xlane.f32.xlu0 %v418
        %v420 = vpop.xlane.xlu0 %419
        %v421 = vrcp.pop 32.0
        %v422 = vmul.f32 %v420, %v421
        %v423 = vsub.f32 %v413, %v422
        %v424 = vmul.f32 %v423, %v423
        %v425 = vsel %vm417, %v424, 0.0
        %426 = vadd.xlane.f32.xlu0 %v425
        %v427 = vpop.xlane.xlu0 %426
        %v428 = vrcp.pop 31.0
        %v429 = vmul.f32 %v427, %v428
        %v430 = vrsqrt.pop %v429
        %v431 = vmul.f32 %v429, %v430
        %vm432 = vcmp.eq.f32.partialorder %v429, inf
        %v433 = vsel %vm432, %v429, %v431
        %vm434 = vcmp.eq.f32.partialorder %v429, 0.0
        %v435 = vand.u32 %v429, 2147483648
        %v436 = vsel %vm434, %v435, %v433
        %v437 = vadd.f32 %v436, 1e-06
        %v438 = vrcp.pop %v437
        %v439 = vmul.f32 %v423, %v438
        %v440 = vstv %s415
        %v441 = vmul.f32 %v440, %v439
        %v442 = vstv %s416
        %v443 = vadd.f32 %v441, %v442
        %v444 = vld [vmem:[%s3] sm:$0xff]
        %v445 = vld [vmem:[%s3 + $0x8] sm:$0xff]
        %v446 = vld [vmem:[%s3 + $0x10] sm:$0xff]
        %v447 = vld [vmem:[%s3 + $0x18] sm:$0xff]
        %v448 = vld [vmem:[%s4] sm:$0x1]
        %v449 = vlaneseq
        %v450 = vshrl.u32 %v449, 7
        %v451 = vsub.s32 0, %v450
        %v452 = vrot.slane %v448, %v451
        %v454 = vsel %vm417, %v443, 0
        %456 = vmatprep.subr.mxu0 0.0
        %457 = vmatpush1.msra.mxu0 %v444
        %458 = vmatprep.subr.mxu0 0.0
        %459 = vmatpush1.msra.mxu0 %v445
        %460 = vmatprep.subr.mxu0 0.0
        %461 = vmatpush1.msra.mxu0 %v446
        %462 = vmatprep.subr.mxu0 0.0
        %463 = vmatpush1.msra.mxu0 %v447
        %464 = vmatprep.subr.mxu0 0.0
        %465 = vmatpush1.msra.mxu0 0.0
        %466 = vmatprep.subr.mxu0 0.0
        %467 = vmatpush1.msra.mxu0 0.0
        %468 = vmatprep.subr.mxu0 0.0
        %469 = vmatpush1.msra.mxu0 0.0
        %470 = vmatprep.subr.mxu0 0.0
        %471 = vmatpush1.msra.mxu0 0.0
        %472 = vmatprep.subr.mxu0 0.0
        %473 = vmatpush1.msra.mxu0 0.0
        %474 = vmatprep.subr.mxu0 0.0
        %475 = vmatpush1.msra.mxu0 0.0
        %476 = vmatprep.subr.mxu0 0.0
        %477 = vmatpush1.msra.mxu0 0.0
        %478 = vmatprep.subr.mxu0 0.0
        %479 = vmatpush1.msra.mxu0 0.0
        %480 = vmatprep.subr.mxu0 0.0
        %481 = vmatpush1.msra.mxu0 0.0
        %482 = vmatprep.subr.mxu0 0.0
        %483 = vmatpush1.msra.mxu0 0.0
        %484 = vmatprep.subr.mxu0 0.0
        %485 = vmatpush1.msra.mxu0 0.0
        %486 = vmatprep.subr.mxu0 0.0
        %487 = vmatpush1.msra.mxu0 0.0
        %488 = vmatprep.subr.mxu0 0.0
        %489 = vmatpush1.msra.mxu0 0.0
        %490 = vmatprep.subr.mxu0 0.0
        %491 = vmatpush1.msra.mxu0 0.0
        %492 = vmatprep.subr.mxu0 0.0
        %493 = vmatpush1.msra.mxu0 0.0
        %494 = vmatprep.subr.mxu0 0.0
        %495 = vmatpush1.msra.mxu0 0.0
        %496 = vmatprep.subr.mxu0 0.0
        %497 = vmatpush1.msra.mxu0 0.0
        %498 = vmatprep.subr.mxu0 0.0
        %499 = vmatpush1.msra.mxu0 0.0
        %500 = vmatprep.subr.mxu0 0.0
        %501 = vmatpush1.msra.mxu0 0.0
        %502 = vmatprep.subr.mxu0 0.0
        %503 = vmatpush1.msra.mxu0 0.0
        %504 = vmatprep.subr.mxu0 0.0
        %505 = vmatpush1.msra.mxu0 0.0
        %506 = vmatprep.subr.mxu0 0.0
        %507 = vmatpush1.msra.mxu0 0.0
        %508 = vmatprep.subr.mxu0 0.0
        %509 = vmatpush1.msra.mxu0 0.0
        %510 = vmatprep.subr.mxu0 0.0
        %511 = vmatpush1.msra.mxu0 0.0
        %512 = vmatprep.subr.mxu0 0.0
        %513 = vmatpush1.msra.mxu0 0.0
        %514 = vmatprep.subr.mxu0 0.0
        %515 = vmatpush1.msra.mxu0 0.0
        %516 = vmatprep.subr.mxu0 0.0
        %517 = vmatpush1.msra.mxu0 0.0
        %518 = vmatprep.subr.mxu0 0.0
        %519 = vmatpush1.msra.mxu0 0.0
        %520 = vmatprep.mubr.f32.mxu0 0.0
        %521 = vmatmul.mubr.f32.gmra.mrb[0].mxu0 %v454
        %v522 = vpop.f32.mrb[0].mxu0
        %v523 = vadd.f32 %v452, %v522
        %v524 = vpop.f32.mrb[0].mxu0
        %525 = vdwg.mxu0
        %s526 = scalar_lea.vmem %s3, 32
        %v527 = vld [vmem:[%s526] sm:$0xff]
        %v528 = vld [vmem:[%s526 + $0x8] sm:$0xff]
        %v529 = vld [vmem:[%s526 + $0x10] sm:$0xff]
        %v530 = vld [vmem:[%s526 + $0x18] sm:$0xff]
        %v531 = vld [vmem:[%s4 + $0x1] sm:$0x1]
        %v532 = vlaneseq
        %v533 = vshrl.u32 %v532, 7
        %v534 = vsub.s32 0, %v533
        %v535 = vrot.slane %v531, %v534
        %536 = vmatprep.subr.mxu0 0.0
        %537 = vmatpush1.msra.mxu0 %v527
        %538 = vmatprep.subr.mxu0 0.0
        %539 = vmatpush1.msra.mxu0 %v528
        %540 = vmatprep.subr.mxu0 0.0
        %541 = vmatpush1.msra.mxu0 %v529
        %542 = vmatprep.subr.mxu0 0.0
        %543 = vmatpush1.msra.mxu0 %v530
        %544 = vmatprep.subr.mxu0 0.0
        %545 = vmatpush1.msra.mxu0 0.0
        %546 = vmatprep.subr.mxu0 0.0
        %547 = vmatpush1.msra.mxu0 0.0
        %548 = vmatprep.subr.mxu0 0.0
        %549 = vmatpush1.msra.mxu0 0.0
        %550 = vmatprep.subr.mxu0 0.0
        %551 = vmatpush1.msra.mxu0 0.0
        %552 = vmatprep.subr.mxu0 0.0
        %553 = vmatpush1.msra.mxu0 0.0
        %554 = vmatprep.subr.mxu0 0.0
        %555 = vmatpush1.msra.mxu0 0.0
        %556 = vmatprep.subr.mxu0 0.0
        %557 = vmatpush1.msra.mxu0 0.0
        %558 = vmatprep.subr.mxu0 0.0
        %559 = vmatpush1.msra.mxu0 0.0
        %560 = vmatprep.subr.mxu0 0.0
        %561 = vmatpush1.msra.mxu0 0.0
        %562 = vmatprep.subr.mxu0 0.0
        %563 = vmatpush1.msra.mxu0 0.0
        %564 = vmatprep.subr.mxu0 0.0
        %565 = vmatpush1.msra.mxu0 0.0
        %566 = vmatprep.subr.mxu0 0.0
        %567 = vmatpush1.msra.mxu0 0.0
        %568 = vmatprep.subr.mxu0 0.0
        %569 = vmatpush1.msra.mxu0 0.0
        %570 = vmatprep.subr.mxu0 0.0
        %571 = vmatpush1.msra.mxu0 0.0
        %572 = vmatprep.subr.mxu0 0.0
        %573 = vmatpush1.msra.mxu0 0.0
        %574 = vmatprep.subr.mxu0 0.0
        %575 = vmatpush1.msra.mxu0 0.0
        %576 = vmatprep.subr.mxu0 0.0
        %577 = vmatpush1.msra.mxu0 0.0
        %578 = vmatprep.subr.mxu0 0.0
        %579 = vmatpush1.msra.mxu0 0.0
        %580 = vmatprep.subr.mxu0 0.0
        %581 = vmatpush1.msra.mxu0 0.0
        %582 = vmatprep.subr.mxu0 0.0
        %583 = vmatpush1.msra.mxu0 0.0
        %584 = vmatprep.subr.mxu0 0.0
        %585 = vmatpush1.msra.mxu0 0.0
        %586 = vmatprep.subr.mxu0 0.0
        %587 = vmatpush1.msra.mxu0 0.0
        %588 = vmatprep.subr.mxu0 0.0
        %589 = vmatpush1.msra.mxu0 0.0
        %590 = vmatprep.subr.mxu0 0.0
        %591 = vmatpush1.msra.mxu0 0.0
        %592 = vmatprep.subr.mxu0 0.0
        %593 = vmatpush1.msra.mxu0 0.0
        %594 = vmatprep.subr.mxu0 0.0
        %595 = vmatpush1.msra.mxu0 0.0
        %596 = vmatprep.subr.mxu0 0.0
        %597 = vmatpush1.msra.mxu0 0.0
        %598 = vmatprep.subr.mxu0 0.0
        %599 = vmatpush1.msra.mxu0 0.0
        %600 = vmatprep.mubr.f32.mxu0 0.0
        %601 = vmatmul.mubr.f32.gmra.mrb[0].mxu0 %v454
        %v602 = vpop.f32.mrb[0].mxu0
        %v603 = vadd.f32 %v535, %v602
        %v604 = vpop.f32.mrb[0].mxu0
        %605 = vdwg.mxu0
        %s606 = scalar_lea.vmem %s3, 64
        %v607 = vld [vmem:[%s606] sm:$0xff]
        %v608 = vld [vmem:[%s606 + $0x8] sm:$0xff]
        %v609 = vld [vmem:[%s606 + $0x10] sm:$0xff]
        %v610 = vld [vmem:[%s606 + $0x18] sm:$0xff]
        %v611 = vld [vmem:[%s4 + $0x2] sm:$0x1]
        %v612 = vlaneseq
        %v613 = vshrl.u32 %v612, 7
        %v614 = vsub.s32 0, %v613
        %v615 = vrot.slane %v611, %v614
        %616 = vmatprep.subr.mxu0 0.0
        %617 = vmatpush1.msra.mxu0 %v607
        %618 = vmatprep.subr.mxu0 0.0
        %619 = vmatpush1.msra.mxu0 %v608
        %620 = vmatprep.subr.mxu0 0.0
        %621 = vmatpush1.msra.mxu0 %v609
        %622 = vmatprep.subr.mxu0 0.0
        %623 = vmatpush1.msra.mxu0 %v610
        %624 = vmatprep.subr.mxu0 0.0
        %625 = vmatpush1.msra.mxu0 0.0
        %626 = vmatprep.subr.mxu0 0.0
        %627 = vmatpush1.msra.mxu0 0.0
        %628 = vmatprep.subr.mxu0 0.0
        %629 = vmatpush1.msra.mxu0 0.0
        %630 = vmatprep.subr.mxu0 0.0
        %631 = vmatpush1.msra.mxu0 0.0
        %632 = vmatprep.subr.mxu0 0.0
        %633 = vmatpush1.msra.mxu0 0.0
        %634 = vmatprep.subr.mxu0 0.0
        %635 = vmatpush1.msra.mxu0 0.0
        %636 = vmatprep.subr.mxu0 0.0
        %637 = vmatpush1.msra.mxu0 0.0
        %638 = vmatprep.subr.mxu0 0.0
        %639 = vmatpush1.msra.mxu0 0.0
        %640 = vmatprep.subr.mxu0 0.0
        %641 = vmatpush1.msra.mxu0 0.0
        %642 = vmatprep.subr.mxu0 0.0
        %643 = vmatpush1.msra.mxu0 0.0
        %644 = vmatprep.subr.mxu0 0.0
        %645 = vmatpush1.msra.mxu0 0.0
        %646 = vmatprep.subr.mxu0 0.0
        %647 = vmatpush1.msra.mxu0 0.0
        %648 = vmatprep.subr.mxu0 0.0
        %649 = vmatpush1.msra.mxu0 0.0
        %650 = vmatprep.subr.mxu0 0.0
        %651 = vmatpush1.msra.mxu0 0.0
        %652 = vmatprep.subr.mxu0 0.0
        %653 = vmatpush1.msra.mxu0 0.0
        %654 = vmatprep.subr.mxu0 0.0
        %655 = vmatpush1.msra.mxu0 0.0
        %656 = vmatprep.subr.mxu0 0.0
        %657 = vmatpush1.msra.mxu0 0.0
        %658 = vmatprep.subr.mxu0 0.0
        %659 = vmatpush1.msra.mxu0 0.0
        %660 = vmatprep.subr.mxu0 0.0
        %661 = vmatpush1.msra.mxu0 0.0
        %662 = vmatprep.subr.mxu0 0.0
        %663 = vmatpush1.msra.mxu0 0.0
        %664 = vmatprep.subr.mxu0 0.0
        %665 = vmatpush1.msra.mxu0 0.0
        %666 = vmatprep.subr.mxu0 0.0
        %667 = vmatpush1.msra.mxu0 0.0
        %668 = vmatprep.subr.mxu0 0.0
        %669 = vmatpush1.msra.mxu0 0.0
        %670 = vmatprep.subr.mxu0 0.0
        %671 = vmatpush1.msra.mxu0 0.0
        %672 = vmatprep.subr.mxu0 0.0
        %673 = vmatpush1.msra.mxu0 0.0
        %674 = vmatprep.subr.mxu0 0.0
        %675 = vmatpush1.msra.mxu0 0.0
        %676 = vmatprep.subr.mxu0 0.0
        %677 = vmatpush1.msra.mxu0 0.0
        %678 = vmatprep.subr.mxu0 0.0
        %679 = vmatpush1.msra.mxu0 0.0
        %680 = vmatprep.mubr.f32.mxu0 0.0
        %681 = vmatmul.mubr.f32.gmra.mrb[0].mxu0 %v454
        %v682 = vpop.f32.mrb[0].mxu0
        %v683 = vadd.f32 %v615, %v682
        %v684 = vpop.f32.mrb[0].mxu0
        %685 = vdwg.mxu0
        %vm686 = vcmask 64512
        %v688 = vsel %vm686, %v603, 0
        %v691 = vsel %vm686, %v523, 0
        %693 = vmatprep.subr.mxu0 0.0
        %694 = vmatpush1.xpose.msra.mxu0 %v691
        %695 = vmatprep.subr.mxu0 0.0
        %696 = vmatpush1.xpose.msra.mxu0 0.0
        %697 = vmatprep.subr.mxu0 0.0
        %698 = vmatpush1.xpose.msra.mxu0 0.0
        %699 = vmatprep.subr.mxu0 0.0
        %700 = vmatpush1.xpose.msra.mxu0 0.0
        %701 = vmatprep.subr.mxu0 0.0
        %702 = vmatpush1.xpose.msra.mxu0 0.0
        %703 = vmatprep.subr.mxu0 0.0
        %704 = vmatpush1.xpose.msra.mxu0 0.0
        %705 = vmatprep.subr.mxu0 0.0
        %706 = vmatpush1.xpose.msra.mxu0 0.0
        %707 = vmatprep.subr.mxu0 0.0
        %708 = vmatpush1.xpose.msra.mxu0 0.0
        %709 = vmatprep.subr.mxu0 0.0
        %710 = vmatpush1.xpose.msra.mxu0 0.0
        %711 = vmatprep.subr.mxu0 0.0
        %712 = vmatpush1.xpose.msra.mxu0 0.0
        %713 = vmatprep.subr.mxu0 0.0
        %714 = vmatpush1.xpose.msra.mxu0 0.0
        %715 = vmatprep.subr.mxu0 0.0
        %716 = vmatpush1.xpose.msra.mxu0 0.0
        %717 = vmatprep.subr.mxu0 0.0
        %718 = vmatpush1.xpose.msra.mxu0 0.0
        %719 = vmatprep.subr.mxu0 0.0
        %720 = vmatpush1.xpose.msra.mxu0 0.0
        %721 = vmatprep.subr.mxu0 0.0
        %722 = vmatpush1.xpose.msra.mxu0 0.0
        %723 = vmatprep.subr.mxu0 0.0
        %724 = vmatpush1.xpose.msra.mxu0 0.0
        %725 = vmatprep.subr.mxu0 0.0
        %726 = vmatpush1.xpose.msra.mxu0 0.0
        %727 = vmatprep.subr.mxu0 0.0
        %728 = vmatpush1.xpose.msra.mxu0 0.0
        %729 = vmatprep.subr.mxu0 0.0
        %730 = vmatpush1.xpose.msra.mxu0 0.0
        %731 = vmatprep.subr.mxu0 0.0
        %732 = vmatpush1.xpose.msra.mxu0 0.0
        %733 = vmatprep.subr.mxu0 0.0
        %734 = vmatpush1.xpose.msra.mxu0 0.0
        %735 = vmatprep.subr.mxu0 0.0
        %736 = vmatpush1.xpose.msra.mxu0 0.0
        %737 = vmatprep.subr.mxu0 0.0
        %738 = vmatpush1.xpose.msra.mxu0 0.0
        %739 = vmatprep.subr.mxu0 0.0
        %740 = vmatpush1.xpose.msra.mxu0 0.0
        %741 = vmatprep.subr.mxu0 0.0
        %742 = vmatpush1.xpose.msra.mxu0 0.0
        %743 = vmatprep.subr.mxu0 0.0
        %744 = vmatpush1.xpose.msra.mxu0 0.0
        %745 = vmatprep.subr.mxu0 0.0
        %746 = vmatpush1.xpose.msra.mxu0 0.0
        %747 = vmatprep.subr.mxu0 0.0
        %748 = vmatpush1.xpose.msra.mxu0 0.0
        %749 = vmatprep.subr.mxu0 0.0
        %750 = vmatpush1.xpose.msra.mxu0 0.0
        %751 = vmatprep.subr.mxu0 0.0
        %752 = vmatpush1.xpose.msra.mxu0 0.0
        %753 = vmatprep.subr.mxu0 0.0
        %754 = vmatpush1.xpose.msra.mxu0 0.0
        %755 = vmatprep.subr.mxu0 0.0
        %756 = vmatpush1.xpose.msra.mxu0 0.0
        %757 = vmatprep.mubr.f32.mxu0 0.0
        %758 = vmatmul.mubr.f32.gmra.mrb[0].mxu0 %v688
        %v759 = vpop.f32.mrb[0].mxu0
        %v760 = vadd.f32 0.0, %v759
        %v761 = vpop.f32.mrb[0].mxu0
        %762 = vdwg.mxu0
        %v763 = vrcp.pop 2.828427
        %v764 = vmul.f32 %v760, %v763
        %v765 = vsel %vm686, %v764, -inf
        %766 = vmax.xlane.f32.xlu0 %v765
        %v767 = vpop.xlane.xlu0 %766
        %v768 = vsub.f32 %v764, %v767
        %v769 = vmul.f32 %v768, 1.442695
        %v770 = vpow.pop %v769
        %v771 = vsel %vm686, %v770, 0.0
        %772 = vadd.xlane.f32.xlu0 %v771
        %v773 = vpop.xlane.xlu0 %772
        %v774 = vrcp.pop %v773
        %v775 = vmul.f32 %v770, %v774
        %v777 = vsel %vm686, %v775, 0
        %779 = vmatprep.subr.mxu0 0.0
        %780 = vmatpush1.msra.mxu0 %v683
        %781 = vmatprep.subr.mxu0 0.0
        %782 = vmatpush1.msra.mxu0 0.0
        %783 = vmatprep.subr.mxu0 0.0
        %784 = vmatpush1.msra.mxu0 0.0
        %785 = vmatprep.subr.mxu0 0.0
        %786 = vmatpush1.msra.mxu0 0.0
        %787 = vmatprep.subr.mxu0 0.0
        %788 = vmatpush1.msra.mxu0 0.0
        %789 = vmatprep.subr.mxu0 0.0
        %790 = vmatpush1.msra.mxu0 0.0
        %791 = vmatprep.subr.mxu0 0.0
        %792 = vmatpush1.msra.mxu0 0.0
        %793 = vmatprep.subr.mxu0 0.0
        %794 = vmatpush1.msra.mxu0 0.0
        %795 = vmatprep.subr.mxu0 0.0
        %796 = vmatpush1.msra.mxu0 0.0
        %797 = vmatprep.subr.mxu0 0.0
        %798 = vmatpush1.msra.mxu0 0.0
        %799 = vmatprep.subr.mxu0 0.0
        %800 = vmatpush1.msra.mxu0 0.0
        %801 = vmatprep.subr.mxu0 0.0
        %802 = vmatpush1.msra.mxu0 0.0
        %803 = vmatprep.subr.mxu0 0.0
        %804 = vmatpush1.msra.mxu0 0.0
        %805 = vmatprep.subr.mxu0 0.0
        %806 = vmatpush1.msra.mxu0 0.0
        %807 = vmatprep.subr.mxu0 0.0
        %808 = vmatpush1.msra.mxu0 0.0
        %809 = vmatprep.subr.mxu0 0.0
        %810 = vmatpush1.msra.mxu0 0.0
        %811 = vmatprep.subr.mxu0 0.0
        %812 = vmatpush1.msra.mxu0 0.0
        %813 = vmatprep.subr.mxu0 0.0
        %814 = vmatpush1.msra.mxu0 0.0
        %815 = vmatprep.subr.mxu0 0.0
        %816 = vmatpush1.msra.mxu0 0.0
        %817 = vmatprep.subr.mxu0 0.0
        %818 = vmatpush1.msra.mxu0 0.0
        %819 = vmatprep.subr.mxu0 0.0
        %820 = vmatpush1.msra.mxu0 0.0
        %821 = vmatprep.subr.mxu0 0.0
        %822 = vmatpush1.msra.mxu0 0.0
        %823 = vmatprep.subr.mxu0 0.0
        %824 = vmatpush1.msra.mxu0 0.0
        %825 = vmatprep.subr.mxu0 0.0
        %826 = vmatpush1.msra.mxu0 0.0
        %827 = vmatprep.subr.mxu0 0.0
        %828 = vmatpush1.msra.mxu0 0.0
        %829 = vmatprep.subr.mxu0 0.0
        %830 = vmatpush1.msra.mxu0 0.0
        %831 = vmatprep.subr.mxu0 0.0
        %832 = vmatpush1.msra.mxu0 0.0
        %833 = vmatprep.subr.mxu0 0.0
        %834 = vmatpush1.msra.mxu0 0.0
        %835 = vmatprep.subr.mxu0 0.0
        %836 = vmatpush1.msra.mxu0 0.0
        %837 = vmatprep.subr.mxu0 0.0
        %838 = vmatpush1.msra.mxu0 0.0
        %839 = vmatprep.subr.mxu0 0.0
        %840 = vmatpush1.msra.mxu0 0.0
        %841 = vmatprep.subr.mxu0 0.0
        %842 = vmatpush1.msra.mxu0 0.0
        %843 = vmatprep.mubr.f32.mxu0 0.0
        %844 = vmatmul.mubr.f32.gmra.mrb[0].mxu0 %v777
        %v845 = vpop.f32.mrb[0].mxu0
        %v846 = vadd.f32 0.0, %v845
        %v847 = vpop.f32.mrb[0].mxu0
        %848 = vdwg.mxu0
        %849 = vst.msk [vmem:[#allocation2] sm:$0xff] %vm686, %v846
        %850 = vrot.lane.b32.xlu0 %v603, 120
        %v851 = vpop.permute.xlu0 %850
        %852 = vrot.lane.b32.xlu0 %v523, 120
        %v853 = vpop.permute.xlu0 %852
        %v854 = vsel %vm686, %v851, 0
        %v856 = vsel %vm686, %v853, 0
        %858 = vmatprep.subr.mxu0 0.0
        %859 = vmatpush1.xpose.msra.mxu0 %v856
        %860 = vmatprep.subr.mxu0 0.0
        %861 = vmatpush1.xpose.msra.mxu0 0.0
        %862 = vmatprep.subr.mxu0 0.0
        %863 = vmatpush1.xpose.msra.mxu0 0.0
        %864 = vmatprep.subr.mxu0 0.0
        %865 = vmatpush1.xpose.msra.mxu0 0.0
        %866 = vmatprep.subr.mxu0 0.0
        %867 = vmatpush1.xpose.msra.mxu0 0.0
        %868 = vmatprep.subr.mxu0 0.0
        %869 = vmatpush1.xpose.msra.mxu0 0.0
        %870 = vmatprep.subr.mxu0 0.0
        %871 = vmatpush1.xpose.msra.mxu0 0.0
        %872 = vmatprep.subr.mxu0 0.0
        %873 = vmatpush1.xpose.msra.mxu0 0.0
        %874 = vmatprep.subr.mxu0 0.0
        %875 = vmatpush1.xpose.msra.mxu0 0.0
        %876 = vmatprep.subr.mxu0 0.0
        %877 = vmatpush1.xpose.msra.mxu0 0.0
        %878 = vmatprep.subr.mxu0 0.0
        %879 = vmatpush1.xpose.msra.mxu0 0.0
        %880 = vmatprep.subr.mxu0 0.0
        %881 = vmatpush1.xpose.msra.mxu0 0.0
        %882 = vmatprep.subr.mxu0 0.0
        %883 = vmatpush1.xpose.msra.mxu0 0.0
        %884 = vmatprep.subr.mxu0 0.0
        %885 = vmatpush1.xpose.msra.mxu0 0.0
        %886 = vmatprep.subr.mxu0 0.0
        %887 = vmatpush1.xpose.msra.mxu0 0.0
        %888 = vmatprep.subr.mxu0 0.0
        %889 = vmatpush1.xpose.msra.mxu0 0.0
        %890 = vmatprep.subr.mxu0 0.0
        %891 = vmatpush1.xpose.msra.mxu0 0.0
        %892 = vmatprep.subr.mxu0 0.0
        %893 = vmatpush1.xpose.msra.mxu0 0.0
        %894 = vmatprep.subr.mxu0 0.0
        %895 = vmatpush1.xpose.msra.mxu0 0.0
        %896 = vmatprep.subr.mxu0 0.0
        %897 = vmatpush1.xpose.msra.mxu0 0.0
        %898 = vmatprep.subr.mxu0 0.0
        %899 = vmatpush1.xpose.msra.mxu0 0.0
        %900 = vmatprep.subr.mxu0 0.0
        %901 = vmatpush1.xpose.msra.mxu0 0.0
        %902 = vmatprep.subr.mxu0 0.0
        %903 = vmatpush1.xpose.msra.mxu0 0.0
        %904 = vmatprep.subr.mxu0 0.0
        %905 = vmatpush1.xpose.msra.mxu0 0.0
        %906 = vmatprep.subr.mxu0 0.0
        %907 = vmatpush1.xpose.msra.mxu0 0.0
        %908 = vmatprep.subr.mxu0 0.0
        %909 = vmatpush1.xpose.msra.mxu0 0.0
        %910 = vmatprep.subr.mxu0 0.0
        %911 = vmatpush1.xpose.msra.mxu0 0.0
        %912 = vmatprep.subr.mxu0 0.0
        %913 = vmatpush1.xpose.msra.mxu0 0.0
        %914 = vmatprep.subr.mxu0 0.0
        %915 = vmatpush1.xpose.msra.mxu0 0.0
        %916 = vmatprep.subr.mxu0 0.0
        %917 = vmatpush1.xpose.msra.mxu0 0.0
        %918 = vmatprep.subr.mxu0 0.0
        %919 = vmatpush1.xpose.msra.mxu0 0.0
        %920 = vmatprep.subr.mxu0 0.0
        %921 = vmatpush1.xpose.msra.mxu0 0.0
        %922 = vmatprep.mubr.f32.mxu0 0.0
        %923 = vmatmul.mubr.f32.gmra.mrb[0].mxu0 %v854
        %v924 = vpop.f32.mrb[0].mxu0
        %v925 = vadd.f32 0.0, %v924
        %v926 = vpop.f32.mrb[0].mxu0
        %927 = vdwg.mxu0
        %v928 = vmul.f32 %v925, %v763
        %v929 = vsel %vm686, %v928, -inf
        %930 = vmax.xlane.f32.xlu0 %v929
        %v931 = vpop.xlane.xlu0 %930
        %v932 = vsub.f32 %v928, %v931
        %v933 = vmul.f32 %v932, 1.442695
        %v934 = vpow.pop %v933
        %v935 = vsel %vm686, %v934, 0.0
        %936 = vadd.xlane.f32.xlu0 %v935
        %v937 = vpop.xlane.xlu0 %936
        %v938 = vrcp.pop %v937
        %v939 = vmul.f32 %v934, %v938
        %941 = vrot.lane.b32.xlu0 %v683, 120
        %v942 = vpop.permute.xlu0 %941
        %v945 = vsel %vm686, %v939, 0
        %947 = vmatprep.subr.mxu0 0.0
        %948 = vmatpush1.msra.mxu0 %v942
        %949 = vmatprep.subr.mxu0 0.0
        %950 = vmatpush1.msra.mxu0 0.0
        %951 = vmatprep.subr.mxu0 0.0
        %952 = vmatpush1.msra.mxu0 0.0
        %953 = vmatprep.subr.mxu0 0.0
        %954 = vmatpush1.msra.mxu0 0.0
        %955 = vmatprep.subr.mxu0 0.0
        %956 = vmatpush1.msra.mxu0 0.0
        %957 = vmatprep.subr.mxu0 0.0
        %958 = vmatpush1.msra.mxu0 0.0
        %959 = vmatprep.subr.mxu0 0.0
        %960 = vmatpush1.msra.mxu0 0.0
        %961 = vmatprep.subr.mxu0 0.0
        %962 = vmatpush1.msra.mxu0 0.0
        %963 = vmatprep.subr.mxu0 0.0
        %964 = vmatpush1.msra.mxu0 0.0
        %965 = vmatprep.subr.mxu0 0.0
        %966 = vmatpush1.msra.mxu0 0.0
        %967 = vmatprep.subr.mxu0 0.0
        %968 = vmatpush1.msra.mxu0 0.0
        %969 = vmatprep.subr.mxu0 0.0
        %970 = vmatpush1.msra.mxu0 0.0
        %971 = vmatprep.subr.mxu0 0.0
        %972 = vmatpush1.msra.mxu0 0.0
        %973 = vmatprep.subr.mxu0 0.0
        %974 = vmatpush1.msra.mxu0 0.0
        %975 = vmatprep.subr.mxu0 0.0
        %976 = vmatpush1.msra.mxu0 0.0
        %977 = vmatprep.subr.mxu0 0.0
        %978 = vmatpush1.msra.mxu0 0.0
        %979 = vmatprep.subr.mxu0 0.0
        %980 = vmatpush1.msra.mxu0 0.0
        %981 = vmatprep.subr.mxu0 0.0
        %982 = vmatpush1.msra.mxu0 0.0
        %983 = vmatprep.subr.mxu0 0.0
        %984 = vmatpush1.msra.mxu0 0.0
        %985 = vmatprep.subr.mxu0 0.0
        %986 = vmatpush1.msra.mxu0 0.0
        %987 = vmatprep.subr.mxu0 0.0
        %988 = vmatpush1.msra.mxu0 0.0
        %989 = vmatprep.subr.mxu0 0.0
        %990 = vmatpush1.msra.mxu0 0.0
        %991 = vmatprep.subr.mxu0 0.0
        %992 = vmatpush1.msra.mxu0 0.0
        %993 = vmatprep.subr.mxu0 0.0
        %994 = vmatpush1.msra.mxu0 0.0
        %995 = vmatprep.subr.mxu0 0.0
        %996 = vmatpush1.msra.mxu0 0.0
        %997 = vmatprep.subr.mxu0 0.0
        %998 = vmatpush1.msra.mxu0 0.0
        %999 = vmatprep.subr.mxu0 0.0
        %1000 = vmatpush1.msra.mxu0 0.0
        %1001 = vmatprep.subr.mxu0 0.0
        %1002 = vmatpush1.msra.mxu0 0.0
        %1003 = vmatprep.subr.mxu0 0.0
        %1004 = vmatpush1.msra.mxu0 0.0
        %1005 = vmatprep.subr.mxu0 0.0
        %1006 = vmatpush1.msra.mxu0 0.0
        %1007 = vmatprep.subr.mxu0 0.0
        %1008 = vmatpush1.msra.mxu0 0.0
        %1009 = vmatprep.subr.mxu0 0.0
        %1010 = vmatpush1.msra.mxu0 0.0
        %1011 = vmatprep.mubr.f32.mxu0 0.0
        %1012 = vmatmul.mubr.f32.gmra.mrb[0].mxu0 %v945
        %v1013 = vpop.f32.mrb[0].mxu0
        %v1014 = vadd.f32 0.0, %v1013
        %v1015 = vpop.f32.mrb[0].mxu0
        %1016 = vdwg.mxu0
        %1018 = vrot.lane.b32.xlu0 %v1014, 8
        %v1019 = vpop.permute.xlu0 %1018
        %vm1021 = vcmask 130112
        %1022 = vst.msk [vmem:[#allocation2] sm:$0xff] %vm1021, %v1019
        %1023 = vrot.lane.b32.xlu0 %v603, 112
        %v1024 = vpop.permute.xlu0 %1023
        %1025 = vrot.lane.b32.xlu0 %v523, 112
        %v1026 = vpop.permute.xlu0 %1025
        %v1027 = vsel %vm686, %v1024, 0
        %v1029 = vsel %vm686, %v1026, 0
        %1031 = vmatprep.subr.mxu0 0.0
        %1032 = vmatpush1.xpose.msra.mxu0 %v1029
        %1033 = vmatprep.subr.mxu0 0.0
        %1034 = vmatpush1.xpose.msra.mxu0 0.0
        %1035 = vmatprep.subr.mxu0 0.0
        %1036 = vmatpush1.xpose.msra.mxu0 0.0
        %1037 = vmatprep.subr.mxu0 0.0
        %1038 = vmatpush1.xpose.msra.mxu0 0.0
        %1039 = vmatprep.subr.mxu0 0.0
        %1040 = vmatpush1.xpose.msra.mxu0 0.0
        %1041 = vmatprep.subr.mxu0 0.0
        %1042 = vmatpush1.xpose.msra.mxu0 0.0
        %1043 = vmatprep.subr.mxu0 0.0
        %1044 = vmatpush1.xpose.msra.mxu0 0.0
        %1045 = vmatprep.subr.mxu0 0.0
        %1046 = vmatpush1.xpose.msra.mxu0 0.0
        %1047 = vmatprep.subr.mxu0 0.0
        %1048 = vmatpush1.xpose.msra.mxu0 0.0
        %1049 = vmatprep.subr.mxu0 0.0
        %1050 = vmatpush1.xpose.msra.mxu0 0.0
        %1051 = vmatprep.subr.mxu0 0.0
        %1052 = vmatpush1.xpose.msra.mxu0 0.0
        %1053 = vmatprep.subr.mxu0 0.0
        %1054 = vmatpush1.xpose.msra.mxu0 0.0
        %1055 = vmatprep.subr.mxu0 0.0
        %1056 = vmatpush1.xpose.msra.mxu0 0.0
        %1057 = vmatprep.subr.mxu0 0.0
        %1058 = vmatpush1.xpose.msra.mxu0 0.0
        %1059 = vmatprep.subr.mxu0 0.0
        %1060 = vmatpush1.xpose.msra.mxu0 0.0
        %1061 = vmatprep.subr.mxu0 0.0
        %1062 = vmatpush1.xpose.msra.mxu0 0.0
        %1063 = vmatprep.subr.mxu0 0.0
        %1064 = vmatpush1.xpose.msra.mxu0 0.0
        %1065 = vmatprep.subr.mxu0 0.0
        %1066 = vmatpush1.xpose.msra.mxu0 0.0
        %1067 = vmatprep.subr.mxu0 0.0
        %1068 = vmatpush1.xpose.msra.mxu0 0.0
        %1069 = vmatprep.subr.mxu0 0.0
        %1070 = vmatpush1.xpose.msra.mxu0 0.0
        %1071 = vmatprep.subr.mxu0 0.0
        %1072 = vmatpush1.xpose.msra.mxu0 0.0
        %1073 = vmatprep.subr.mxu0 0.0
        %1074 = vmatpush1.xpose.msra.mxu0 0.0
        %1075 = vmatprep.subr.mxu0 0.0
        %1076 = vmatpush1.xpose.msra.mxu0 0.0
        %1077 = vmatprep.subr.mxu0 0.0
        %1078 = vmatpush1.xpose.msra.mxu0 0.0
        %1079 = vmatprep.subr.mxu0 0.0
        %1080 = vmatpush1.xpose.msra.mxu0 0.0
        %1081 = vmatprep.subr.mxu0 0.0
        %1082 = vmatpush1.xpose.msra.mxu0 0.0
        %1083 = vmatprep.subr.mxu0 0.0
        %1084 = vmatpush1.xpose.msra.mxu0 0.0
        %1085 = vmatprep.subr.mxu0 0.0
        %1086 = vmatpush1.xpose.msra.mxu0 0.0
        %1087 = vmatprep.subr.mxu0 0.0
        %1088 = vmatpush1.xpose.msra.mxu0 0.0
        %1089 = vmatprep.subr.mxu0 0.0
        %1090 = vmatpush1.xpose.msra.mxu0 0.0
        %1091 = vmatprep.subr.mxu0 0.0
        %1092 = vmatpush1.xpose.msra.mxu0 0.0
        %1093 = vmatprep.subr.mxu0 0.0
        %1094 = vmatpush1.xpose.msra.mxu0 0.0
        %1095 = vmatprep.mubr.f32.mxu0 0.0
        %1096 = vmatmul.mubr.f32.gmra.mrb[0].mxu0 %v1027
        %v1097 = vpop.f32.mrb[0].mxu0
        %v1098 = vadd.f32 0.0, %v1097
        %v1099 = vpop.f32.mrb[0].mxu0
        %1100 = vdwg.mxu0
        %v1101 = vmul.f32 %v1098, %v763
        %v1102 = vsel %vm686, %v1101, -inf
        %1103 = vmax.xlane.f32.xlu0 %v1102
        %v1104 = vpop.xlane.xlu0 %1103
        %v1105 = vsub.f32 %v1101, %v1104
        %v1106 = vmul.f32 %v1105, 1.442695
        %v1107 = vpow.pop %v1106
        %v1108 = vsel %vm686, %v1107, 0.0
        %1109 = vadd.xlane.f32.xlu0 %v1108
        %v1110 = vpop.xlane.xlu0 %1109
        %v1111 = vrcp.pop %v1110
        %v1112 = vmul.f32 %v1107, %v1111
        %1113 = vrot.lane.b32.xlu0 %v683, 112
        %v1114 = vpop.permute.xlu0 %1113
        %v1117 = vsel %vm686, %v1112, 0
        %1119 = vmatprep.subr.mxu0 0.0
        %1120 = vmatpush1.msra.mxu0 %v1114
        %1121 = vmatprep.subr.mxu0 0.0
        %1122 = vmatpush1.msra.mxu0 0.0
        %1123 = vmatprep.subr.mxu0 0.0
        %1124 = vmatpush1.msra.mxu0 0.0
        %1125 = vmatprep.subr.mxu0 0.0
        %1126 = vmatpush1.msra.mxu0 0.0
        %1127 = vmatprep.subr.mxu0 0.0
        %1128 = vmatpush1.msra.mxu0 0.0
        %1129 = vmatprep.subr.mxu0 0.0
        %1130 = vmatpush1.msra.mxu0 0.0
        %1131 = vmatprep.subr.mxu0 0.0
        %1132 = vmatpush1.msra.mxu0 0.0
        %1133 = vmatprep.subr.mxu0 0.0
        %1134 = vmatpush1.msra.mxu0 0.0
        %1135 = vmatprep.subr.mxu0 0.0
        %1136 = vmatpush1.msra.mxu0 0.0
        %1137 = vmatprep.subr.mxu0 0.0
        %1138 = vmatpush1.msra.mxu0 0.0
        %1139 = vmatprep.subr.mxu0 0.0
        %1140 = vmatpush1.msra.mxu0 0.0
        %1141 = vmatprep.subr.mxu0 0.0
        %1142 = vmatpush1.msra.mxu0 0.0
        %1143 = vmatprep.subr.mxu0 0.0
        %1144 = vmatpush1.msra.mxu0 0.0
        %1145 = vmatprep.subr.mxu0 0.0
        %1146 = vmatpush1.msra.mxu0 0.0
        %1147 = vmatprep.subr.mxu0 0.0
        %1148 = vmatpush1.msra.mxu0 0.0
        %1149 = vmatprep.subr.mxu0 0.0
        %1150 = vmatpush1.msra.mxu0 0.0
        %1151 = vmatprep.subr.mxu0 0.0
        %1152 = vmatpush1.msra.mxu0 0.0
        %1153 = vmatprep.subr.mxu0 0.0
        %1154 = vmatpush1.msra.mxu0 0.0
        %1155 = vmatprep.subr.mxu0 0.0
        %1156 = vmatpush1.msra.mxu0 0.0
        %1157 = vmatprep.subr.mxu0 0.0
        %1158 = vmatpush1.msra.mxu0 0.0
        %1159 = vmatprep.subr.mxu0 0.0
        %1160 = vmatpush1.msra.mxu0 0.0
        %1161 = vmatprep.subr.mxu0 0.0
        %1162 = vmatpush1.msra.mxu0 0.0
        %1163 = vmatprep.subr.mxu0 0.0
        %1164 = vmatpush1.msra.mxu0 0.0
        %1165 = vmatprep.subr.mxu0 0.0
        %1166 = vmatpush1.msra.mxu0 0.0
        %1167 = vmatprep.subr.mxu0 0.0
        %1168 = vmatpush1.msra.mxu0 0.0
        %1169 = vmatprep.subr.mxu0 0.0
        %1170 = vmatpush1.msra.mxu0 0.0
        %1171 = vmatprep.subr.mxu0 0.0
        %1172 = vmatpush1.msra.mxu0 0.0
        %1173 = vmatprep.subr.mxu0 0.0
        %1174 = vmatpush1.msra.mxu0 0.0
        %1175 = vmatprep.subr.mxu0 0.0
        %1176 = vmatpush1.msra.mxu0 0.0
        %1177 = vmatprep.subr.mxu0 0.0
        %1178 = vmatpush1.msra.mxu0 0.0
        %1179 = vmatprep.subr.mxu0 0.0
        %1180 = vmatpush1.msra.mxu0 0.0
        %1181 = vmatprep.subr.mxu0 0.0
        %1182 = vmatpush1.msra.mxu0 0.0
        %1183 = vmatprep.mubr.f32.mxu0 0.0
        %1184 = vmatmul.mubr.f32.gmra.mrb[0].mxu0 %v1117
        %v1185 = vpop.f32.mrb[0].mxu0
        %v1186 = vadd.f32 0.0, %v1185
        %v1187 = vpop.f32.mrb[0].mxu0
        %1188 = vdwg.mxu0
        %1190 = vrot.lane.b32.xlu0 %v1186, 16
        %v1191 = vpop.permute.xlu0 %1190
        %vm1193 = vcmask 195712
        %1194 = vst.msk [vmem:[#allocation2] sm:$0xff] %vm1193, %v1191
        %1195 = vrot.lane.b32.xlu0 %v603, 104
        %v1196 = vpop.permute.xlu0 %1195
        %1197 = vrot.lane.b32.xlu0 %v523, 104
        %v1198 = vpop.permute.xlu0 %1197
        %v1199 = vsel %vm686, %v1196, 0
        %v1201 = vsel %vm686, %v1198, 0
        %1203 = vmatprep.subr.mxu0 0.0
        %1204 = vmatpush1.xpose.msra.mxu0 %v1201
        %1205 = vmatprep.subr.mxu0 0.0
        %1206 = vmatpush1.xpose.msra.mxu0 0.0
        %1207 = vmatprep.subr.mxu0 0.0
        %1208 = vmatpush1.xpose.msra.mxu0 0.0
        %1209 = vmatprep.subr.mxu0 0.0
        %1210 = vmatpush1.xpose.msra.mxu0 0.0
        %1211 = vmatprep.subr.mxu0 0.0
        %1212 = vmatpush1.xpose.msra.mxu0 0.0
        %1213 = vmatprep.subr.mxu0 0.0
        %1214 = vmatpush1.xpose.msra.mxu0 0.0
        %1215 = vmatprep.subr.mxu0 0.0
        %1216 = vmatpush1.xpose.msra.mxu0 0.0
        %1217 = vmatprep.subr.mxu0 0.0
        %1218 = vmatpush1.xpose.msra.mxu0 0.0
        %1219 = vmatprep.subr.mxu0 0.0
        %1220 = vmatpush1.xpose.msra.mxu0 0.0
        %1221 = vmatprep.subr.mxu0 0.0
        %1222 = vmatpush1.xpose.msra.mxu0 0.0
        %1223 = vmatprep.subr.mxu0 0.0
        %1224 = vmatpush1.xpose.msra.mxu0 0.0
        %1225 = vmatprep.subr.mxu0 0.0
        %1226 = vmatpush1.xpose.msra.mxu0 0.0
        %1227 = vmatprep.subr.mxu0 0.0
        %1228 = vmatpush1.xpose.msra.mxu0 0.0
        %1229 = vmatprep.subr.mxu0 0.0
        %1230 = vmatpush1.xpose.msra.mxu0 0.0
        %1231 = vmatprep.subr.mxu0 0.0
        %1232 = vmatpush1.xpose.msra.mxu0 0.0
        %1233 = vmatprep.subr.mxu0 0.0
        %1234 = vmatpush1.xpose.msra.mxu0 0.0
        %1235 = vmatprep.subr.mxu0 0.0
        %1236 = vmatpush1.xpose.msra.mxu0 0.0
        %1237 = vmatprep.subr.mxu0 0.0
        %1238 = vmatpush1.xpose.msra.mxu0 0.0
        %1239 = vmatprep.subr.mxu0 0.0
        %1240 = vmatpush1.xpose.msra.mxu0 0.0
        %1241 = vmatprep.subr.mxu0 0.0
        %1242 = vmatpush1.xpose.msra.mxu0 0.0
        %1243 = vmatprep.subr.mxu0 0.0
        %1244 = vmatpush1.xpose.msra.mxu0 0.0
        %1245 = vmatprep.subr.mxu0 0.0
        %1246 = vmatpush1.xpose.msra.mxu0 0.0
        %1247 = vmatprep.subr.mxu0 0.0
        %1248 = vmatpush1.xpose.msra.mxu0 0.0
        %1249 = vmatprep.subr.mxu0 0.0
        %1250 = vmatpush1.xpose.msra.mxu0 0.0
        %1251 = vmatprep.subr.mxu0 0.0
        %1252 = vmatpush1.xpose.msra.mxu0 0.0
        %1253 = vmatprep.subr.mxu0 0.0
        %1254 = vmatpush1.xpose.msra.mxu0 0.0
        %1255 = vmatprep.subr.mxu0 0.0
        %1256 = vmatpush1.xpose.msra.mxu0 0.0
        %1257 = vmatprep.subr.mxu0 0.0
        %1258 = vmatpush1.xpose.msra.mxu0 0.0
        %1259 = vmatprep.subr.mxu0 0.0
        %1260 = vmatpush1.xpose.msra.mxu0 0.0
        %1261 = vmatprep.subr.mxu0 0.0
        %1262 = vmatpush1.xpose.msra.mxu0 0.0
        %1263 = vmatprep.subr.mxu0 0.0
        %1264 = vmatpush1.xpose.msra.mxu0 0.0
        %1265 = vmatprep.subr.mxu0 0.0
        %1266 = vmatpush1.xpose.msra.mxu0 0.0
        %1267 = vmatprep.mubr.f32.mxu0 0.0
        %1268 = vmatmul.mubr.f32.gmra.mrb[0].mxu0 %v1199
        %v1269 = vpop.f32.mrb[0].mxu0
        %v1270 = vadd.f32 0.0, %v1269
        %v1271 = vpop.f32.mrb[0].mxu0
        %1272 = vdwg.mxu0
        %v1273 = vmul.f32 %v1270, %v763
        %v1274 = vsel %vm686, %v1273, -inf
        %1275 = vmax.xlane.f32.xlu0 %v1274
        %v1276 = vpop.xlane.xlu0 %1275
        %v1277 = vsub.f32 %v1273, %v1276
        %v1278 = vmul.f32 %v1277, 1.442695
        %v1279 = vpow.pop %v1278
        %v1280 = vsel %vm686, %v1279, 0.0
        %1281 = vadd.xlane.f32.xlu0 %v1280
        %v1282 = vpop.xlane.xlu0 %1281
        %v1283 = vrcp.pop %v1282
        %v1284 = vmul.f32 %v1279, %v1283
        %1285 = vrot.lane.b32.xlu0 %v683, 104
        %v1286 = vpop.permute.xlu0 %1285
        %v1289 = vsel %vm686, %v1284, 0
        %1291 = vmatprep.subr.mxu0 0.0
        %1292 = vmatpush1.msra.mxu0 %v1286
        %1293 = vmatprep.subr.mxu0 0.0
        %1294 = vmatpush1.msra.mxu0 0.0
        %1295 = vmatprep.subr.mxu0 0.0
        %1296 = vmatpush1.msra.mxu0 0.0
        %1297 = vmatprep.subr.mxu0 0.0
        %1298 = vmatpush1.msra.mxu0 0.0
        %1299 = vmatprep.subr.mxu0 0.0
        %1300 = vmatpush1.msra.mxu0 0.0
        %1301 = vmatprep.subr.mxu0 0.0
        %1302 = vmatpush1.msra.mxu0 0.0
        %1303 = vmatprep.subr.mxu0 0.0
        %1304 = vmatpush1.msra.mxu0 0.0
        %1305 = vmatprep.subr.mxu0 0.0
        %1306 = vmatpush1.msra.mxu0 0.0
        %1307 = vmatprep.subr.mxu0 0.0
        %1308 = vmatpush1.msra.mxu0 0.0
        %1309 = vmatprep.subr.mxu0 0.0
        %1310 = vmatpush1.msra.mxu0 0.0
        %1311 = vmatprep.subr.mxu0 0.0
        %1312 = vmatpush1.msra.mxu0 0.0
        %1313 = vmatprep.subr.mxu0 0.0
        %1314 = vmatpush1.msra.mxu0 0.0
        %1315 = vmatprep.subr.mxu0 0.0
        %1316 = vmatpush1.msra.mxu0 0.0
        %1317 = vmatprep.subr.mxu0 0.0
        %1318 = vmatpush1.msra.mxu0 0.0
        %1319 = vmatprep.subr.mxu0 0.0
        %1320 = vmatpush1.msra.mxu0 0.0
        %1321 = vmatprep.subr.mxu0 0.0
        %1322 = vmatpush1.msra.mxu0 0.0
        %1323 = vmatprep.subr.mxu0 0.0
        %1324 = vmatpush1.msra.mxu0 0.0
        %1325 = vmatprep.subr.mxu0 0.0
        %1326 = vmatpush1.msra.mxu0 0.0
        %1327 = vmatprep.subr.mxu0 0.0
        %1328 = vmatpush1.msra.mxu0 0.0
        %1329 = vmatprep.subr.mxu0 0.0
        %1330 = vmatpush1.msra.mxu0 0.0
        %1331 = vmatprep.subr.mxu0 0.0
        %1332 = vmatpush1.msra.mxu0 0.0
        %1333 = vmatprep.subr.mxu0 0.0
        %1334 = vmatpush1.msra.mxu0 0.0
        %1335 = vmatprep.subr.mxu0 0.0
        %1336 = vmatpush1.msra.mxu0 0.0
        %1337 = vmatprep.subr.mxu0 0.0
        %1338 = vmatpush1.msra.mxu0 0.0
        %1339 = vmatprep.subr.mxu0 0.0
        %1340 = vmatpush1.msra.mxu0 0.0
        %1341 = vmatprep.subr.mxu0 0.0
        %1342 = vmatpush1.msra.mxu0 0.0
        %1343 = vmatprep.subr.mxu0 0.0
        %1344 = vmatpush1.msra.mxu0 0.0
        %1345 = vmatprep.subr.mxu0 0.0
        %1346 = vmatpush1.msra.mxu0 0.0
        %1347 = vmatprep.subr.mxu0 0.0
        %1348 = vmatpush1.msra.mxu0 0.0
        %1349 = vmatprep.subr.mxu0 0.0
        %1350 = vmatpush1.msra.mxu0 0.0
        %1351 = vmatprep.subr.mxu0 0.0
        %1352 = vmatpush1.msra.mxu0 0.0
        %1353 = vmatprep.subr.mxu0 0.0
        %1354 = vmatpush1.msra.mxu0 0.0
        %1355 = vmatprep.mubr.f32.mxu0 0.0
        %1356 = vmatmul.mubr.f32.gmra.mrb[0].mxu0 %v1289
        %v1357 = vpop.f32.mrb[0].mxu0
        %v1358 = vadd.f32 0.0, %v1357
        %v1359 = vpop.f32.mrb[0].mxu0
        %1360 = vdwg.mxu0
        %1362 = vrot.lane.b32.xlu0 %v1358, 24
        %v1363 = vpop.permute.xlu0 %1362
        %vm1365 = vcmask 261312
        %1366 = vst.msk [vmem:[#allocation2] sm:$0xff] %vm1365, %v1363
        %v1367 = vld [vmem:[#allocation2] sm:$0xff]
        %s1368 = scalar_lea.vmem %s3, 96
        %v1369 = vld [vmem:[%s1368] sm:$0xff]
        %v1370 = vld [vmem:[%s1368 + $0x8] sm:$0xff]
        %v1371 = vld [vmem:[%s1368 + $0x10] sm:$0xff]
        %v1372 = vld [vmem:[%s1368 + $0x18] sm:$0xff]
        %v1373 = vld [vmem:[%s4 + $0x3] sm:$0x1]
        %v1374 = vlaneseq
        %v1375 = vshrl.u32 %v1374, 7
        %v1376 = vsub.s32 0, %v1375
        %v1377 = vrot.slane %v1373, %v1376
        %v1379 = vsel %vm417, %v1367, 0
        %1381 = vmatprep.subr.mxu0 0.0
        %1382 = vmatpush1.msra.mxu0 %v1369
        %1383 = vmatprep.subr.mxu0 0.0
        %1384 = vmatpush1.msra.mxu0 %v1370
        %1385 = vmatprep.subr.mxu0 0.0
        %1386 = vmatpush1.msra.mxu0 %v1371
        %1387 = vmatprep.subr.mxu0 0.0
        %1388 = vmatpush1.msra.mxu0 %v1372
        %1389 = vmatprep.subr.mxu0 0.0
        %1390 = vmatpush1.msra.mxu0 0.0
        %1391 = vmatprep.subr.mxu0 0.0
        %1392 = vmatpush1.msra.mxu0 0.0
        %1393 = vmatprep.subr.mxu0 0.0
        %1394 = vmatpush1.msra.mxu0 0.0
        %1395 = vmatprep.subr.mxu0 0.0
        %1396 = vmatpush1.msra.mxu0 0.0
        %1397 = vmatprep.subr.mxu0 0.0
        %1398 = vmatpush1.msra.mxu0 0.0
        %1399 = vmatprep.subr.mxu0 0.0
        %1400 = vmatpush1.msra.mxu0 0.0
        %1401 = vmatprep.subr.mxu0 0.0
        %1402 = vmatpush1.msra.mxu0 0.0
        %1403 = vmatprep.subr.mxu0 0.0
        %1404 = vmatpush1.msra.mxu0 0.0
        %1405 = vmatprep.subr.mxu0 0.0
        %1406 = vmatpush1.msra.mxu0 0.0
        %1407 = vmatprep.subr.mxu0 0.0
        %1408 = vmatpush1.msra.mxu0 0.0
        %1409 = vmatprep.subr.mxu0 0.0
        %1410 = vmatpush1.msra.mxu0 0.0
        %1411 = vmatprep.subr.mxu0 0.0
        %1412 = vmatpush1.msra.mxu0 0.0
        %1413 = vmatprep.subr.mxu0 0.0
        %1414 = vmatpush1.msra.mxu0 0.0
        %1415 = vmatprep.subr.mxu0 0.0
        %1416 = vmatpush1.msra.mxu0 0.0
        %1417 = vmatprep.subr.mxu0 0.0
        %1418 = vmatpush1.msra.mxu0 0.0
        %1419 = vmatprep.subr.mxu0 0.0
        %1420 = vmatpush1.msra.mxu0 0.0
        %1421 = vmatprep.subr.mxu0 0.0
        %1422 = vmatpush1.msra.mxu0 0.0
        %1423 = vmatprep.subr.mxu0 0.0
        %1424 = vmatpush1.msra.mxu0 0.0
        %1425 = vmatprep.subr.mxu0 0.0
        %1426 = vmatpush1.msra.mxu0 0.0
        %1427 = vmatprep.subr.mxu0 0.0
        %1428 = vmatpush1.msra.mxu0 0.0
        %1429 = vmatprep.subr.mxu0 0.0
        %1430 = vmatpush1.msra.mxu0 0.0
        %1431 = vmatprep.subr.mxu0 0.0
        %1432 = vmatpush1.msra.mxu0 0.0
        %1433 = vmatprep.subr.mxu0 0.0
        %1434 = vmatpush1.msra.mxu0 0.0
        %1435 = vmatprep.subr.mxu0 0.0
        %1436 = vmatpush1.msra.mxu0 0.0
        %1437 = vmatprep.subr.mxu0 0.0
        %1438 = vmatpush1.msra.mxu0 0.0
        %1439 = vmatprep.subr.mxu0 0.0
        %1440 = vmatpush1.msra.mxu0 0.0
        %1441 = vmatprep.subr.mxu0 0.0
        %1442 = vmatpush1.msra.mxu0 0.0
        %1443 = vmatprep.subr.mxu0 0.0
        %1444 = vmatpush1.msra.mxu0 0.0
        %1445 = vmatprep.mubr.f32.mxu0 0.0
        %1446 = vmatmul.mubr.f32.gmra.mrb[0].mxu0 %v1379
        %v1447 = vpop.f32.mrb[0].mxu0
        %v1448 = vadd.f32 %v1377, %v1447
        %v1449 = vpop.f32.mrb[0].mxu0
        %1450 = vdwg.mxu0
        %v1451 = vadd.f32 %v413, %v1448
        %s1452 = sld [smem:[#allocation3 + $0x2]]
        %s1453 = sld [smem:[#allocation3 + $0x3]]
        %v1454 = vsel %vm417, %v1451, 0.0
        %1455 = vadd.xlane.f32.xlu0 %v1454
        %v1456 = vpop.xlane.xlu0 %1455
        %v1457 = vmul.f32 %v1456, %v421
        %v1458 = vsub.f32 %v1451, %v1457
        %v1459 = vmul.f32 %v1458, %v1458
        %v1460 = vsel %vm417, %v1459, 0.0
        %1461 = vadd.xlane.f32.xlu0 %v1460
        %v1462 = vpop.xlane.xlu0 %1461
        %v1463 = vmul.f32 %v1462, %v428
        %v1464 = vrsqrt.pop %v1463
        %v1465 = vmul.f32 %v1463, %v1464
        %vm1466 = vcmp.eq.f32.partialorder %v1463, inf
        %v1467 = vsel %vm1466, %v1463, %v1465
        %vm1468 = vcmp.eq.f32.partialorder %v1463, 0.0
        %v1469 = vand.u32 %v1463, 2147483648
        %v1470 = vsel %vm1468, %v1469, %v1467
        %v1471 = vadd.f32 %v1470, 1e-06
        %v1472 = vrcp.pop %v1471
        %v1473 = vmul.f32 %v1458, %v1472
        %v1474 = vstv %s1452
        %v1475 = vmul.f32 %v1474, %v1473
        %v1476 = vstv %s1453
        %v1477 = vadd.f32 %v1475, %v1476
        %v1478 = vld [vmem:[%s5] sm:$0xff]
        %v1479 = vld [vmem:[%s5 + $0x8] sm:$0xff]
        %v1480 = vld [vmem:[%s5 + $0x10] sm:$0xff]
        %v1481 = vld [vmem:[%s5 + $0x18] sm:$0xff]
        %v1482 = vld [vmem:[%s6] sm:$0x1]
        %v1483 = vlaneseq
        %v1484 = vshrl.u32 %v1483, 7
        %v1485 = vsub.s32 0, %v1484
        %v1486 = vrot.slane %v1482, %v1485
        %v1488 = vsel %vm417, %v1477, 0
        %1490 = vmatprep.subr.mxu0 0.0
        %1491 = vmatpush1.msra.mxu0 %v1478
        %1492 = vmatprep.subr.mxu0 0.0
        %1493 = vmatpush1.msra.mxu0 %v1479
        %1494 = vmatprep.subr.mxu0 0.0
        %1495 = vmatpush1.msra.mxu0 %v1480
        %1496 = vmatprep.subr.mxu0 0.0
        %1497 = vmatpush1.msra.mxu0 %v1481
        %1498 = vmatprep.subr.mxu0 0.0
        %1499 = vmatpush1.msra.mxu0 0.0
        %1500 = vmatprep.subr.mxu0 0.0
        %1501 = vmatpush1.msra.mxu0 0.0
        %1502 = vmatprep.subr.mxu0 0.0
        %1503 = vmatpush1.msra.mxu0 0.0
        %1504 = vmatprep.subr.mxu0 0.0
        %1505 = vmatpush1.msra.mxu0 0.0
        %1506 = vmatprep.subr.mxu0 0.0
        %1507 = vmatpush1.msra.mxu0 0.0
        %1508 = vmatprep.subr.mxu0 0.0
        %1509 = vmatpush1.msra.mxu0 0.0
        %1510 = vmatprep.subr.mxu0 0.0
        %1511 = vmatpush1.msra.mxu0 0.0
        %1512 = vmatprep.subr.mxu0 0.0
        %1513 = vmatpush1.msra.mxu0 0.0
        %1514 = vmatprep.subr.mxu0 0.0
        %1515 = vmatpush1.msra.mxu0 0.0
        %1516 = vmatprep.subr.mxu0 0.0
        %1517 = vmatpush1.msra.mxu0 0.0
        %1518 = vmatprep.subr.mxu0 0.0
        %1519 = vmatpush1.msra.mxu0 0.0
        %1520 = vmatprep.subr.mxu0 0.0
        %1521 = vmatpush1.msra.mxu0 0.0
        %1522 = vmatprep.subr.mxu0 0.0
        %1523 = vmatpush1.msra.mxu0 0.0
        %1524 = vmatprep.subr.mxu0 0.0
        %1525 = vmatpush1.msra.mxu0 0.0
        %1526 = vmatprep.subr.mxu0 0.0
        %1527 = vmatpush1.msra.mxu0 0.0
        %1528 = vmatprep.subr.mxu0 0.0
        %1529 = vmatpush1.msra.mxu0 0.0
        %1530 = vmatprep.subr.mxu0 0.0
        %1531 = vmatpush1.msra.mxu0 0.0
        %1532 = vmatprep.subr.mxu0 0.0
        %1533 = vmatpush1.msra.mxu0 0.0
        %1534 = vmatprep.subr.mxu0 0.0
        %1535 = vmatpush1.msra.mxu0 0.0
        %1536 = vmatprep.subr.mxu0 0.0
        %1537 = vmatpush1.msra.mxu0 0.0
        %1538 = vmatprep.subr.mxu0 0.0
        %1539 = vmatpush1.msra.mxu0 0.0
        %1540 = vmatprep.subr.mxu0 0.0
        %1541 = vmatpush1.msra.mxu0 0.0
        %1542 = vmatprep.subr.mxu0 0.0
        %1543 = vmatpush1.msra.mxu0 0.0
        %1544 = vmatprep.subr.mxu0 0.0
        %1545 = vmatpush1.msra.mxu0 0.0
        %1546 = vmatprep.subr.mxu0 0.0
        %1547 = vmatpush1.msra.mxu0 0.0
        %1548 = vmatprep.subr.mxu0 0.0
        %1549 = vmatpush1.msra.mxu0 0.0
        %1550 = vmatprep.subr.mxu0 0.0
        %1551 = vmatpush1.msra.mxu0 0.0
        %1552 = vmatprep.subr.mxu0 0.0
        %1553 = vmatpush1.msra.mxu0 0.0
        %1554 = vmatprep.mubr.f32.mxu0 0.0
        %1555 = vmatmul.mubr.f32.gmra.mrb[0].mxu0 %v1488
        %v1556 = vpop.f32.mrb[0].mxu0
        %v1557 = vadd.f32 %v1486, %v1556
        %v1558 = vpop.f32.mrb[0].mxu0
        %1559 = vdwg.mxu0
        %s1560 = scalar_lea.vmem %s5, 32
        %v1561 = vld [vmem:[%s1560] sm:$0xff]
        %v1562 = vld [vmem:[%s1560 + $0x8] sm:$0xff]
        %v1563 = vld [vmem:[%s1560 + $0x10] sm:$0xff]
        %v1564 = vld [vmem:[%s1560 + $0x18] sm:$0xff]
        %v1565 = vld [vmem:[%s6 + $0x1] sm:$0x1]
        %v1566 = vlaneseq
        %v1567 = vshrl.u32 %v1566, 7
        %v1568 = vsub.s32 0, %v1567
        %v1569 = vrot.slane %v1565, %v1568
        %v1571 = vsel %vm417, %v414, 0
        %1573 = vmatprep.subr.mxu0 0.0
        %1574 = vmatpush1.msra.mxu0 %v1561
        %1575 = vmatprep.subr.mxu0 0.0
        %1576 = vmatpush1.msra.mxu0 %v1562
        %1577 = vmatprep.subr.mxu0 0.0
        %1578 = vmatpush1.msra.mxu0 %v1563
        %1579 = vmatprep.subr.mxu0 0.0
        %1580 = vmatpush1.msra.mxu0 %v1564
        %1581 = vmatprep.subr.mxu0 0.0
        %1582 = vmatpush1.msra.mxu0 0.0
        %1583 = vmatprep.subr.mxu0 0.0
        %1584 = vmatpush1.msra.mxu0 0.0
        %1585 = vmatprep.subr.mxu0 0.0
        %1586 = vmatpush1.msra.mxu0 0.0
        %1587 = vmatprep.subr.mxu0 0.0
        %1588 = vmatpush1.msra.mxu0 0.0
        %1589 = vmatprep.subr.mxu0 0.0
        %1590 = vmatpush1.msra.mxu0 0.0
        %1591 = vmatprep.subr.mxu0 0.0
        %1592 = vmatpush1.msra.mxu0 0.0
        %1593 = vmatprep.subr.mxu0 0.0
        %1594 = vmatpush1.msra.mxu0 0.0
        %1595 = vmatprep.subr.mxu0 0.0
        %1596 = vmatpush1.msra.mxu0 0.0
        %1597 = vmatprep.subr.mxu0 0.0
        %1598 = vmatpush1.msra.mxu0 0.0
        %1599 = vmatprep.subr.mxu0 0.0
        %1600 = vmatpush1.msra.mxu0 0.0
        %1601 = vmatprep.subr.mxu0 0.0
        %1602 = vmatpush1.msra.mxu0 0.0
        %1603 = vmatprep.subr.mxu0 0.0
        %1604 = vmatpush1.msra.mxu0 0.0
        %1605 = vmatprep.subr.mxu0 0.0
        %1606 = vmatpush1.msra.mxu0 0.0
        %1607 = vmatprep.subr.mxu0 0.0
        %1608 = vmatpush1.msra.mxu0 0.0
        %1609 = vmatprep.subr.mxu0 0.0
        %1610 = vmatpush1.msra.mxu0 0.0
        %1611 = vmatprep.subr.mxu0 0.0
        %1612 = vmatpush1.msra.mxu0 0.0
        %1613 = vmatprep.subr.mxu0 0.0
        %1614 = vmatpush1.msra.mxu0 0.0
        %1615 = vmatprep.subr.mxu0 0.0
        %1616 = vmatpush1.msra.mxu0 0.0
        %1617 = vmatprep.subr.mxu0 0.0
        %1618 = vmatpush1.msra.mxu0 0.0
        %1619 = vmatprep.subr.mxu0 0.0
        %1620 = vmatpush1.msra.mxu0 0.0
        %1621 = vmatprep.subr.mxu0 0.0
        %1622 = vmatpush1.msra.mxu0 0.0
        %1623 = vmatprep.subr.mxu0 0.0
        %1624 = vmatpush1.msra.mxu0 0.0
        %1625 = vmatprep.subr.mxu0 0.0
        %1626 = vmatpush1.msra.mxu0 0.0
        %1627 = vmatprep.subr.mxu0 0.0
        %1628 = vmatpush1.msra.mxu0 0.0
        %1629 = vmatprep.subr.mxu0 0.0
        %1630 = vmatpush1.msra.mxu0 0.0
        %1631 = vmatprep.subr.mxu0 0.0
        %1632 = vmatpush1.msra.mxu0 0.0
        %1633 = vmatprep.subr.mxu0 0.0
        %1634 = vmatpush1.msra.mxu0 0.0
        %1635 = vmatprep.subr.mxu0 0.0
        %1636 = vmatpush1.msra.mxu0 0.0
        %1637 = vmatprep.mubr.f32.mxu0 0.0
        %1638 = vmatmul.mubr.f32.gmra.mrb[0].mxu0 %v1571
        %v1639 = vpop.f32.mrb[0].mxu0
        %v1640 = vadd.f32 %v1569, %v1639
        %v1641 = vpop.f32.mrb[0].mxu0
        %1642 = vdwg.mxu0
        %s1643 = scalar_lea.vmem %s5, 64
        %v1644 = vld [vmem:[%s1643] sm:$0xff]
        %v1645 = vld [vmem:[%s1643 + $0x8] sm:$0xff]
        %v1646 = vld [vmem:[%s1643 + $0x10] sm:$0xff]
        %v1647 = vld [vmem:[%s1643 + $0x18] sm:$0xff]
        %v1648 = vld [vmem:[%s6 + $0x2] sm:$0x1]
        %v1649 = vlaneseq
        %v1650 = vshrl.u32 %v1649, 7
        %v1651 = vsub.s32 0, %v1650
        %v1652 = vrot.slane %v1648, %v1651
        %1653 = vmatprep.subr.mxu0 0.0
        %1654 = vmatpush1.msra.mxu0 %v1644
        %1655 = vmatprep.subr.mxu0 0.0
        %1656 = vmatpush1.msra.mxu0 %v1645
        %1657 = vmatprep.subr.mxu0 0.0
        %1658 = vmatpush1.msra.mxu0 %v1646
        %1659 = vmatprep.subr.mxu0 0.0
        %1660 = vmatpush1.msra.mxu0 %v1647
        %1661 = vmatprep.subr.mxu0 0.0
        %1662 = vmatpush1.msra.mxu0 0.0
        %1663 = vmatprep.subr.mxu0 0.0
        %1664 = vmatpush1.msra.mxu0 0.0
        %1665 = vmatprep.subr.mxu0 0.0
        %1666 = vmatpush1.msra.mxu0 0.0
        %1667 = vmatprep.subr.mxu0 0.0
        %1668 = vmatpush1.msra.mxu0 0.0
        %1669 = vmatprep.subr.mxu0 0.0
        %1670 = vmatpush1.msra.mxu0 0.0
        %1671 = vmatprep.subr.mxu0 0.0
        %1672 = vmatpush1.msra.mxu0 0.0
        %1673 = vmatprep.subr.mxu0 0.0
        %1674 = vmatpush1.msra.mxu0 0.0
        %1675 = vmatprep.subr.mxu0 0.0
        %1676 = vmatpush1.msra.mxu0 0.0
        %1677 = vmatprep.subr.mxu0 0.0
        %1678 = vmatpush1.msra.mxu0 0.0
        %1679 = vmatprep.subr.mxu0 0.0
        %1680 = vmatpush1.msra.mxu0 0.0
        %1681 = vmatprep.subr.mxu0 0.0
        %1682 = vmatpush1.msra.mxu0 0.0
        %1683 = vmatprep.subr.mxu0 0.0
        %1684 = vmatpush1.msra.mxu0 0.0
        %1685 = vmatprep.subr.mxu0 0.0
        %1686 = vmatpush1.msra.mxu0 0.0
        %1687 = vmatprep.subr.mxu0 0.0
        %1688 = vmatpush1.msra.mxu0 0.0
        %1689 = vmatprep.subr.mxu0 0.0
        %1690 = vmatpush1.msra.mxu0 0.0
        %1691 = vmatprep.subr.mxu0 0.0
        %1692 = vmatpush1.msra.mxu0 0.0
        %1693 = vmatprep.subr.mxu0 0.0
        %1694 = vmatpush1.msra.mxu0 0.0
        %1695 = vmatprep.subr.mxu0 0.0
        %1696 = vmatpush1.msra.mxu0 0.0
        %1697 = vmatprep.subr.mxu0 0.0
        %1698 = vmatpush1.msra.mxu0 0.0
        %1699 = vmatprep.subr.mxu0 0.0
        %1700 = vmatpush1.msra.mxu0 0.0
        %1701 = vmatprep.subr.mxu0 0.0
        %1702 = vmatpush1.msra.mxu0 0.0
        %1703 = vmatprep.subr.mxu0 0.0
        %1704 = vmatpush1.msra.mxu0 0.0
        %1705 = vmatprep.subr.mxu0 0.0
        %1706 = vmatpush1.msra.mxu0 0.0
        %1707 = vmatprep.subr.mxu0 0.0
        %1708 = vmatpush1.msra.mxu0 0.0
        %1709 = vmatprep.subr.mxu0 0.0
        %1710 = vmatpush1.msra.mxu0 0.0
        %1711 = vmatprep.subr.mxu0 0.0
        %1712 = vmatpush1.msra.mxu0 0.0
        %1713 = vmatprep.subr.mxu0 0.0
        %1714 = vmatpush1.msra.mxu0 0.0
        %1715 = vmatprep.subr.mxu0 0.0
        %1716 = vmatpush1.msra.mxu0 0.0
        %1717 = vmatprep.mubr.f32.mxu0 0.0
        %1718 = vmatmul.mubr.f32.gmra.mrb[0].mxu0 %v1571
        %v1719 = vpop.f32.mrb[0].mxu0
        %v1720 = vadd.f32 %v1652, %v1719
        %v1721 = vpop.f32.mrb[0].mxu0
        %1722 = vdwg.mxu0
        %v1724 = vsel %vm686, %v1640, 0
        %v1727 = vsel %vm686, %v1557, 0
        %1729 = vmatprep.subr.mxu0 0.0
        %1730 = vmatpush1.xpose.msra.mxu0 %v1727
        %1731 = vmatprep.subr.mxu0 0.0
        %1732 = vmatpush1.xpose.msra.mxu0 0.0
        %1733 = vmatprep.subr.mxu0 0.0
        %1734 = vmatpush1.xpose.msra.mxu0 0.0
        %1735 = vmatprep.subr.mxu0 0.0
        %1736 = vmatpush1.xpose.msra.mxu0 0.0
        %1737 = vmatprep.subr.mxu0 0.0
        %1738 = vmatpush1.xpose.msra.mxu0 0.0
        %1739 = vmatprep.subr.mxu0 0.0
        %1740 = vmatpush1.xpose.msra.mxu0 0.0
        %1741 = vmatprep.subr.mxu0 0.0
        %1742 = vmatpush1.xpose.msra.mxu0 0.0
        %1743 = vmatprep.subr.mxu0 0.0
        %1744 = vmatpush1.xpose.msra.mxu0 0.0
        %1745 = vmatprep.subr.mxu0 0.0
        %1746 = vmatpush1.xpose.msra.mxu0 0.0
        %1747 = vmatprep.subr.mxu0 0.0
        %1748 = vmatpush1.xpose.msra.mxu0 0.0
        %1749 = vmatprep.subr.mxu0 0.0
        %1750 = vmatpush1.xpose.msra.mxu0 0.0
        %1751 = vmatprep.subr.mxu0 0.0
        %1752 = vmatpush1.xpose.msra.mxu0 0.0
        %1753 = vmatprep.subr.mxu0 0.0
        %1754 = vmatpush1.xpose.msra.mxu0 0.0
        %1755 = vmatprep.subr.mxu0 0.0
        %1756 = vmatpush1.xpose.msra.mxu0 0.0
        %1757 = vmatprep.subr.mxu0 0.0
        %1758 = vmatpush1.xpose.msra.mxu0 0.0
        %1759 = vmatprep.subr.mxu0 0.0
        %1760 = vmatpush1.xpose.msra.mxu0 0.0
        %1761 = vmatprep.subr.mxu0 0.0
        %1762 = vmatpush1.xpose.msra.mxu0 0.0
        %1763 = vmatprep.subr.mxu0 0.0
        %1764 = vmatpush1.xpose.msra.mxu0 0.0
        %1765 = vmatprep.subr.mxu0 0.0
        %1766 = vmatpush1.xpose.msra.mxu0 0.0
        %1767 = vmatprep.subr.mxu0 0.0
        %1768 = vmatpush1.xpose.msra.mxu0 0.0
        %1769 = vmatprep.subr.mxu0 0.0
        %1770 = vmatpush1.xpose.msra.mxu0 0.0
        %1771 = vmatprep.subr.mxu0 0.0
        %1772 = vmatpush1.xpose.msra.mxu0 0.0
        %1773 = vmatprep.subr.mxu0 0.0
        %1774 = vmatpush1.xpose.msra.mxu0 0.0
        %1775 = vmatprep.subr.mxu0 0.0
        %1776 = vmatpush1.xpose.msra.mxu0 0.0
        %1777 = vmatprep.subr.mxu0 0.0
        %1778 = vmatpush1.xpose.msra.mxu0 0.0
        %1779 = vmatprep.subr.mxu0 0.0
        %1780 = vmatpush1.xpose.msra.mxu0 0.0
        %1781 = vmatprep.subr.mxu0 0.0
        %1782 = vmatpush1.xpose.msra.mxu0 0.0
        %1783 = vmatprep.subr.mxu0 0.0
        %1784 = vmatpush1.xpose.msra.mxu0 0.0
        %1785 = vmatprep.subr.mxu0 0.0
        %1786 = vmatpush1.xpose.msra.mxu0 0.0
        %1787 = vmatprep.subr.mxu0 0.0
        %1788 = vmatpush1.xpose.msra.mxu0 0.0
        %1789 = vmatprep.subr.mxu0 0.0
        %1790 = vmatpush1.xpose.msra.mxu0 0.0
        %1791 = vmatprep.subr.mxu0 0.0
        %1792 = vmatpush1.xpose.msra.mxu0 0.0
        %1793 = vmatprep.mubr.f32.mxu0 0.0
        %1794 = vmatmul.mubr.f32.gmra.mrb[0].mxu0 %v1724
        %v1795 = vpop.f32.mrb[0].mxu0
        %v1796 = vadd.f32 0.0, %v1795
        %v1797 = vpop.f32.mrb[0].mxu0
        %1798 = vdwg.mxu0
        %v1799 = vmul.f32 %v1796, %v763
        %v1800 = vsel %vm686, %v1799, -inf
        %1801 = vmax.xlane.f32.xlu0 %v1800
        %v1802 = vpop.xlane.xlu0 %1801
        %v1803 = vsub.f32 %v1799, %v1802
        %v1804 = vmul.f32 %v1803, 1.442695
        %v1805 = vpow.pop %v1804
        %v1806 = vsel %vm686, %v1805, 0.0
        %1807 = vadd.xlane.f32.xlu0 %v1806
        %v1808 = vpop.xlane.xlu0 %1807
        %v1809 = vrcp.pop %v1808
        %v1810 = vmul.f32 %v1805, %v1809
        %v1812 = vsel %vm686, %v1810, 0
        %1814 = vmatprep.subr.mxu0 0.0
        %1815 = vmatpush1.msra.mxu0 %v1720
        %1816 = vmatprep.subr.mxu0 0.0
        %1817 = vmatpush1.msra.mxu0 0.0
        %1818 = vmatprep.subr.mxu0 0.0
        %1819 = vmatpush1.msra.mxu0 0.0
        %1820 = vmatprep.subr.mxu0 0.0
        %1821 = vmatpush1.msra.mxu0 0.0
        %1822 = vmatprep.subr.mxu0 0.0
        %1823 = vmatpush1.msra.mxu0 0.0
        %1824 = vmatprep.subr.mxu0 0.0
        %1825 = vmatpush1.msra.mxu0 0.0
        %1826 = vmatprep.subr.mxu0 0.0
        %1827 = vmatpush1.msra.mxu0 0.0
        %1828 = vmatprep.subr.mxu0 0.0
        %1829 = vmatpush1.msra.mxu0 0.0
        %1830 = vmatprep.subr.mxu0 0.0
        %1831 = vmatpush1.msra.mxu0 0.0
        %1832 = vmatprep.subr.mxu0 0.0
        %1833 = vmatpush1.msra.mxu0 0.0
        %1834 = vmatprep.subr.mxu0 0.0
        %1835 = vmatpush1.msra.mxu0 0.0
        %1836 = vmatprep.subr.mxu0 0.0
        %1837 = vmatpush1.msra.mxu0 0.0
        %1838 = vmatprep.subr.mxu0 0.0
        %1839 = vmatpush1.msra.mxu0 0.0
        %1840 = vmatprep.subr.mxu0 0.0
        %1841 = vmatpush1.msra.mxu0 0.0
        %1842 = vmatprep.subr.mxu0 0.0
        %1843 = vmatpush1.msra.mxu0 0.0
        %1844 = vmatprep.subr.mxu0 0.0
        %1845 = vmatpush1.msra.mxu0 0.0
        %1846 = vmatprep.subr.mxu0 0.0
        %1847 = vmatpush1.msra.mxu0 0.0
        %1848 = vmatprep.subr.mxu0 0.0
        %1849 = vmatpush1.msra.mxu0 0.0
        %1850 = vmatprep.subr.mxu0 0.0
        %1851 = vmatpush1.msra.mxu0 0.0
        %1852 = vmatprep.subr.mxu0 0.0
        %1853 = vmatpush1.msra.mxu0 0.0
        %1854 = vmatprep.subr.mxu0 0.0
        %1855 = vmatpush1.msra.mxu0 0.0
        %1856 = vmatprep.subr.mxu0 0.0
        %1857 = vmatpush1.msra.mxu0 0.0
        %1858 = vmatprep.subr.mxu0 0.0
        %1859 = vmatpush1.msra.mxu0 0.0
        %1860 = vmatprep.subr.mxu0 0.0
        %1861 = vmatpush1.msra.mxu0 0.0
        %1862 = vmatprep.subr.mxu0 0.0
        %1863 = vmatpush1.msra.mxu0 0.0
        %1864 = vmatprep.subr.mxu0 0.0
        %1865 = vmatpush1.msra.mxu0 0.0
        %1866 = vmatprep.subr.mxu0 0.0
        %1867 = vmatpush1.msra.mxu0 0.0
        %1868 = vmatprep.subr.mxu0 0.0
        %1869 = vmatpush1.msra.mxu0 0.0
        %1870 = vmatprep.subr.mxu0 0.0
        %1871 = vmatpush1.msra.mxu0 0.0
        %1872 = vmatprep.subr.mxu0 0.0
        %1873 = vmatpush1.msra.mxu0 0.0
        %1874 = vmatprep.subr.mxu0 0.0
        %1875 = vmatpush1.msra.mxu0 0.0
        %1876 = vmatprep.subr.mxu0 0.0
        %1877 = vmatpush1.msra.mxu0 0.0
        %1878 = vmatprep.mubr.f32.mxu0 0.0
        %1879 = vmatmul.mubr.f32.gmra.mrb[0].mxu0 %v1812
        %v1880 = vpop.f32.mrb[0].mxu0
        %v1881 = vadd.f32 0.0, %v1880
        %v1882 = vpop.f32.mrb[0].mxu0
        %1883 = vdwg.mxu0
        %1884 = vst.msk [vmem:[#allocation2] sm:$0xff] %vm686, %v1881
        %1885 = vrot.lane.b32.xlu0 %v1640, 120
        %v1886 = vpop.permute.xlu0 %1885
        %1887 = vrot.lane.b32.xlu0 %v1557, 120
        %v1888 = vpop.permute.xlu0 %1887
        %v1889 = vsel %vm686, %v1886, 0
        %v1891 = vsel %vm686, %v1888, 0
        %1893 = vmatprep.subr.mxu0 0.0
        %1894 = vmatpush1.xpose.msra.mxu0 %v1891
        %1895 = vmatprep.subr.mxu0 0.0
        %1896 = vmatpush1.xpose.msra.mxu0 0.0
        %1897 = vmatprep.subr.mxu0 0.0
        %1898 = vmatpush1.xpose.msra.mxu0 0.0
        %1899 = vmatprep.subr.mxu0 0.0
        %1900 = vmatpush1.xpose.msra.mxu0 0.0
        %1901 = vmatprep.subr.mxu0 0.0
        %1902 = vmatpush1.xpose.msra.mxu0 0.0
        %1903 = vmatprep.subr.mxu0 0.0
        %1904 = vmatpush1.xpose.msra.mxu0 0.0
        %1905 = vmatprep.subr.mxu0 0.0
        %1906 = vmatpush1.xpose.msra.mxu0 0.0
        %1907 = vmatprep.subr.mxu0 0.0
        %1908 = vmatpush1.xpose.msra.mxu0 0.0
        %1909 = vmatprep.subr.mxu0 0.0
        %1910 = vmatpush1.xpose.msra.mxu0 0.0
        %1911 = vmatprep.subr.mxu0 0.0
        %1912 = vmatpush1.xpose.msra.mxu0 0.0
        %1913 = vmatprep.subr.mxu0 0.0
        %1914 = vmatpush1.xpose.msra.mxu0 0.0
        %1915 = vmatprep.subr.mxu0 0.0
        %1916 = vmatpush1.xpose.msra.mxu0 0.0
        %1917 = vmatprep.subr.mxu0 0.0
        %1918 = vmatpush1.xpose.msra.mxu0 0.0
        %1919 = vmatprep.subr.mxu0 0.0
        %1920 = vmatpush1.xpose.msra.mxu0 0.0
        %1921 = vmatprep.subr.mxu0 0.0
        %1922 = vmatpush1.xpose.msra.mxu0 0.0
        %1923 = vmatprep.subr.mxu0 0.0
        %1924 = vmatpush1.xpose.msra.mxu0 0.0
        %1925 = vmatprep.subr.mxu0 0.0
        %1926 = vmatpush1.xpose.msra.mxu0 0.0
        %1927 = vmatprep.subr.mxu0 0.0
        %1928 = vmatpush1.xpose.msra.mxu0 0.0
        %1929 = vmatprep.subr.mxu0 0.0
        %1930 = vmatpush1.xpose.msra.mxu0 0.0
        %1931 = vmatprep.subr.mxu0 0.0
        %1932 = vmatpush1.xpose.msra.mxu0 0.0
        %1933 = vmatprep.subr.mxu0 0.0
        %1934 = vmatpush1.xpose.msra.mxu0 0.0
        %1935 = vmatprep.subr.mxu0 0.0
        %1936 = vmatpush1.xpose.msra.mxu0 0.0
        %1937 = vmatprep.subr.mxu0 0.0
        %1938 = vmatpush1.xpose.msra.mxu0 0.0
        %1939 = vmatprep.subr.mxu0 0.0
        %1940 = vmatpush1.xpose.msra.mxu0 0.0
        %1941 = vmatprep.subr.mxu0 0.0
        %1942 = vmatpush1.xpose.msra.mxu0 0.0
        %1943 = vmatprep.subr.mxu0 0.0
        %1944 = vmatpush1.xpose.msra.mxu0 0.0
        %1945 = vmatprep.subr.mxu0 0.0
        %1946 = vmatpush1.xpose.msra.mxu0 0.0
        %1947 = vmatprep.subr.mxu0 0.0
        %1948 = vmatpush1.xpose.msra.mxu0 0.0
        %1949 = vmatprep.subr.mxu0 0.0
        %1950 = vmatpush1.xpose.msra.mxu0 0.0
        %1951 = vmatprep.subr.mxu0 0.0
        %1952 = vmatpush1.xpose.msra.mxu0 0.0
        %1953 = vmatprep.subr.mxu0 0.0
        %1954 = vmatpush1.xpose.msra.mxu0 0.0
        %1955 = vmatprep.subr.mxu0 0.0
        %1956 = vmatpush1.xpose.msra.mxu0 0.0
        %1957 = vmatprep.mubr.f32.mxu0 0.0
        %1958 = vmatmul.mubr.f32.gmra.mrb[0].mxu0 %v1889
        %v1959 = vpop.f32.mrb[0].mxu0
        %v1960 = vadd.f32 0.0, %v1959
        %v1961 = vpop.f32.mrb[0].mxu0
        %1962 = vdwg.mxu0
        %v1963 = vmul.f32 %v1960, %v763
        %v1964 = vsel %vm686, %v1963, -inf
        %1965 = vmax.xlane.f32.xlu0 %v1964
        %v1966 = vpop.xlane.xlu0 %1965
        %v1967 = vsub.f32 %v1963, %v1966
        %v1968 = vmul.f32 %v1967, 1.442695
        %v1969 = vpow.pop %v1968
        %v1970 = vsel %vm686, %v1969, 0.0
        %1971 = vadd.xlane.f32.xlu0 %v1970
        %v1972 = vpop.xlane.xlu0 %1971
        %v1973 = vrcp.pop %v1972
        %v1974 = vmul.f32 %v1969, %v1973
        %1976 = vrot.lane.b32.xlu0 %v1720, 120
        %v1977 = vpop.permute.xlu0 %1976
        %v1980 = vsel %vm686, %v1974, 0
        %1982 = vmatprep.subr.mxu0 0.0
        %1983 = vmatpush1.msra.mxu0 %v1977
        %1984 = vmatprep.subr.mxu0 0.0
        %1985 = vmatpush1.msra.mxu0 0.0
        %1986 = vmatprep.subr.mxu0 0.0
        %1987 = vmatpush1.msra.mxu0 0.0
        %1988 = vmatprep.subr.mxu0 0.0
        %1989 = vmatpush1.msra.mxu0 0.0
        %1990 = vmatprep.subr.mxu0 0.0
        %1991 = vmatpush1.msra.mxu0 0.0
        %1992 = vmatprep.subr.mxu0 0.0
        %1993 = vmatpush1.msra.mxu0 0.0
        %1994 = vmatprep.subr.mxu0 0.0
        %1995 = vmatpush1.msra.mxu0 0.0
        %1996 = vmatprep.subr.mxu0 0.0
        %1997 = vmatpush1.msra.mxu0 0.0
        %1998 = vmatprep.subr.mxu0 0.0
        %1999 = vmatpush1.msra.mxu0 0.0
        %2000 = vmatprep.subr.mxu0 0.0
        %2001 = vmatpush1.msra.mxu0 0.0
        %2002 = vmatprep.subr.mxu0 0.0
        %2003 = vmatpush1.msra.mxu0 0.0
        %2004 = vmatprep.subr.mxu0 0.0
        %2005 = vmatpush1.msra.mxu0 0.0
        %2006 = vmatprep.subr.mxu0 0.0
        %2007 = vmatpush1.msra.mxu0 0.0
        %2008 = vmatprep.subr.mxu0 0.0
        %2009 = vmatpush1.msra.mxu0 0.0
        %2010 = vmatprep.subr.mxu0 0.0
        %2011 = vmatpush1.msra.mxu0 0.0
        %2012 = vmatprep.subr.mxu0 0.0
        %2013 = vmatpush1.msra.mxu0 0.0
        %2014 = vmatprep.subr.mxu0 0.0
        %2015 = vmatpush1.msra.mxu0 0.0
        %2016 = vmatprep.subr.mxu0 0.0
        %2017 = vmatpush1.msra.mxu0 0.0
        %2018 = vmatprep.subr.mxu0 0.0
        %2019 = vmatpush1.msra.mxu0 0.0
        %2020 = vmatprep.subr.mxu0 0.0
        %2021 = vmatpush1.msra.mxu0 0.0
        %2022 = vmatprep.subr.mxu0 0.0
        %2023 = vmatpush1.msra.mxu0 0.0
        %2024 = vmatprep.subr.mxu0 0.0
        %2025 = vmatpush1.msra.mxu0 0.0
        %2026 = vmatprep.subr.mxu0 0.0
        %2027 = vmatpush1.msra.mxu0 0.0
        %2028 = vmatprep.subr.mxu0 0.0
        %2029 = vmatpush1.msra.mxu0 0.0
        %2030 = vmatprep.subr.mxu0 0.0
        %2031 = vmatpush1.msra.mxu0 0.0
        %2032 = vmatprep.subr.mxu0 0.0
        %2033 = vmatpush1.msra.mxu0 0.0
        %2034 = vmatprep.subr.mxu0 0.0
        %2035 = vmatpush1.msra.mxu0 0.0
        %2036 = vmatprep.subr.mxu0 0.0
        %2037 = vmatpush1.msra.mxu0 0.0
        %2038 = vmatprep.subr.mxu0 0.0
        %2039 = vmatpush1.msra.mxu0 0.0
        %2040 = vmatprep.subr.mxu0 0.0
        %2041 = vmatpush1.msra.mxu0 0.0
        %2042 = vmatprep.subr.mxu0 0.0
        %2043 = vmatpush1.msra.mxu0 0.0
        %2044 = vmatprep.subr.mxu0 0.0
        %2045 = vmatpush1.msra.mxu0 0.0
        %2046 = vmatprep.mubr.f32.mxu0 0.0
        %2047 = vmatmul.mubr.f32.gmra.mrb[0].mxu0 %v1980
        %v2048 = vpop.f32.mrb[0].mxu0
        %v2049 = vadd.f32 0.0, %v2048
        %v2050 = vpop.f32.mrb[0].mxu0
        %2051 = vdwg.mxu0
        %2053 = vrot.lane.b32.xlu0 %v2049, 8
        %v2054 = vpop.permute.xlu0 %2053
        %2056 = vst.msk [vmem:[#allocation2] sm:$0xff] %vm1021, %v2054
        %2057 = vrot.lane.b32.xlu0 %v1640, 112
        %v2058 = vpop.permute.xlu0 %2057
        %2059 = vrot.lane.b32.xlu0 %v1557, 112
        %v2060 = vpop.permute.xlu0 %2059
        %v2061 = vsel %vm686, %v2058, 0
        %v2063 = vsel %vm686, %v2060, 0
        %2065 = vmatprep.subr.mxu0 0.0
        %2066 = vmatpush1.xpose.msra.mxu0 %v2063
        %2067 = vmatprep.subr.mxu0 0.0
        %2068 = vmatpush1.xpose.msra.mxu0 0.0
        %2069 = vmatprep.subr.mxu0 0.0
        %2070 = vmatpush1.xpose.msra.mxu0 0.0
        %2071 = vmatprep.subr.mxu0 0.0
        %2072 = vmatpush1.xpose.msra.mxu0 0.0
        %2073 = vmatprep.subr.mxu0 0.0
        %2074 = vmatpush1.xpose.msra.mxu0 0.0
        %2075 = vmatprep.subr.mxu0 0.0
        %2076 = vmatpush1.xpose.msra.mxu0 0.0
        %2077 = vmatprep.subr.mxu0 0.0
        %2078 = vmatpush1.xpose.msra.mxu0 0.0
        %2079 = vmatprep.subr.mxu0 0.0
        %2080 = vmatpush1.xpose.msra.mxu0 0.0
        %2081 = vmatprep.subr.mxu0 0.0
        %2082 = vmatpush1.xpose.msra.mxu0 0.0
        %2083 = vmatprep.subr.mxu0 0.0
        %2084 = vmatpush1.xpose.msra.mxu0 0.0
        %2085 = vmatprep.subr.mxu0 0.0
        %2086 = vmatpush1.xpose.msra.mxu0 0.0
        %2087 = vmatprep.subr.mxu0 0.0
        %2088 = vmatpush1.xpose.msra.mxu0 0.0
        %2089 = vmatprep.subr.mxu0 0.0
        %2090 = vmatpush1.xpose.msra.mxu0 0.0
        %2091 = vmatprep.subr.mxu0 0.0
        %2092 = vmatpush1.xpose.msra.mxu0 0.0
        %2093 = vmatprep.subr.mxu0 0.0
        %2094 = vmatpush1.xpose.msra.mxu0 0.0
        %2095 = vmatprep.subr.mxu0 0.0
        %2096 = vmatpush1.xpose.msra.mxu0 0.0
        %2097 = vmatprep.subr.mxu0 0.0
        %2098 = vmatpush1.xpose.msra.mxu0 0.0
        %2099 = vmatprep.subr.mxu0 0.0
        %2100 = vmatpush1.xpose.msra.mxu0 0.0
        %2101 = vmatprep.subr.mxu0 0.0
        %2102 = vmatpush1.xpose.msra.mxu0 0.0
        %2103 = vmatprep.subr.mxu0 0.0
        %2104 = vmatpush1.xpose.msra.mxu0 0.0
        %2105 = vmatprep.subr.mxu0 0.0
        %2106 = vmatpush1.xpose.msra.mxu0 0.0
        %2107 = vmatprep.subr.mxu0 0.0
        %2108 = vmatpush1.xpose.msra.mxu0 0.0
        %2109 = vmatprep.subr.mxu0 0.0
        %2110 = vmatpush1.xpose.msra.mxu0 0.0
        %2111 = vmatprep.subr.mxu0 0.0
        %2112 = vmatpush1.xpose.msra.mxu0 0.0
        %2113 = vmatprep.subr.mxu0 0.0
        %2114 = vmatpush1.xpose.msra.mxu0 0.0
        %2115 = vmatprep.subr.mxu0 0.0
        %2116 = vmatpush1.xpose.msra.mxu0 0.0
        %2117 = vmatprep.subr.mxu0 0.0
        %2118 = vmatpush1.xpose.msra.mxu0 0.0
        %2119 = vmatprep.subr.mxu0 0.0
        %2120 = vmatpush1.xpose.msra.mxu0 0.0
        %2121 = vmatprep.subr.mxu0 0.0
        %2122 = vmatpush1.xpose.msra.mxu0 0.0
        %2123 = vmatprep.subr.mxu0 0.0
        %2124 = vmatpush1.xpose.msra.mxu0 0.0
        %2125 = vmatprep.subr.mxu0 0.0
        %2126 = vmatpush1.xpose.msra.mxu0 0.0
        %2127 = vmatprep.subr.mxu0 0.0
        %2128 = vmatpush1.xpose.msra.mxu0 0.0
        %2129 = vmatprep.mubr.f32.mxu0 0.0
        %2130 = vmatmul.mubr.f32.gmra.mrb[0].mxu0 %v2061
        %v2131 = vpop.f32.mrb[0].mxu0
        %v2132 = vadd.f32 0.0, %v2131
        %v2133 = vpop.f32.mrb[0].mxu0
        %2134 = vdwg.mxu0
        %v2135 = vmul.f32 %v2132, %v763
        %v2136 = vsel %vm686, %v2135, -inf
        %2137 = vmax.xlane.f32.xlu0 %v2136
        %v2138 = vpop.xlane.xlu0 %2137
        %v2139 = vsub.f32 %v2135, %v2138
        %v2140 = vmul.f32 %v2139, 1.442695
        %v2141 = vpow.pop %v2140
        %v2142 = vsel %vm686, %v2141, 0.0
        %2143 = vadd.xlane.f32.xlu0 %v2142
        %v2144 = vpop.xlane.xlu0 %2143
        %v2145 = vrcp.pop %v2144
        %v2146 = vmul.f32 %v2141, %v2145
        %2147 = vrot.lane.b32.xlu0 %v1720, 112
        %v2148 = vpop.permute.xlu0 %2147
        %v2151 = vsel %vm686, %v2146, 0
        %2153 = vmatprep.subr.mxu0 0.0
        %2154 = vmatpush1.msra.mxu0 %v2148
        %2155 = vmatprep.subr.mxu0 0.0
        %2156 = vmatpush1.msra.mxu0 0.0
        %2157 = vmatprep.subr.mxu0 0.0
        %2158 = vmatpush1.msra.mxu0 0.0
        %2159 = vmatprep.subr.mxu0 0.0
        %2160 = vmatpush1.msra.mxu0 0.0
        %2161 = vmatprep.subr.mxu0 0.0
        %2162 = vmatpush1.msra.mxu0 0.0
        %2163 = vmatprep.subr.mxu0 0.0
        %2164 = vmatpush1.msra.mxu0 0.0
        %2165 = vmatprep.subr.mxu0 0.0
        %2166 = vmatpush1.msra.mxu0 0.0
        %2167 = vmatprep.subr.mxu0 0.0
        %2168 = vmatpush1.msra.mxu0 0.0
        %2169 = vmatprep.subr.mxu0 0.0
        %2170 = vmatpush1.msra.mxu0 0.0
        %2171 = vmatprep.subr.mxu0 0.0
        %2172 = vmatpush1.msra.mxu0 0.0
        %2173 = vmatprep.subr.mxu0 0.0
        %2174 = vmatpush1.msra.mxu0 0.0
        %2175 = vmatprep.subr.mxu0 0.0
        %2176 = vmatpush1.msra.mxu0 0.0
        %2177 = vmatprep.subr.mxu0 0.0
        %2178 = vmatpush1.msra.mxu0 0.0
        %2179 = vmatprep.subr.mxu0 0.0
        %2180 = vmatpush1.msra.mxu0 0.0
        %2181 = vmatprep.subr.mxu0 0.0
        %2182 = vmatpush1.msra.mxu0 0.0
        %2183 = vmatprep.subr.mxu0 0.0
        %2184 = vmatpush1.msra.mxu0 0.0
        %2185 = vmatprep.subr.mxu0 0.0
        %2186 = vmatpush1.msra.mxu0 0.0
        %2187 = vmatprep.subr.mxu0 0.0
        %2188 = vmatpush1.msra.mxu0 0.0
        %2189 = vmatprep.subr.mxu0 0.0
        %2190 = vmatpush1.msra.mxu0 0.0
        %2191 = vmatprep.subr.mxu0 0.0
        %2192 = vmatpush1.msra.mxu0 0.0
        %2193 = vmatprep.subr.mxu0 0.0
        %2194 = vmatpush1.msra.mxu0 0.0
        %2195 = vmatprep.subr.mxu0 0.0
        %2196 = vmatpush1.msra.mxu0 0.0
        %2197 = vmatprep.subr.mxu0 0.0
        %2198 = vmatpush1.msra.mxu0 0.0
        %2199 = vmatprep.subr.mxu0 0.0
        %2200 = vmatpush1.msra.mxu0 0.0
        %2201 = vmatprep.subr.mxu0 0.0
        %2202 = vmatpush1.msra.mxu0 0.0
        %2203 = vmatprep.subr.mxu0 0.0
        %2204 = vmatpush1.msra.mxu0 0.0
        %2205 = vmatprep.subr.mxu0 0.0
        %2206 = vmatpush1.msra.mxu0 0.0
        %2207 = vmatprep.subr.mxu0 0.0
        %2208 = vmatpush1.msra.mxu0 0.0
        %2209 = vmatprep.subr.mxu0 0.0
        %2210 = vmatpush1.msra.mxu0 0.0
        %2211 = vmatprep.subr.mxu0 0.0
        %2212 = vmatpush1.msra.mxu0 0.0
        %2213 = vmatprep.subr.mxu0 0.0
        %2214 = vmatpush1.msra.mxu0 0.0
        %2215 = vmatprep.subr.mxu0 0.0
        %2216 = vmatpush1.msra.mxu0 0.0
        %2217 = vmatprep.mubr.f32.mxu0 0.0
        %2218 = vmatmul.mubr.f32.gmra.mrb[0].mxu0 %v2151
        %v2219 = vpop.f32.mrb[0].mxu0
        %v2220 = vadd.f32 0.0, %v2219
        %v2221 = vpop.f32.mrb[0].mxu0
        %2222 = vdwg.mxu0
        %2224 = vrot.lane.b32.xlu0 %v2220, 16
        %v2225 = vpop.permute.xlu0 %2224
        %2227 = vst.msk [vmem:[#allocation2] sm:$0xff] %vm1193, %v2225
        %2228 = vrot.lane.b32.xlu0 %v1640, 104
        %v2229 = vpop.permute.xlu0 %2228
        %2230 = vrot.lane.b32.xlu0 %v1557, 104
        %v2231 = vpop.permute.xlu0 %2230
        %v2232 = vsel %vm686, %v2229, 0
        %v2234 = vsel %vm686, %v2231, 0
        %2236 = vmatprep.subr.mxu0 0.0
        %2237 = vmatpush1.xpose.msra.mxu0 %v2234
        %2238 = vmatprep.subr.mxu0 0.0
        %2239 = vmatpush1.xpose.msra.mxu0 0.0
        %2240 = vmatprep.subr.mxu0 0.0
        %2241 = vmatpush1.xpose.msra.mxu0 0.0
        %2242 = vmatprep.subr.mxu0 0.0
        %2243 = vmatpush1.xpose.msra.mxu0 0.0
        %2244 = vmatprep.subr.mxu0 0.0
        %2245 = vmatpush1.xpose.msra.mxu0 0.0
        %2246 = vmatprep.subr.mxu0 0.0
        %2247 = vmatpush1.xpose.msra.mxu0 0.0
        %2248 = vmatprep.subr.mxu0 0.0
        %2249 = vmatpush1.xpose.msra.mxu0 0.0
        %2250 = vmatprep.subr.mxu0 0.0
        %2251 = vmatpush1.xpose.msra.mxu0 0.0
        %2252 = vmatprep.subr.mxu0 0.0
        %2253 = vmatpush1.xpose.msra.mxu0 0.0
        %2254 = vmatprep.subr.mxu0 0.0
        %2255 = vmatpush1.xpose.msra.mxu0 0.0
        %2256 = vmatprep.subr.mxu0 0.0
        %2257 = vmatpush1.xpose.msra.mxu0 0.0
        %2258 = vmatprep.subr.mxu0 0.0
        %2259 = vmatpush1.xpose.msra.mxu0 0.0
        %2260 = vmatprep.subr.mxu0 0.0
        %2261 = vmatpush1.xpose.msra.mxu0 0.0
        %2262 = vmatprep.subr.mxu0 0.0
        %2263 = vmatpush1.xpose.msra.mxu0 0.0
        %2264 = vmatprep.subr.mxu0 0.0
        %2265 = vmatpush1.xpose.msra.mxu0 0.0
        %2266 = vmatprep.subr.mxu0 0.0
        %2267 = vmatpush1.xpose.msra.mxu0 0.0
        %2268 = vmatprep.subr.mxu0 0.0
        %2269 = vmatpush1.xpose.msra.mxu0 0.0
        %2270 = vmatprep.subr.mxu0 0.0
        %2271 = vmatpush1.xpose.msra.mxu0 0.0
        %2272 = vmatprep.subr.mxu0 0.0
        %2273 = vmatpush1.xpose.msra.mxu0 0.0
        %2274 = vmatprep.subr.mxu0 0.0
        %2275 = vmatpush1.xpose.msra.mxu0 0.0
        %2276 = vmatprep.subr.mxu0 0.0
        %2277 = vmatpush1.xpose.msra.mxu0 0.0
        %2278 = vmatprep.subr.mxu0 0.0
        %2279 = vmatpush1.xpose.msra.mxu0 0.0
        %2280 = vmatprep.subr.mxu0 0.0
        %2281 = vmatpush1.xpose.msra.mxu0 0.0
        %2282 = vmatprep.subr.mxu0 0.0
        %2283 = vmatpush1.xpose.msra.mxu0 0.0
        %2284 = vmatprep.subr.mxu0 0.0
        %2285 = vmatpush1.xpose.msra.mxu0 0.0
        %2286 = vmatprep.subr.mxu0 0.0
        %2287 = vmatpush1.xpose.msra.mxu0 0.0
        %2288 = vmatprep.subr.mxu0 0.0
        %2289 = vmatpush1.xpose.msra.mxu0 0.0
        %2290 = vmatprep.subr.mxu0 0.0
        %2291 = vmatpush1.xpose.msra.mxu0 0.0
        %2292 = vmatprep.subr.mxu0 0.0
        %2293 = vmatpush1.xpose.msra.mxu0 0.0
        %2294 = vmatprep.subr.mxu0 0.0
        %2295 = vmatpush1.xpose.msra.mxu0 0.0
        %2296 = vmatprep.subr.mxu0 0.0
        %2297 = vmatpush1.xpose.msra.mxu0 0.0
        %2298 = vmatprep.subr.mxu0 0.0
        %2299 = vmatpush1.xpose.msra.mxu0 0.0
        %2300 = vmatprep.mubr.f32.mxu0 0.0
        %2301 = vmatmul.mubr.f32.gmra.mrb[0].mxu0 %v2232
        %v2302 = vpop.f32.mrb[0].mxu0
        %v2303 = vadd.f32 0.0, %v2302
        %v2304 = vpop.f32.mrb[0].mxu0
        %2305 = vdwg.mxu0
        %v2306 = vmul.f32 %v2303, %v763
        %v2307 = vsel %vm686, %v2306, -inf
        %2308 = vmax.xlane.f32.xlu0 %v2307
        %v2309 = vpop.xlane.xlu0 %2308
        %v2310 = vsub.f32 %v2306, %v2309
        %v2311 = vmul.f32 %v2310, 1.442695
        %v2312 = vpow.pop %v2311
        %v2313 = vsel %vm686, %v2312, 0.0
        %2314 = vadd.xlane.f32.xlu0 %v2313
        %v2315 = vpop.xlane.xlu0 %2314
        %v2316 = vrcp.pop %v2315
        %v2317 = vmul.f32 %v2312, %v2316
        %2318 = vrot.lane.b32.xlu0 %v1720, 104
        %v2319 = vpop.permute.xlu0 %2318
        %v2322 = vsel %vm686, %v2317, 0
        %2324 = vmatprep.subr.mxu0 0.0
        %2325 = vmatpush1.msra.mxu0 %v2319
        %2326 = vmatprep.subr.mxu0 0.0
        %2327 = vmatpush1.msra.mxu0 0.0
        %2328 = vmatprep.subr.mxu0 0.0
        %2329 = vmatpush1.msra.mxu0 0.0
        %2330 = vmatprep.subr.mxu0 0.0
        %2331 = vmatpush1.msra.mxu0 0.0
        %2332 = vmatprep.subr.mxu0 0.0
        %2333 = vmatpush1.msra.mxu0 0.0
        %2334 = vmatprep.subr.mxu0 0.0
        %2335 = vmatpush1.msra.mxu0 0.0
        %2336 = vmatprep.subr.mxu0 0.0
        %2337 = vmatpush1.msra.mxu0 0.0
        %2338 = vmatprep.subr.mxu0 0.0
        %2339 = vmatpush1.msra.mxu0 0.0
        %2340 = vmatprep.subr.mxu0 0.0
        %2341 = vmatpush1.msra.mxu0 0.0
        %2342 = vmatprep.subr.mxu0 0.0
        %2343 = vmatpush1.msra.mxu0 0.0
        %2344 = vmatprep.subr.mxu0 0.0
        %2345 = vmatpush1.msra.mxu0 0.0
        %2346 = vmatprep.subr.mxu0 0.0
        %2347 = vmatpush1.msra.mxu0 0.0
        %2348 = vmatprep.subr.mxu0 0.0
        %2349 = vmatpush1.msra.mxu0 0.0
        %2350 = vmatprep.subr.mxu0 0.0
        %2351 = vmatpush1.msra.mxu0 0.0
        %2352 = vmatprep.subr.mxu0 0.0
        %2353 = vmatpush1.msra.mxu0 0.0
        %2354 = vmatprep.subr.mxu0 0.0
        %2355 = vmatpush1.msra.mxu0 0.0
        %2356 = vmatprep.subr.mxu0 0.0
        %2357 = vmatpush1.msra.mxu0 0.0
        %2358 = vmatprep.subr.mxu0 0.0
        %2359 = vmatpush1.msra.mxu0 0.0
        %2360 = vmatprep.subr.mxu0 0.0
        %2361 = vmatpush1.msra.mxu0 0.0
        %2362 = vmatprep.subr.mxu0 0.0
        %2363 = vmatpush1.msra.mxu0 0.0
        %2364 = vmatprep.subr.mxu0 0.0
        %2365 = vmatpush1.msra.mxu0 0.0
        %2366 = vmatprep.subr.mxu0 0.0
        %2367 = vmatpush1.msra.mxu0 0.0
        %2368 = vmatprep.subr.mxu0 0.0
        %2369 = vmatpush1.msra.mxu0 0.0
        %2370 = vmatprep.subr.mxu0 0.0
        %2371 = vmatpush1.msra.mxu0 0.0
        %2372 = vmatprep.subr.mxu0 0.0
        %2373 = vmatpush1.msra.mxu0 0.0
        %2374 = vmatprep.subr.mxu0 0.0
        %2375 = vmatpush1.msra.mxu0 0.0
        %2376 = vmatprep.subr.mxu0 0.0
        %2377 = vmatpush1.msra.mxu0 0.0
        %2378 = vmatprep.subr.mxu0 0.0
        %2379 = vmatpush1.msra.mxu0 0.0
        %2380 = vmatprep.subr.mxu0 0.0
        %2381 = vmatpush1.msra.mxu0 0.0
        %2382 = vmatprep.subr.mxu0 0.0
        %2383 = vmatpush1.msra.mxu0 0.0
        %2384 = vmatprep.subr.mxu0 0.0
        %2385 = vmatpush1.msra.mxu0 0.0
        %2386 = vmatprep.subr.mxu0 0.0
        %2387 = vmatpush1.msra.mxu0 0.0
        %2388 = vmatprep.mubr.f32.mxu0 0.0
        %2389 = vmatmul.mubr.f32.gmra.mrb[0].mxu0 %v2322
        %v2390 = vpop.f32.mrb[0].mxu0
        %v2391 = vadd.f32 0.0, %v2390
        %v2392 = vpop.f32.mrb[0].mxu0
        %2393 = vdwg.mxu0
        %2395 = vrot.lane.b32.xlu0 %v2391, 24
        %v2396 = vpop.permute.xlu0 %2395
        %2398 = vst.msk [vmem:[#allocation2] sm:$0xff] %vm1365, %v2396
        %v2399 = vld [vmem:[#allocation2] sm:$0xff]
        %s2400 = scalar_lea.vmem %s5, 96
        %v2401 = vld [vmem:[%s2400] sm:$0xff]
        %v2402 = vld [vmem:[%s2400 + $0x8] sm:$0xff]
        %v2403 = vld [vmem:[%s2400 + $0x10] sm:$0xff]
        %v2404 = vld [vmem:[%s2400 + $0x18] sm:$0xff]
        %v2405 = vld [vmem:[%s6 + $0x3] sm:$0x1]
        %v2406 = vlaneseq
        %v2407 = vshrl.u32 %v2406, 7
        %v2408 = vsub.s32 0, %v2407
        %v2409 = vrot.slane %v2405, %v2408
        %v2411 = vsel %vm417, %v2399, 0
        %2413 = vmatprep.subr.mxu0 0.0
        %2414 = vmatpush1.msra.mxu0 %v2401
        %2415 = vmatprep.subr.mxu0 0.0
        %2416 = vmatpush1.msra.mxu0 %v2402
        %2417 = vmatprep.subr.mxu0 0.0
        %2418 = vmatpush1.msra.mxu0 %v2403
        %2419 = vmatprep.subr.mxu0 0.0
        %2420 = vmatpush1.msra.mxu0 %v2404
        %2421 = vmatprep.subr.mxu0 0.0
        %2422 = vmatpush1.msra.mxu0 0.0
        %2423 = vmatprep.subr.mxu0 0.0
        %2424 = vmatpush1.msra.mxu0 0.0
        %2425 = vmatprep.subr.mxu0 0.0
        %2426 = vmatpush1.msra.mxu0 0.0
        %2427 = vmatprep.subr.mxu0 0.0
        %2428 = vmatpush1.msra.mxu0 0.0
        %2429 = vmatprep.subr.mxu0 0.0
        %2430 = vmatpush1.msra.mxu0 0.0
        %2431 = vmatprep.subr.mxu0 0.0
        %2432 = vmatpush1.msra.mxu0 0.0
        %2433 = vmatprep.subr.mxu0 0.0
        %2434 = vmatpush1.msra.mxu0 0.0
        %2435 = vmatprep.subr.mxu0 0.0
        %2436 = vmatpush1.msra.mxu0 0.0
        %2437 = vmatprep.subr.mxu0 0.0
        %2438 = vmatpush1.msra.mxu0 0.0
        %2439 = vmatprep.subr.mxu0 0.0
        %2440 = vmatpush1.msra.mxu0 0.0
        %2441 = vmatprep.subr.mxu0 0.0
        %2442 = vmatpush1.msra.mxu0 0.0
        %2443 = vmatprep.subr.mxu0 0.0
        %2444 = vmatpush1.msra.mxu0 0.0
        %2445 = vmatprep.subr.mxu0 0.0
        %2446 = vmatpush1.msra.mxu0 0.0
        %2447 = vmatprep.subr.mxu0 0.0
        %2448 = vmatpush1.msra.mxu0 0.0
        %2449 = vmatprep.subr.mxu0 0.0
        %2450 = vmatpush1.msra.mxu0 0.0
        %2451 = vmatprep.subr.mxu0 0.0
        %2452 = vmatpush1.msra.mxu0 0.0
        %2453 = vmatprep.subr.mxu0 0.0
        %2454 = vmatpush1.msra.mxu0 0.0
        %2455 = vmatprep.subr.mxu0 0.0
        %2456 = vmatpush1.msra.mxu0 0.0
        %2457 = vmatprep.subr.mxu0 0.0
        %2458 = vmatpush1.msra.mxu0 0.0
        %2459 = vmatprep.subr.mxu0 0.0
        %2460 = vmatpush1.msra.mxu0 0.0
        %2461 = vmatprep.subr.mxu0 0.0
        %2462 = vmatpush1.msra.mxu0 0.0
        %2463 = vmatprep.subr.mxu0 0.0
        %2464 = vmatpush1.msra.mxu0 0.0
        %2465 = vmatprep.subr.mxu0 0.0
        %2466 = vmatpush1.msra.mxu0 0.0
        %2467 = vmatprep.subr.mxu0 0.0
        %2468 = vmatpush1.msra.mxu0 0.0
        %2469 = vmatprep.subr.mxu0 0.0
        %2470 = vmatpush1.msra.mxu0 0.0
        %2471 = vmatprep.subr.mxu0 0.0
        %2472 = vmatpush1.msra.mxu0 0.0
        %2473 = vmatprep.subr.mxu0 0.0
        %2474 = vmatpush1.msra.mxu0 0.0
        %2475 = vmatprep.subr.mxu0 0.0
        %2476 = vmatpush1.msra.mxu0 0.0
        %2477 = vmatprep.mubr.f32.mxu0 0.0
        %2478 = vmatmul.mubr.f32.gmra.mrb[0].mxu0 %v2411
        %v2479 = vpop.f32.mrb[0].mxu0
        %v2480 = vadd.f32 %v2409, %v2479
        %v2481 = vpop.f32.mrb[0].mxu0
        %2482 = vdwg.mxu0
        %v2483 = vadd.f32 %v1451, %v2480
        %s2484 = sld [smem:[#allocation3 + $0x4]]
        %s2485 = sld [smem:[#allocation3 + $0x5]]
        %v2486 = vsel %vm417, %v2483, 0.0
        %2487 = vadd.xlane.f32.xlu0 %v2486
        %v2488 = vpop.xlane.xlu0 %2487
        %v2489 = vmul.f32 %v2488, %v421
        %v2490 = vsub.f32 %v2483, %v2489
        %v2491 = vmul.f32 %v2490, %v2490
        %v2492 = vsel %vm417, %v2491, 0.0
        %2493 = vadd.xlane.f32.xlu0 %v2492
        %v2494 = vpop.xlane.xlu0 %2493
        %v2495 = vmul.f32 %v2494, %v428
        %v2496 = vrsqrt.pop %v2495
        %v2497 = vmul.f32 %v2495, %v2496
        %vm2498 = vcmp.eq.f32.partialorder %v2495, inf
        %v2499 = vsel %vm2498, %v2495, %v2497
        %vm2500 = vcmp.eq.f32.partialorder %v2495, 0.0
        %v2501 = vand.u32 %v2495, 2147483648
        %v2502 = vsel %vm2500, %v2501, %v2499
        %v2503 = vadd.f32 %v2502, 1e-06
        %v2504 = vrcp.pop %v2503
        %v2505 = vmul.f32 %v2490, %v2504
        %v2506 = vstv %s2484
        %v2507 = vmul.f32 %v2506, %v2505
        %v2508 = vstv %s2485
        %v2509 = vadd.f32 %v2507, %v2508
        %v2510 = vld [vmem:[%s7] sm:$0xff]
        %v2511 = vld [vmem:[%s7 + $0x8] sm:$0xff]
        %v2512 = vld [vmem:[%s7 + $0x10] sm:$0xff]
        %v2513 = vld [vmem:[%s7 + $0x18] sm:$0xff]
        %v2514 = vld [vmem:[%s8] sm:$0x1]
        %v2516 = vlaneseq
        %v2517 = vshrl.u32 %v2516, 7
        %v2518 = vsub.s32 0, %v2517
        %v2519 = vrot.slane %v2514, %v2518
        %v2522 = vsel %vm417, %v2509, 0
        %2524 = vmatprep.subr.mxu0 0.0
        %2525 = vmatpush1.msra.mxu0 %v2510
        %2526 = vmatprep.subr.mxu0 0.0
        %2527 = vmatpush1.msra.mxu0 %v2511
        %2528 = vmatprep.subr.mxu0 0.0
        %2529 = vmatpush1.msra.mxu0 %v2512
        %2530 = vmatprep.subr.mxu0 0.0
        %2531 = vmatpush1.msra.mxu0 %v2513
        %2532 = vmatprep.subr.mxu0 0.0
        %2533 = vmatpush1.msra.mxu0 0.0
        %2534 = vmatprep.subr.mxu0 0.0
        %2535 = vmatpush1.msra.mxu0 0.0
        %2536 = vmatprep.subr.mxu0 0.0
        %2537 = vmatpush1.msra.mxu0 0.0
        %2538 = vmatprep.subr.mxu0 0.0
        %2539 = vmatpush1.msra.mxu0 0.0
        %2540 = vmatprep.subr.mxu0 0.0
        %2541 = vmatpush1.msra.mxu0 0.0
        %2542 = vmatprep.subr.mxu0 0.0
        %2543 = vmatpush1.msra.mxu0 0.0
        %2544 = vmatprep.subr.mxu0 0.0
        %2545 = vmatpush1.msra.mxu0 0.0
        %2546 = vmatprep.subr.mxu0 0.0
        %2547 = vmatpush1.msra.mxu0 0.0
        %2548 = vmatprep.subr.mxu0 0.0
        %2549 = vmatpush1.msra.mxu0 0.0
        %2550 = vmatprep.subr.mxu0 0.0
        %2551 = vmatpush1.msra.mxu0 0.0
        %2552 = vmatprep.subr.mxu0 0.0
        %2553 = vmatpush1.msra.mxu0 0.0
        %2554 = vmatprep.subr.mxu0 0.0
        %2555 = vmatpush1.msra.mxu0 0.0
        %2556 = vmatprep.subr.mxu0 0.0
        %2557 = vmatpush1.msra.mxu0 0.0
        %2558 = vmatprep.subr.mxu0 0.0
        %2559 = vmatpush1.msra.mxu0 0.0
        %2560 = vmatprep.subr.mxu0 0.0
        %2561 = vmatpush1.msra.mxu0 0.0
        %2562 = vmatprep.subr.mxu0 0.0
        %2563 = vmatpush1.msra.mxu0 0.0
        %2564 = vmatprep.subr.mxu0 0.0
        %2565 = vmatpush1.msra.mxu0 0.0
        %2566 = vmatprep.subr.mxu0 0.0
        %2567 = vmatpush1.msra.mxu0 0.0
        %2568 = vmatprep.subr.mxu0 0.0
        %2569 = vmatpush1.msra.mxu0 0.0
        %2570 = vmatprep.subr.mxu0 0.0
        %2571 = vmatpush1.msra.mxu0 0.0
        %2572 = vmatprep.subr.mxu0 0.0
        %2573 = vmatpush1.msra.mxu0 0.0
        %2574 = vmatprep.subr.mxu0 0.0
        %2575 = vmatpush1.msra.mxu0 0.0
        %2576 = vmatprep.subr.mxu0 0.0
        %2577 = vmatpush1.msra.mxu0 0.0
        %2578 = vmatprep.subr.mxu0 0.0
        %2579 = vmatpush1.msra.mxu0 0.0
        %2580 = vmatprep.subr.mxu0 0.0
        %2581 = vmatpush1.msra.mxu0 0.0
        %2582 = vmatprep.subr.mxu0 0.0
        %2583 = vmatpush1.msra.mxu0 0.0
        %2584 = vmatprep.subr.mxu0 0.0
        %2585 = vmatpush1.msra.mxu0 0.0
        %2586 = vmatprep.subr.mxu0 0.0
        %2587 = vmatpush1.msra.mxu0 0.0
        %2588 = vmatprep.mubr.f32.mxu0 0.0
        %2589 = vmatmul.mubr.f32.gmra.mrb[0].mxu0 %v2522
        %v2590 = vpop.f32.mrb[0].mxu0
        %v2591 = vadd.f32 %v2519, %v2590
        %v2592 = vpop.f32.mrb[0].mxu0
        %2593 = vdwg.mxu0
        %v2594 = vmax.f32 %v2591, 0.0
        %v2595 = vld [vmem:[%s9] sm:$0xff]
        %v2596 = vld [vmem:[%s9 + $0x8] sm:$0xff]
        %v2597 = vld [vmem:[%s9 + $0x10] sm:$0xff]
        %v2598 = vld [vmem:[%s9 + $0x18] sm:$0xff]
        %v2599 = vld [vmem:[%s9 + $0x20] sm:$0xff]
        %v2600 = vld [vmem:[%s9 + $0x28] sm:$0xff]
        %v2601 = vld [vmem:[%s9 + $0x30] sm:$0xff]
        %v2602 = vld [vmem:[%s9 + $0x38] sm:$0xff]
        %vm2603 = vcmask 523264
        %v2605 = vsel %vm2603, %v2594, 0
        %2607 = vmatprep.subr.mxu0 0.0
        %2608 = vmatpush1.msra.mxu0 %v2595
        %2609 = vmatprep.subr.mxu0 0.0
        %2610 = vmatpush1.msra.mxu0 %v2596
        %2611 = vmatprep.subr.mxu0 0.0
        %2612 = vmatpush1.msra.mxu0 %v2597
        %2613 = vmatprep.subr.mxu0 0.0
        %2614 = vmatpush1.msra.mxu0 %v2598
        %2615 = vmatprep.subr.mxu0 0.0
        %2616 = vmatpush1.msra.mxu0 %v2599
        %2617 = vmatprep.subr.mxu0 0.0
        %2618 = vmatpush1.msra.mxu0 %v2600
        %2619 = vmatprep.subr.mxu0 0.0
        %2620 = vmatpush1.msra.mxu0 %v2601
        %2621 = vmatprep.subr.mxu0 0.0
        %2622 = vmatpush1.msra.mxu0 %v2602
        %2623 = vmatprep.subr.mxu0 0.0
        %2624 = vmatpush1.msra.mxu0 0.0
        %2625 = vmatprep.subr.mxu0 0.0
        %2626 = vmatpush1.msra.mxu0 0.0
        %2627 = vmatprep.subr.mxu0 0.0
        %2628 = vmatpush1.msra.mxu0 0.0
        %2629 = vmatprep.subr.mxu0 0.0
        %2630 = vmatpush1.msra.mxu0 0.0
        %2631 = vmatprep.subr.mxu0 0.0
        %2632 = vmatpush1.msra.mxu0 0.0
        %2633 = vmatprep.subr.mxu0 0.0
        %2634 = vmatpush1.msra.mxu0 0.0
        %2635 = vmatprep.subr.mxu0 0.0
        %2636 = vmatpush1.msra.mxu0 0.0
        %2637 = vmatprep.subr.mxu0 0.0
        %2638 = vmatpush1.msra.mxu0 0.0
        %2639 = vmatprep.subr.mxu0 0.0
        %2640 = vmatpush1.msra.mxu0 0.0
        %2641 = vmatprep.subr.mxu0 0.0
        %2642 = vmatpush1.msra.mxu0 0.0
        %2643 = vmatprep.subr.mxu0 0.0
        %2644 = vmatpush1.msra.mxu0 0.0
        %2645 = vmatprep.subr.mxu0 0.0
        %2646 = vmatpush1.msra.mxu0 0.0
        %2647 = vmatprep.subr.mxu0 0.0
        %2648 = vmatpush1.msra.mxu0 0.0
        %2649 = vmatprep.subr.mxu0 0.0
        %2650 = vmatpush1.msra.mxu0 0.0
        %2651 = vmatprep.subr.mxu0 0.0
        %2652 = vmatpush1.msra.mxu0 0.0
        %2653 = vmatprep.subr.mxu0 0.0
        %2654 = vmatpush1.msra.mxu0 0.0
        %2655 = vmatprep.subr.mxu0 0.0
        %2656 = vmatpush1.msra.mxu0 0.0
        %2657 = vmatprep.subr.mxu0 0.0
        %2658 = vmatpush1.msra.mxu0 0.0
        %2659 = vmatprep.subr.mxu0 0.0
        %2660 = vmatpush1.msra.mxu0 0.0
        %2661 = vmatprep.subr.mxu0 0.0
        %2662 = vmatpush1.msra.mxu0 0.0
        %2663 = vmatprep.subr.mxu0 0.0
        %2664 = vmatpush1.msra.mxu0 0.0
        %2665 = vmatprep.subr.mxu0 0.0
        %2666 = vmatpush1.msra.mxu0 0.0
        %2667 = vmatprep.subr.mxu0 0.0
        %2668 = vmatpush1.msra.mxu0 0.0
        %2669 = vmatprep.subr.mxu0 0.0
        %2670 = vmatpush1.msra.mxu0 0.0
        %2671 = vmatprep.mubr.f32.mxu0 0.0
        %2672 = vmatmul.mubr.f32.gmra.mrb[0].mxu0 %v2605
        %v2673 = vpop.f32.mrb[0].mxu0
        %v2674 = vadd.f32 0.0, %v2673
        %v2675 = vpop.f32.mrb[0].mxu0
        %2676 = vdwg.mxu0
        %v2677 = vadd.f32 %v2483, %v2674
        %v2678 = vld [vmem:[%s10] sm:$0x1]
        %v2680 = vlaneseq
        %v2681 = vshrl.u32 %v2680, 7
        %v2682 = vsub.s32 0, %v2681
        %v2683 = vrot.slane %v2678, %v2682
        %v2685 = vadd.f32 %v2677, %v2683
        %2686 = vst.msk [vmem:[%s404] sm:$0xff] %vm417, %v2685
        %s2687 = sand.u32 %s275, 1
        %s2688 = scalar_lea.sflag [#allocation4], %s2687
        %s2689 = sand.u32 %s275, 1
        %s2690 = smul.addr %s2689, 8
        %s2691 = scalar_lea.vmem [#allocation6], %s2690
        // Predicated region
        $region69: #{decoder_block.1} parent=63 // pred_check
          %p2692 = pneg %p285
        $region70: #{decoder_block.1} parent=63 // pred_check_branch
          %2694 = sbr.rel (%p2692) target = $region72
        $region71: #{decoder_block.1} parent=63 // pred_region
          %s2696 = ssub.s32 128, 128
          %2697 = vsyncadd %s2688, %s2696
          %s2698 = smul.addr %s26, 128
          %s2699 = scalar_lea.hbm %s11, %s2698
          %s2701 = sshll.u32 %s2691, 4
          %s2702 = int_to_ptr.vmem [resolvable:$true] %s2701
          %2704 = dma.vmem_to_hbm [thread:$0]  %s2702, 128, %s2699, %s2688
        $region72: #{decoder_block.1} parent=63 // pred_fallthru
          _
      $region64: #{decoder_block.1} parent=5 // pred_fallthru
        _
      %p2705 = scmp.le.s32.totalorder 2, %s21
      // Predicated region
      $region73: #{decoder_block.1} parent=5 // pred_check
        %p2706 = pneg %p2705
      $region74: #{decoder_block.1} parent=5 // pred_check_branch
        %2708 = sbr.rel (%p2706) target = $region76
      $region75: #{decoder_block.1} parent=5 // pred_region
        %s2709 = ssub.s32 %s21, 2
        // Predicated region
        $region77: #{decoder_block.1} parent=75 // pred_check
          %p2710 = pneg %p291
        $region78: #{decoder_block.1} parent=75 // pred_check_branch
          %2712 = sbr.rel (%p2710) target = $region80
        $region79: #{decoder_block.1} parent=75 // pred_region
          %s2713 = sand.u32 %s276, 1
          %s2714 = scalar_lea.sflag [#allocation4], %s2713
          %s2715 = sand.u32 %s276, 1
          %s2716 = smul.addr %s2715, 8
          %s2717 = scalar_lea.vmem [#allocation6], %s2716
          %2718 = dma.done %s2714, 128
        $region80: #{decoder_block.1} parent=75 // pred_fallthru
          _
      $region76: #{decoder_block.1} parent=5 // pred_fallthru
        _
    $region6: #{decoder_block.1} parent=1 // loop_footer
      %s25 = sadd.s32 1, %s21
    $region7: #{decoder_block.1} parent=1 // loop_footer_branch
      %20 = sbr.rel target = $region3
    $region8: #{decoder_block.1} parent=1 // loop_exit
      _
    %2719 = vsyncpa [#allocation4], 1
    %s2720 = scalar_lea.sflag [#allocation4], 1
    %2721 = vsyncpa %s2720, 1
    %2722 = vsyncpa [#allocation5], 1
    %s2723 = scalar_lea.sflag [#allocation5], 1
    %2724 = vsyncpa %s2723, 1

</llo_original>
